<compile_context>
chip_gen: v7x
topology: tpu7x:2x2x1
jax: 0.10.0
libtpu: 0.0.40
codegen_flags: <defaults>
</compile_context>

<pallas_src>
import jax
import jax.numpy as jnp
from jax.experimental import pallas as pl
from jax.experimental.pallas import tpu as pltpu

EPS = 1e-5
F32 = jnp.float32
BF16 = jnp.bfloat16


def _bn_train(x, gamma, beta):
    """BatchNorm1d, training mode, single pass (sum + sum-of-squares)."""
    inv_n = 1.0 / x.shape[0]
    s1 = jnp.sum(x, axis=0, keepdims=True)
    s2 = jnp.sum(x * x, axis=0, keepdims=True)
    mean = s1 * inv_n
    var = jnp.maximum(s2 * inv_n - mean * mean, 0.0)
    return (x - mean) * jax.lax.rsqrt(var + EPS) * gamma + beta


# --------------------------- slab layouts ------------------------------------

def _vec_layout(num_conv):
    names = ['bn_feat_g', 'bn_feat_b']
    for l in range(num_conv):
        names += [f'conv{l}_g', f'conv{l}_b', f'conv{l}_bias']
    names += ['bn_fc_g', 'bn_fc_b', 'b_lin', 'bn_hid_g', 'bn_hid_b', 'b_cls',
              'w_u0', 'b_u0', 'b_s0', 'b_d0', 'b_u', 'b_s', 'b_d', 'b_x',
              'w_lu', 'w_ls', 'w_ld']
    return {n: i for i, n in enumerate(names)}, len(names)


def _mat_layout(num_conv):
    names = ['w_feat'] + [f'conv{l}_w' for l in range(num_conv)] + \
            ['w_u', 'w_s', 'w_d', 'w_x_u', 'w_x_s', 'w_x_d', 'w_lin', 'w_cls']
    return {n: i for i, n in enumerate(names)}, len(names)


# --------------------------- fused Pallas kernel -----------------------------

def make_resgcn_kernel(num_conv, max_hop, n_classes, hp, vidx, midx):

    def kernel(x_ref, a_ref, pool_ref, bvec_ref, vec_ref, mats_ref, scal_ref,
               out_ref):
        vec = vec_ref[...]                               # (P, hp) f32 - one load

        def row(name):                                   # static slab slicing
            i = vidx[name]
            return vec[i:i + 1, :]                       # (1, hp)

        bvec = bvec_ref[...]                             # (B, hp)
        B = bvec.shape[0]
        hopmask = bvec[:, :max_hop]                      # (B, max_hop) one-hot
        u0 = bvec[:, max_hop:max_hop + 1]                # (B, 1)

        alpha = scal_ref[0]                              # SMEM scalars
        beta = scal_ref[1]
        b_lu = scal_ref[2]
        b_ls = scal_ref[3]
        b_ld = scal_ref[4]

        # ---------------- EIN hop rollout (+ hop gather + heads) -------------
        w_u_bf = mats_ref[midx['w_u']]                   # (hp, hp) bf16, hoisted
        w_s_bf = mats_ref[midx['w_s']]
        w_d_bf = mats_ref[midx['w_d']]
        b_u_row, b_s_row, b_d_row = row('b_u'), row('b_s'), row('b_d')
        w_lu_row, w_ls_row, w_ld_row = row('w_lu'), row('w_ls'), row('w_ld')

        # Linear(1,H) on u_0 (s_0 = d_0 = 0 -> only their biases survive).
        U = u0 * row('w_u0') + row('b_u0')               # (B, hp)
        S = jnp.broadcast_to(row('b_s0'), (B, hp))
        D = jnp.broadcast_to(row('b_d0'), (B, hp))

        U_m = jnp.zeros((B, hp), F32)
        S_m = jnp.zeros((B, hp), F32)
        D_m = jnp.zeros((B, hp), F32)
        hu, hs, hd = [], [], []
        for i in range(max_hop):                         # static unroll
            U = U - alpha * U - beta * U
            U = jnp.dot(U.astype(BF16), w_u_bf, preferred_element_type=F32) + b_u_row
            S = S + alpha * U
            S = jnp.dot(S.astype(BF16), w_s_bf, preferred_element_type=F32) + b_s_row
            D = D + beta * U
            D = jnp.dot(D.astype(BF16), w_d_bf, preferred_element_type=F32) + b_d_row
            # Per-graph hop gather: one-hot mask multiply-add (n_hop == i+1).
            sel = hopmask[:, i:i + 1]                    # (B, 1)
            U_m = U_m + sel * U
            S_m = S_m + sel * S
            D_m = D_m + sel * D
            # Tiny l_u/l_s/l_d heads on VPU/XLU (lane reduce), not the MXU.
            hu.append(jnp.sum(U * w_lu_row, axis=-1, keepdims=True) + b_lu)
            hs.append(jnp.sum(S * w_ls_row, axis=-1, keepdims=True) + b_ls)
            hd.append(jnp.sum(D * w_ld_row, axis=-1, keepdims=True) + b_ld)

        xg = (jnp.dot(U_m.astype(BF16), mats_ref[midx['w_x_u']], preferred_element_type=F32)
              + jnp.dot(S_m.astype(BF16), mats_ref[midx['w_x_s']], preferred_element_type=F32)
              + jnp.dot(D_m.astype(BF16), mats_ref[midx['w_x_d']], preferred_element_type=F32)
              + row('b_x'))

        # ---------------- GCN trunk: h stays resident in VMEM ----------------
        a_bf = a_ref[...]                                # (N, N) bf16
        h = _bn_train(x_ref[...], row('bn_feat_g'), row('bn_feat_b'))
        h = jnp.maximum(
            jnp.dot(h.astype(BF16), mats_ref[midx['w_feat']],
                    preferred_element_type=F32), 0.0)

        for l in range(num_conv):                        # static unroll (L=3)
            hn = _bn_train(h, row(f'conv{l}_g'), row(f'conv{l}_b'))
            hw = jnp.dot(hn.astype(BF16), mats_ref[midx[f'conv{l}_w']],
                         preferred_element_type=F32)
            agg = jnp.dot(a_bf, hw.astype(BF16),
                          preferred_element_type=F32) + row(f'conv{l}_bias')
            h = jnp.maximum(agg, 0.0)                    # residual=False

        # ---------------- pooling + xg + FC head + classifier ----------------
        pooled = jnp.dot(pool_ref[...], h, preferred_element_type=F32)   # (B, hp)
        hg = pooled + xg
        hg = _bn_train(hg, row('bn_fc_g'), row('bn_fc_b'))
        hg = jnp.maximum(
            jnp.dot(hg.astype(BF16), mats_ref[midx['w_lin']],
                    preferred_element_type=F32) + row('b_lin'), 0.0)
        hg = _bn_train(hg, row('bn_hid_g'), row('bn_hid_b'))
        logits = jnp.dot(hg.astype(BF16), mats_ref[midx['w_cls']],
                         preferred_element_type=F32) + row('b_cls')

        # log_softmax over the first n_classes lanes only (rest is padding).
        col = jax.lax.broadcasted_iota(jnp.int32, (B, hp), 1)
        z = jnp.where(col < n_classes, logits, -1e30)
        m = jnp.max(z, axis=-1, keepdims=True)
        lse = m + jnp.log(jnp.sum(jnp.exp(z - m), axis=-1, keepdims=True))
        logp = logits - lse

        # Single lane-dense output slab: [logp(C) | u(mh) | s(mh) | d(mh) | 0].
        used = n_classes + 3 * max_hop
        out_ref[...] = jnp.concatenate(
            [logp[:, :n_classes],
             jnp.concatenate(hu, axis=1),
             jnp.concatenate(hs, axis=1),
             jnp.concatenate(hd, axis=1),
             jnp.zeros((B, hp - used), F32)], axis=1)

    return kernel


# --------------------------- JAX glue ----------------------------------------

def dense_gcn_norm(edge_index, num_nodes):
    """Dense D^-1/2 (A+I) D^-1/2, transposed for source->target aggregation."""
    # TODO(synk): for realistic graph sizes, replace with a padded-neighbor
    # (CSR-style) gather aggregation instead of a dense N x N matrix.
    row, col = edge_index[0], edge_index[1]
    w = jnp.ones(row.shape[0], F32)
    w = jnp.where(row != col, w, 0.0)                     # remove_self_loops
    adj = jnp.zeros((num_nodes, num_nodes), F32).at[row, col].add(w)
    adj = adj + jnp.eye(num_nodes, dtype=F32)             # add_self_loops (w=1)
    deg = jnp.sum(adj, axis=1)
    dinv = jnp.where(deg > 0, jax.lax.rsqrt(deg), 0.0)
    a_norm = dinv[:, None] * adj * dinv[None, :]
    return a_norm.T                                       # out[col] += norm*x[row]


def pack_params(params, num_conv, hidden, hp):
    """Pack the many tiny params into one f32 vector slab + one bf16 mat slab
    + one SMEM scalar slab."""
    vidx, nrows = _vec_layout(num_conv)
    midx, nmats = _mat_layout(num_conv)

    def padrow(a):
        a = jnp.asarray(a, F32).reshape(1, -1)
        return jnp.pad(a, ((0, 0), (0, hp - a.shape[1])))

    def padmat(a):
        a = jnp.asarray(a, F32)
        return jnp.pad(a, ((0, hp - a.shape[0]), (0, hp - a.shape[1])))

    rows = [None] * nrows
    rows[vidx['bn_feat_g']] = padrow(params['bn_feat_g'])
    rows[vidx['bn_feat_b']] = padrow(params['bn_feat_b'])
    for l in range(num_conv):
        cp = params['convs'][l]
        rows[vidx[f'conv{l}_g']] = padrow(cp['g'])
        rows[vidx[f'conv{l}_b']] = padrow(cp['b'])
        rows[vidx[f'conv{l}_bias']] = padrow(cp['bias'])
    for n in ['bn_fc_g', 'bn_fc_b', 'b_lin', 'bn_hid_g', 'bn_hid_b', 'b_cls',
              'w_u0', 'b_u0', 'b_s0', 'b_d0', 'b_u', 'b_s', 'b_d', 'b_x']:
        rows[vidx[n]] = padrow(params[n])
    rows[vidx['w_lu']] = padrow(params['w_lu'].T)          # (H,1) -> (1,H) rows
    rows[vidx['w_ls']] = padrow(params['w_ls'].T)
    rows[vidx['w_ld']] = padrow(params['w_ld'].T)
    vec = jnp.concatenate(rows, axis=0)                    # (P, hp) f32

    mats = [None] * nmats
    mats[midx['w_feat']] = padmat(params['w_feat'])
    for l in range(num_conv):
        mats[midx[f'conv{l}_w']] = padmat(params['convs'][l]['w'])
    mats[midx['w_u']] = padmat(params['w_u'])
    mats[midx['w_s']] = padmat(params['w_s'])
    mats[midx['w_d']] = padmat(params['w_d'])
    H = hidden
    mats[midx['w_x_u']] = padmat(params['w_x'][:H])
    mats[midx['w_x_s']] = padmat(params['w_x'][H:2 * H])
    mats[midx['w_x_d']] = padmat(params['w_x'][2 * H:])
    mats[midx['w_lin']] = padmat(params['w_lin'])
    mats[midx['w_cls']] = padmat(params['w_cls'])
    mats = jnp.stack(mats).astype(BF16)                    # (M, hp, hp) bf16

    ab = params['ab']
    scal = jnp.array([ab[0, 0], ab[0, 1],
                      params['b_lu'][0, 0], params['b_ls'][0, 0],
                      params['b_ld'][0, 0], 0.0, 0.0, 0.0], F32)   # SMEM slab
    return vec, mats, scal, vidx, midx


def init_params(key, fin, hidden, num_classes, num_conv_layers):
    ks = list(jax.random.split(key, 24))

    def glorot(k, shape):
        lim = (6.0 / (shape[0] + shape[1])) ** 0.5
        return jax.random.uniform(k, shape, F32, -lim, lim)

    p = {
        'bn_feat_g': jnp.ones((1, fin)), 'bn_feat_b': jnp.full((1, fin), 1e-4),
        'w_feat': glorot(ks[0], (fin, hidden)),
        'bn_fc_g': jnp.ones((1, hidden)), 'bn_fc_b': jnp.full((1, hidden), 1e-4),
        'w_lin': glorot(ks[1], (hidden, hidden)), 'b_lin': jnp.zeros((1, hidden)),
        'bn_hid_g': jnp.ones((1, hidden)), 'bn_hid_b': jnp.full((1, hidden), 1e-4),
        'w_cls': glorot(ks[2], (hidden, num_classes)), 'b_cls': jnp.zeros((1, num_classes)),
        # EIN machinery (Linear weights stored pre-transposed as (in, out))
        'w_u0': glorot(ks[3], (1, hidden)),
        'b_u0': 0.01 * jax.random.normal(ks[4], (1, hidden)),
        'b_s0': 0.01 * jax.random.normal(ks[5], (1, hidden)),
        'b_d0': 0.01 * jax.random.normal(ks[6], (1, hidden)),
        'w_u': glorot(ks[7], (hidden, hidden)), 'b_u': jnp.zeros((1, hidden)),
        'w_s': glorot(ks[8], (hidden, hidden)), 'b_s': jnp.zeros((1, hidden)),
        'w_d': glorot(ks[9], (hidden, hidden)), 'b_d': jnp.zeros((1, hidden)),
        'w_x': glorot(ks[10], (3 * hidden, hidden)), 'b_x': jnp.zeros((1, hidden)),
        'w_lu': glorot(ks[11], (hidden, 1)), 'b_lu': jnp.zeros((1, 1)),
        'w_ls': glorot(ks[12], (hidden, 1)), 'b_ls': jnp.zeros((1, 1)),
        'w_ld': glorot(ks[13], (hidden, 1)), 'b_ld': jnp.zeros((1, 1)),
        # alpha, beta = sigmoid(raw_alpha), sigmoid(raw_beta)
        'ab': jax.nn.sigmoid(jnp.array([[0.3, 0.2]], F32)),
    }
    p['convs'] = [dict(g=jnp.ones((1, hidden)), b=jnp.full((1, hidden), 1e-4),
                       w=glorot(ks[14 + i], (hidden, hidden)),
                       bias=jnp.zeros((1, hidden)))
                  for i in range(num_conv_layers)]
    return p


def resgcn_forward(params, x, edge_index, batch, user_state, n_hop,
                   num_graphs, max_hop, hidden):
    n_nodes, fin = x.shape
    num_conv = len(params['convs'])
    n_classes = params['w_cls'].shape[1]
    hp = max(128, ((hidden + 127) // 128) * 128)          # lane-padded width
    assert fin <= hp and n_classes <= hp
    assert n_classes + 3 * max_hop <= hp and max_hop + 1 <= hp

    # ---- graph-structure glue (plain JAX; data-dependent scatter) ----
    a_norm = dense_gcn_norm(edge_index, n_nodes).astype(BF16)
    pool = (batch[None, :] == jnp.arange(num_graphs)[:, None]).astype(F32)
    u0 = jnp.sum(user_state, axis=(1, 2))                                  # (B,)
    # One-hot hop-selection mask (n_hop outside [1, max_hop] -> all-zero row).
    hopmask = (n_hop.astype(jnp.int32)[:, None]
               == jnp.arange(1, max_hop + 1, dtype=jnp.int32)[None, :]).astype(F32)
    bvec = jnp.zeros((num_graphs, hp), F32)
    bvec = bvec.at[:, :max_hop].set(hopmask).at[:, max_hop].set(u0)

    x_p = jnp.pad(x.astype(F32), ((0, 0), (0, hp - fin)))                  # (N, hp)

    vec, mats, scal, vidx, midx = pack_params(params, num_conv, hidden, hp)

    vmem = pl.BlockSpec(memory_space=pltpu.MemorySpace.VMEM)
    smem = pl.BlockSpec(memory_space=pltpu.MemorySpace.SMEM)
    slab = pl.pallas_call(
        make_resgcn_kernel(num_conv, max_hop, n_classes, hp, vidx, midx),
        out_shape=jax.ShapeDtypeStruct((num_graphs, hp), F32),
        in_specs=[vmem, vmem, vmem, vmem, vmem, vmem, smem],
        out_specs=vmem,
        compiler_params=pltpu.CompilerParams(vmem_limit_bytes=32 * 1024 * 1024),
    )(x_p, a_norm, pool, bvec, vec, mats, scal)

    C, mh = n_classes, max_hop
    logp = slab[:, :C]
    U = slab[:, C:C + mh][..., None]
    S = slab[:, C + mh:C + 2 * mh][..., None]
    D = slab[:, C + 2 * mh:C + 3 * mh][..., None]
    return logp, U, S, D


# --------------------------- main ---------------------------------------------

if __name__ == "__main__":
    key = jax.random.PRNGKey(0)
    B = 2                      # graphs in the batch
    NODES_PER_GRAPH = 8
    N = B * NODES_PER_GRAPH
    FIN = 8                    # dataset.num_features
    HIDDEN = 32
    NUM_CLASSES = 2
    NUM_CONV = 3
    MAX_HOP = 4

    kx, ku, kp = jax.random.split(key, 3)
    x = jax.random.normal(kx, (N, FIN), F32)
    user_state = jax.random.normal(ku, (B, 5, 3), F32)
    n_hop = jnp.array([2, 4], jnp.int32)            # in [1, MAX_HOP]
    batch = jnp.repeat(jnp.arange(B), NODES_PER_GRAPH)

    # undirected ring within each graph (both directions, no self loops)
    src, dst = [], []
    for g in range(B):
        off = g * NODES_PER_GRAPH
        for i in range(NODES_PER_GRAPH):
            j = (i + 1) % NODES_PER_GRAPH
            src += [off + i, off + j]
            dst += [off + j, off + i]
    edge_index = jnp.array([src, dst], jnp.int32)

    params = init_params(kp, FIN, HIDDEN, NUM_CLASSES, NUM_CONV)

    out, U, S, D = resgcn_forward(params, x, edge_index, batch, user_state,
                                  n_hop, B, MAX_HOP, HIDDEN)
    jax.block_until_ready((out, U, S, D))

    assert out.shape == (B, NUM_CLASSES)
    assert U.shape == (B, MAX_HOP, 1)
    assert S.shape == (B, MAX_HOP, 1)
    assert D.shape == (B, MAX_HOP, 1)
    assert bool(jnp.all(jnp.isfinite(out)))
    assert bool(jnp.all(jnp.isfinite(U))) and bool(jnp.all(jnp.isfinite(S)))
    assert bool(jnp.all(jnp.isfinite(D)))
    print("KERNEL_OK")
</pallas_src>

<mosaic_0001>
module attributes {stable_mosaic.version = 11 : i64} {
  func.func @kernel(%arg0: memref<16x128xf32, #tpu.memory_space<vmem>>, %arg1: memref<16x16xbf16, #tpu.memory_space<vmem>>, %arg2: memref<2x16xf32, #tpu.memory_space<vmem>>, %arg3: memref<2x128xf32, #tpu.memory_space<vmem>>, %arg4: memref<28x128xf32, #tpu.memory_space<vmem>>, %arg5: memref<12x128x128xbf16, #tpu.memory_space<vmem>>, %arg6: memref<8xf32, #tpu.memory_space<smem>>, %arg7: memref<2x128xf32, #tpu.memory_space<vmem>>) attributes {dimension_semantics = [], scalar_prefetch = 0 : i64, scratch_operands = 0 : i64, tpu.core_type = #tpu.core_type<tc>} {
    %c0 = arith.constant 0 : index
    %c0_0 = arith.constant 0 : index
    %0 = vector.load %arg4[%c0, %c0_0] : memref<28x128xf32, #tpu.memory_space<vmem>>, vector<28x128xf32>
    %c0_1 = arith.constant 0 : index
    %c0_2 = arith.constant 0 : index
    %1 = vector.load %arg3[%c0_1, %c0_2] : memref<2x128xf32, #tpu.memory_space<vmem>>, vector<2x128xf32>
    %2 = vector.extract_strided_slice %1 {offsets = [0, 0], sizes = [2, 4], strides = [1, 1]} : vector<2x128xf32> to vector<2x4xf32>
    %3 = vector.extract_strided_slice %1 {offsets = [0, 4], sizes = [2, 1], strides = [1, 1]} : vector<2x128xf32> to vector<2x1xf32>
    %c0_3 = arith.constant 0 : index
    %4 = memref.load %arg6[%c0_3] : memref<8xf32, #tpu.memory_space<smem>>
    %c1 = arith.constant 1 : index
    %5 = memref.load %arg6[%c1] : memref<8xf32, #tpu.memory_space<smem>>
    %c2 = arith.constant 2 : index
    %6 = memref.load %arg6[%c2] : memref<8xf32, #tpu.memory_space<smem>>
    %c3 = arith.constant 3 : index
    %7 = memref.load %arg6[%c3] : memref<8xf32, #tpu.memory_space<smem>>
    %c4 = arith.constant 4 : index
    %8 = memref.load %arg6[%c4] : memref<8xf32, #tpu.memory_space<smem>>
    %c4_4 = arith.constant 4 : index
    %c0_5 = arith.constant 0 : index
    %c0_6 = arith.constant 0 : index
    %9 = vector.load %arg5[%c4_4, %c0_5, %c0_6] : memref<12x128x128xbf16, #tpu.memory_space<vmem>>, vector<1x128x128xbf16>
    %10 = vector.shape_cast %9 : vector<1x128x128xbf16> to vector<128x128xbf16>
    %c5 = arith.constant 5 : index
    %c0_7 = arith.constant 0 : index
    %c0_8 = arith.constant 0 : index
    %11 = vector.load %arg5[%c5, %c0_7, %c0_8] : memref<12x128x128xbf16, #tpu.memory_space<vmem>>, vector<1x128x128xbf16>
    %12 = vector.shape_cast %11 : vector<1x128x128xbf16> to vector<128x128xbf16>
    %c6 = arith.constant 6 : index
    %c0_9 = arith.constant 0 : index
    %c0_10 = arith.constant 0 : index
    %13 = vector.load %arg5[%c6, %c0_9, %c0_10] : memref<12x128x128xbf16, #tpu.memory_space<vmem>>, vector<1x128x128xbf16>
    %14 = vector.shape_cast %13 : vector<1x128x128xbf16> to vector<128x128xbf16>
    %15 = vector.extract_strided_slice %0 {offsets = [21, 0], sizes = [1, 128], strides = [1, 1]} : vector<28x128xf32> to vector<1x128xf32>
    %16 = vector.extract_strided_slice %0 {offsets = [22, 0], sizes = [1, 128], strides = [1, 1]} : vector<28x128xf32> to vector<1x128xf32>
    %17 = vector.extract_strided_slice %0 {offsets = [23, 0], sizes = [1, 128], strides = [1, 1]} : vector<28x128xf32> to vector<1x128xf32>
    %18 = vector.extract_strided_slice %0 {offsets = [25, 0], sizes = [1, 128], strides = [1, 1]} : vector<28x128xf32> to vector<1x128xf32>
    %19 = vector.extract_strided_slice %0 {offsets = [26, 0], sizes = [1, 128], strides = [1, 1]} : vector<28x128xf32> to vector<1x128xf32>
    %20 = vector.extract_strided_slice %0 {offsets = [27, 0], sizes = [1, 128], strides = [1, 1]} : vector<28x128xf32> to vector<1x128xf32>
    %21 = vector.extract_strided_slice %0 {offsets = [17, 0], sizes = [1, 128], strides = [1, 1]} : vector<28x128xf32> to vector<1x128xf32>
    %22 = vector.broadcast %3 : vector<2x1xf32> to vector<2x128xf32>
    %23 = vector.broadcast %21 : vector<1x128xf32> to vector<2x128xf32>
    %24 = arith.mulf %22, %23 : vector<2x128xf32>
    %25 = vector.extract_strided_slice %0 {offsets = [18, 0], sizes = [1, 128], strides = [1, 1]} : vector<28x128xf32> to vector<1x128xf32>
    %26 = vector.broadcast %25 : vector<1x128xf32> to vector<2x128xf32>
    %27 = arith.addf %24, %26 : vector<2x128xf32>
    %28 = vector.extract_strided_slice %0 {offsets = [19, 0], sizes = [1, 128], strides = [1, 1]} : vector<28x128xf32> to vector<1x128xf32>
    %29 = vector.shape_cast %28 : vector<1x128xf32> to vector<1x128xf32>
    %30 = vector.broadcast %29 : vector<1x128xf32> to vector<2x128xf32>
    %31 = vector.extract_strided_slice %0 {offsets = [20, 0], sizes = [1, 128], strides = [1, 1]} : vector<28x128xf32> to vector<1x128xf32>
    %32 = vector.shape_cast %31 : vector<1x128xf32> to vector<1x128xf32>
    %33 = vector.broadcast %32 : vector<1x128xf32> to vector<2x128xf32>
    %cst = arith.constant 0.000000e+00 : f32
    %34 = vector.broadcast %cst : f32 to vector<2x128xf32>
    %cst_11 = arith.constant 0.000000e+00 : f32
    %35 = vector.broadcast %cst_11 : f32 to vector<2x128xf32>
    %cst_12 = arith.constant 0.000000e+00 : f32
    %36 = vector.broadcast %cst_12 : f32 to vector<2x128xf32>
    %37 = vector.broadcast %4 : f32 to vector<2x128xf32>
    %38 = arith.mulf %37, %27 : vector<2x128xf32>
    %39 = arith.subf %27, %38 : vector<2x128xf32>
    %40 = vector.broadcast %5 : f32 to vector<2x128xf32>
    %41 = arith.mulf %40, %27 : vector<2x128xf32>
    %42 = arith.subf %39, %41 : vector<2x128xf32>
    %43 = arith.truncf %42 : vector<2x128xf32> to vector<2x128xbf16>
    %cst_13 = arith.constant dense<0.000000e+00> : vector<2x128xf32>
    %44 = tpu.matmul %43, %10, %cst_13 {dimension_numbers = #tpu.dot_dimension_numbers<[1], [0], [0], [1], [0, 0, 1, 1], [], []>} : vector<2x128xbf16>, vector<128x128xbf16>, vector<2x128xf32> -> vector<2x128xf32>
    %45 = vector.broadcast %15 : vector<1x128xf32> to vector<2x128xf32>
    %46 = arith.addf %44, %45 : vector<2x128xf32>
    %47 = vector.broadcast %4 : f32 to vector<2x128xf32>
    %48 = arith.mulf %47, %46 : vector<2x128xf32>
    %49 = arith.addf %30, %48 : vector<2x128xf32>
    %50 = arith.truncf %49 : vector<2x128xf32> to vector<2x128xbf16>
    %cst_14 = arith.constant dense<0.000000e+00> : vector<2x128xf32>
    %51 = tpu.matmul %50, %12, %cst_14 {dimension_numbers = #tpu.dot_dimension_numbers<[1], [0], [0], [1], [0, 0, 1, 1], [], []>} : vector<2x128xbf16>, vector<128x128xbf16>, vector<2x128xf32> -> vector<2x128xf32>
    %52 = vector.broadcast %16 : vector<1x128xf32> to vector<2x128xf32>
    %53 = arith.addf %51, %52 : vector<2x128xf32>
    %54 = vector.broadcast %5 : f32 to vector<2x128xf32>
    %55 = arith.mulf %54, %46 : vector<2x128xf32>
    %56 = arith.addf %33, %55 : vector<2x128xf32>
    %57 = arith.truncf %56 : vector<2x128xf32> to vector<2x128xbf16>
    %cst_15 = arith.constant dense<0.000000e+00> : vector<2x128xf32>
    %58 = tpu.matmul %57, %14, %cst_15 {dimension_numbers = #tpu.dot_dimension_numbers<[1], [0], [0], [1], [0, 0, 1, 1], [], []>} : vector<2x128xbf16>, vector<128x128xbf16>, vector<2x128xf32> -> vector<2x128xf32>
    %59 = vector.broadcast %17 : vector<1x128xf32> to vector<2x128xf32>
    %60 = arith.addf %58, %59 : vector<2x128xf32>
    %61 = vector.extract_strided_slice %2 {offsets = [0, 0], sizes = [2, 1], strides = [1, 1]} : vector<2x4xf32> to vector<2x1xf32>
    %62 = vector.broadcast %61 : vector<2x1xf32> to vector<2x128xf32>
    %63 = arith.mulf %62, %46 : vector<2x128xf32>
    %64 = arith.addf %34, %63 : vector<2x128xf32>
    %65 = vector.broadcast %61 : vector<2x1xf32> to vector<2x128xf32>
    %66 = arith.mulf %65, %53 : vector<2x128xf32>
    %67 = arith.addf %35, %66 : vector<2x128xf32>
    %68 = vector.broadcast %61 : vector<2x1xf32> to vector<2x128xf32>
    %69 = arith.mulf %68, %60 : vector<2x128xf32>
    %70 = arith.addf %36, %69 : vector<2x128xf32>
    %71 = vector.broadcast %18 : vector<1x128xf32> to vector<2x128xf32>
    %72 = arith.mulf %46, %71 : vector<2x128xf32>
    %cst_16 = arith.constant dense<0.000000e+00> : vector<2xf32>
    %73 = vector.multi_reduction <add>, %72, %cst_16 [1] : vector<2x128xf32> to vector<2xf32>
    %74 = vector.shape_cast %73 : vector<2xf32> to vector<2x1xf32>
    %75 = vector.broadcast %6 : f32 to vector<2x1xf32>
    %76 = arith.addf %74, %75 : vector<2x1xf32>
    %77 = vector.broadcast %19 : vector<1x128xf32> to vector<2x128xf32>
    %78 = arith.mulf %53, %77 : vector<2x128xf32>
    %cst_17 = arith.constant dense<0.000000e+00> : vector<2xf32>
    %79 = vector.multi_reduction <add>, %78, %cst_17 [1] : vector<2x128xf32> to vector<2xf32>
    %80 = vector.shape_cast %79 : vector<2xf32> to vector<2x1xf32>
    %81 = vector.broadcast %7 : f32 to vector<2x1xf32>
    %82 = arith.addf %80, %81 : vector<2x1xf32>
    %83 = vector.broadcast %20 : vector<1x128xf32> to vector<2x128xf32>
    %84 = arith.mulf %60, %83 : vector<2x128xf32>
    %cst_18 = arith.constant dense<0.000000e+00> : vector<2xf32>
    %85 = vector.multi_reduction <add>, %84, %cst_18 [1] : vector<2x128xf32> to vector<2xf32>
    %86 = vector.shape_cast %85 : vector<2xf32> to vector<2x1xf32>
    %87 = vector.broadcast %8 : f32 to vector<2x1xf32>
    %88 = arith.addf %86, %87 : vector<2x1xf32>
    %89 = vector.broadcast %4 : f32 to vector<2x128xf32>
    %90 = arith.mulf %89, %46 : vector<2x128xf32>
    %91 = arith.subf %46, %90 : vector<2x128xf32>
    %92 = vector.broadcast %5 : f32 to vector<2x128xf32>
    %93 = arith.mulf %92, %46 : vector<2x128xf32>
    %94 = arith.subf %91, %93 : vector<2x128xf32>
    %95 = arith.truncf %94 : vector<2x128xf32> to vector<2x128xbf16>
    %cst_19 = arith.constant dense<0.000000e+00> : vector<2x128xf32>
    %96 = tpu.matmul %95, %10, %cst_19 {dimension_numbers = #tpu.dot_dimension_numbers<[1], [0], [0], [1], [0, 0, 1, 1], [], []>} : vector<2x128xbf16>, vector<128x128xbf16>, vector<2x128xf32> -> vector<2x128xf32>
    %97 = vector.broadcast %15 : vector<1x128xf32> to vector<2x128xf32>
    %98 = arith.addf %96, %97 : vector<2x128xf32>
    %99 = vector.broadcast %4 : f32 to vector<2x128xf32>
    %100 = arith.mulf %99, %98 : vector<2x128xf32>
    %101 = arith.addf %53, %100 : vector<2x128xf32>
    %102 = arith.truncf %101 : vector<2x128xf32> to vector<2x128xbf16>
    %cst_20 = arith.constant dense<0.000000e+00> : vector<2x128xf32>
    %103 = tpu.matmul %102, %12, %cst_20 {dimension_numbers = #tpu.dot_dimension_numbers<[1], [0], [0], [1], [0, 0, 1, 1], [], []>} : vector<2x128xbf16>, vector<128x128xbf16>, vector<2x128xf32> -> vector<2x128xf32>
    %104 = vector.broadcast %16 : vector<1x128xf32> to vector<2x128xf32>
    %105 = arith.addf %103, %104 : vector<2x128xf32>
    %106 = vector.broadcast %5 : f32 to vector<2x128xf32>
    %107 = arith.mulf %106, %98 : vector<2x128xf32>
    %108 = arith.addf %60, %107 : vector<2x128xf32>
    %109 = arith.truncf %108 : vector<2x128xf32> to vector<2x128xbf16>
    %cst_21 = arith.constant dense<0.000000e+00> : vector<2x128xf32>
    %110 = tpu.matmul %109, %14, %cst_21 {dimension_numbers = #tpu.dot_dimension_numbers<[1], [0], [0], [1], [0, 0, 1, 1], [], []>} : vector<2x128xbf16>, vector<128x128xbf16>, vector<2x128xf32> -> vector<2x128xf32>
    %111 = vector.broadcast %17 : vector<1x128xf32> to vector<2x128xf32>
    %112 = arith.addf %110, %111 : vector<2x128xf32>
    %113 = vector.extract_strided_slice %2 {offsets = [0, 1], sizes = [2, 1], strides = [1, 1]} : vector<2x4xf32> to vector<2x1xf32>
    %114 = vector.broadcast %113 : vector<2x1xf32> to vector<2x128xf32>
    %115 = arith.mulf %114, %98 : vector<2x128xf32>
    %116 = arith.addf %64, %115 : vector<2x128xf32>
    %117 = vector.broadcast %113 : vector<2x1xf32> to vector<2x128xf32>
    %118 = arith.mulf %117, %105 : vector<2x128xf32>
    %119 = arith.addf %67, %118 : vector<2x128xf32>
    %120 = vector.broadcast %113 : vector<2x1xf32> to vector<2x128xf32>
    %121 = arith.mulf %120, %112 : vector<2x128xf32>
    %122 = arith.addf %70, %121 : vector<2x128xf32>
    %123 = vector.broadcast %18 : vector<1x128xf32> to vector<2x128xf32>
    %124 = arith.mulf %98, %123 : vector<2x128xf32>
    %cst_22 = arith.constant dense<0.000000e+00> : vector<2xf32>
    %125 = vector.multi_reduction <add>, %124, %cst_22 [1] : vector<2x128xf32> to vector<2xf32>
    %126 = vector.shape_cast %125 : vector<2xf32> to vector<2x1xf32>
    %127 = vector.broadcast %6 : f32 to vector<2x1xf32>
    %128 = arith.addf %126, %127 : vector<2x1xf32>
    %129 = vector.broadcast %19 : vector<1x128xf32> to vector<2x128xf32>
    %130 = arith.mulf %105, %129 : vector<2x128xf32>
    %cst_23 = arith.constant dense<0.000000e+00> : vector<2xf32>
    %131 = vector.multi_reduction <add>, %130, %cst_23 [1] : vector<2x128xf32> to vector<2xf32>
    %132 = vector.shape_cast %131 : vector<2xf32> to vector<2x1xf32>
    %133 = vector.broadcast %7 : f32 to vector<2x1xf32>
    %134 = arith.addf %132, %133 : vector<2x1xf32>
    %135 = vector.broadcast %20 : vector<1x128xf32> to vector<2x128xf32>
    %136 = arith.mulf %112, %135 : vector<2x128xf32>
    %cst_24 = arith.constant dense<0.000000e+00> : vector<2xf32>
    %137 = vector.multi_reduction <add>, %136, %cst_24 [1] : vector<2x128xf32> to vector<2xf32>
    %138 = vector.shape_cast %137 : vector<2xf32> to vector<2x1xf32>
    %139 = vector.broadcast %8 : f32 to vector<2x1xf32>
    %140 = arith.addf %138, %139 : vector<2x1xf32>
    %141 = vector.broadcast %4 : f32 to vector<2x128xf32>
    %142 = arith.mulf %141, %98 : vector<2x128xf32>
    %143 = arith.subf %98, %142 : vector<2x128xf32>
    %144 = vector.broadcast %5 : f32 to vector<2x128xf32>
    %145 = arith.mulf %144, %98 : vector<2x128xf32>
    %146 = arith.subf %143, %145 : vector<2x128xf32>
    %147 = arith.truncf %146 : vector<2x128xf32> to vector<2x128xbf16>
    %cst_25 = arith.constant dense<0.000000e+00> : vector<2x128xf32>
    %148 = tpu.matmul %147, %10, %cst_25 {dimension_numbers = #tpu.dot_dimension_numbers<[1], [0], [0], [1], [0, 0, 1, 1], [], []>} : vector<2x128xbf16>, vector<128x128xbf16>, vector<2x128xf32> -> vector<2x128xf32>
    %149 = vector.broadcast %15 : vector<1x128xf32> to vector<2x128xf32>
    %150 = arith.addf %148, %149 : vector<2x128xf32>
    %151 = vector.broadcast %4 : f32 to vector<2x128xf32>
    %152 = arith.mulf %151, %150 : vector<2x128xf32>
    %153 = arith.addf %105, %152 : vector<2x128xf32>
    %154 = arith.truncf %153 : vector<2x128xf32> to vector<2x128xbf16>
    %cst_26 = arith.constant dense<0.000000e+00> : vector<2x128xf32>
    %155 = tpu.matmul %154, %12, %cst_26 {dimension_numbers = #tpu.dot_dimension_numbers<[1], [0], [0], [1], [0, 0, 1, 1], [], []>} : vector<2x128xbf16>, vector<128x128xbf16>, vector<2x128xf32> -> vector<2x128xf32>
    %156 = vector.broadcast %16 : vector<1x128xf32> to vector<2x128xf32>
    %157 = arith.addf %155, %156 : vector<2x128xf32>
    %158 = vector.broadcast %5 : f32 to vector<2x128xf32>
    %159 = arith.mulf %158, %150 : vector<2x128xf32>
    %160 = arith.addf %112, %159 : vector<2x128xf32>
    %161 = arith.truncf %160 : vector<2x128xf32> to vector<2x128xbf16>
    %cst_27 = arith.constant dense<0.000000e+00> : vector<2x128xf32>
    %162 = tpu.matmul %161, %14, %cst_27 {dimension_numbers = #tpu.dot_dimension_numbers<[1], [0], [0], [1], [0, 0, 1, 1], [], []>} : vector<2x128xbf16>, vector<128x128xbf16>, vector<2x128xf32> -> vector<2x128xf32>
    %163 = vector.broadcast %17 : vector<1x128xf32> to vector<2x128xf32>
    %164 = arith.addf %162, %163 : vector<2x128xf32>
    %165 = vector.extract_strided_slice %2 {offsets = [0, 2], sizes = [2, 1], strides = [1, 1]} : vector<2x4xf32> to vector<2x1xf32>
    %166 = vector.broadcast %165 : vector<2x1xf32> to vector<2x128xf32>
    %167 = arith.mulf %166, %150 : vector<2x128xf32>
    %168 = arith.addf %116, %167 : vector<2x128xf32>
    %169 = vector.broadcast %165 : vector<2x1xf32> to vector<2x128xf32>
    %170 = arith.mulf %169, %157 : vector<2x128xf32>
    %171 = arith.addf %119, %170 : vector<2x128xf32>
    %172 = vector.broadcast %165 : vector<2x1xf32> to vector<2x128xf32>
    %173 = arith.mulf %172, %164 : vector<2x128xf32>
    %174 = arith.addf %122, %173 : vector<2x128xf32>
    %175 = vector.broadcast %18 : vector<1x128xf32> to vector<2x128xf32>
    %176 = arith.mulf %150, %175 : vector<2x128xf32>
    %cst_28 = arith.constant dense<0.000000e+00> : vector<2xf32>
    %177 = vector.multi_reduction <add>, %176, %cst_28 [1] : vector<2x128xf32> to vector<2xf32>
    %178 = vector.shape_cast %177 : vector<2xf32> to vector<2x1xf32>
    %179 = vector.broadcast %6 : f32 to vector<2x1xf32>
    %180 = arith.addf %178, %179 : vector<2x1xf32>
    %181 = vector.broadcast %19 : vector<1x128xf32> to vector<2x128xf32>
    %182 = arith.mulf %157, %181 : vector<2x128xf32>
    %cst_29 = arith.constant dense<0.000000e+00> : vector<2xf32>
    %183 = vector.multi_reduction <add>, %182, %cst_29 [1] : vector<2x128xf32> to vector<2xf32>
    %184 = vector.shape_cast %183 : vector<2xf32> to vector<2x1xf32>
    %185 = vector.broadcast %7 : f32 to vector<2x1xf32>
    %186 = arith.addf %184, %185 : vector<2x1xf32>
    %187 = vector.broadcast %20 : vector<1x128xf32> to vector<2x128xf32>
    %188 = arith.mulf %164, %187 : vector<2x128xf32>
    %cst_30 = arith.constant dense<0.000000e+00> : vector<2xf32>
    %189 = vector.multi_reduction <add>, %188, %cst_30 [1] : vector<2x128xf32> to vector<2xf32>
    %190 = vector.shape_cast %189 : vector<2xf32> to vector<2x1xf32>
    %191 = vector.broadcast %8 : f32 to vector<2x1xf32>
    %192 = arith.addf %190, %191 : vector<2x1xf32>
    %193 = vector.broadcast %4 : f32 to vector<2x128xf32>
    %194 = arith.mulf %193, %150 : vector<2x128xf32>
    %195 = arith.subf %150, %194 : vector<2x128xf32>
    %196 = vector.broadcast %5 : f32 to vector<2x128xf32>
    %197 = arith.mulf %196, %150 : vector<2x128xf32>
    %198 = arith.subf %195, %197 : vector<2x128xf32>
    %199 = arith.truncf %198 : vector<2x128xf32> to vector<2x128xbf16>
    %cst_31 = arith.constant dense<0.000000e+00> : vector<2x128xf32>
    %200 = tpu.matmul %199, %10, %cst_31 {dimension_numbers = #tpu.dot_dimension_numbers<[1], [0], [0], [1], [0, 0, 1, 1], [], []>} : vector<2x128xbf16>, vector<128x128xbf16>, vector<2x128xf32> -> vector<2x128xf32>
    %201 = vector.broadcast %15 : vector<1x128xf32> to vector<2x128xf32>
    %202 = arith.addf %200, %201 : vector<2x128xf32>
    %203 = vector.broadcast %4 : f32 to vector<2x128xf32>
    %204 = arith.mulf %203, %202 : vector<2x128xf32>
    %205 = arith.addf %157, %204 : vector<2x128xf32>
    %206 = arith.truncf %205 : vector<2x128xf32> to vector<2x128xbf16>
    %cst_32 = arith.constant dense<0.000000e+00> : vector<2x128xf32>
    %207 = tpu.matmul %206, %12, %cst_32 {dimension_numbers = #tpu.dot_dimension_numbers<[1], [0], [0], [1], [0, 0, 1, 1], [], []>} : vector<2x128xbf16>, vector<128x128xbf16>, vector<2x128xf32> -> vector<2x128xf32>
    %208 = vector.broadcast %16 : vector<1x128xf32> to vector<2x128xf32>
    %209 = arith.addf %207, %208 : vector<2x128xf32>
    %210 = vector.broadcast %5 : f32 to vector<2x128xf32>
    %211 = arith.mulf %210, %202 : vector<2x128xf32>
    %212 = arith.addf %164, %211 : vector<2x128xf32>
    %213 = arith.truncf %212 : vector<2x128xf32> to vector<2x128xbf16>
    %cst_33 = arith.constant dense<0.000000e+00> : vector<2x128xf32>
    %214 = tpu.matmul %213, %14, %cst_33 {dimension_numbers = #tpu.dot_dimension_numbers<[1], [0], [0], [1], [0, 0, 1, 1], [], []>} : vector<2x128xbf16>, vector<128x128xbf16>, vector<2x128xf32> -> vector<2x128xf32>
    %215 = vector.broadcast %17 : vector<1x128xf32> to vector<2x128xf32>
    %216 = arith.addf %214, %215 : vector<2x128xf32>
    %217 = vector.extract_strided_slice %2 {offsets = [0, 3], sizes = [2, 1], strides = [1, 1]} : vector<2x4xf32> to vector<2x1xf32>
    %218 = vector.broadcast %217 : vector<2x1xf32> to vector<2x128xf32>
    %219 = arith.mulf %218, %202 : vector<2x128xf32>
    %220 = arith.addf %168, %219 : vector<2x128xf32>
    %221 = vector.broadcast %217 : vector<2x1xf32> to vector<2x128xf32>
    %222 = arith.mulf %221, %209 : vector<2x128xf32>
    %223 = arith.addf %171, %222 : vector<2x128xf32>
    %224 = vector.broadcast %217 : vector<2x1xf32> to vector<2x128xf32>
    %225 = arith.mulf %224, %216 : vector<2x128xf32>
    %226 = arith.addf %174, %225 : vector<2x128xf32>
    %227 = vector.broadcast %18 : vector<1x128xf32> to vector<2x128xf32>
    %228 = arith.mulf %202, %227 : vector<2x128xf32>
    %cst_34 = arith.constant dense<0.000000e+00> : vector<2xf32>
    %229 = vector.multi_reduction <add>, %228, %cst_34 [1] : vector<2x128xf32> to vector<2xf32>
    %230 = vector.shape_cast %229 : vector<2xf32> to vector<2x1xf32>
    %231 = vector.broadcast %6 : f32 to vector<2x1xf32>
    %232 = arith.addf %230, %231 : vector<2x1xf32>
    %233 = vector.broadcast %19 : vector<1x128xf32> to vector<2x128xf32>
    %234 = arith.mulf %209, %233 : vector<2x128xf32>
    %cst_35 = arith.constant dense<0.000000e+00> : vector<2xf32>
    %235 = vector.multi_reduction <add>, %234, %cst_35 [1] : vector<2x128xf32> to vector<2xf32>
    %236 = vector.shape_cast %235 : vector<2xf32> to vector<2x1xf32>
    %237 = vector.broadcast %7 : f32 to vector<2x1xf32>
    %238 = arith.addf %236, %237 : vector<2x1xf32>
    %239 = vector.broadcast %20 : vector<1x128xf32> to vector<2x128xf32>
    %240 = arith.mulf %216, %239 : vector<2x128xf32>
    %cst_36 = arith.constant dense<0.000000e+00> : vector<2xf32>
    %241 = vector.multi_reduction <add>, %240, %cst_36 [1] : vector<2x128xf32> to vector<2xf32>
    %242 = vector.shape_cast %241 : vector<2xf32> to vector<2x1xf32>
    %243 = vector.broadcast %8 : f32 to vector<2x1xf32>
    %244 = arith.addf %242, %243 : vector<2x1xf32>
    %245 = arith.truncf %220 : vector<2x128xf32> to vector<2x128xbf16>
    %c7 = arith.constant 7 : index
    %c0_37 = arith.constant 0 : index
    %c0_38 = arith.constant 0 : index
    %246 = vector.load %arg5[%c7, %c0_37, %c0_38] : memref<12x128x128xbf16, #tpu.memory_space<vmem>>, vector<1x128x128xbf16>
    %247 = vector.shape_cast %246 : vector<1x128x128xbf16> to vector<128x128xbf16>
    %cst_39 = arith.constant dense<0.000000e+00> : vector<2x128xf32>
    %248 = tpu.matmul %245, %247, %cst_39 {dimension_numbers = #tpu.dot_dimension_numbers<[1], [0], [0], [1], [0, 0, 1, 1], [], []>} : vector<2x128xbf16>, vector<128x128xbf16>, vector<2x128xf32> -> vector<2x128xf32>
    %249 = arith.truncf %223 : vector<2x128xf32> to vector<2x128xbf16>
    %c8 = arith.constant 8 : index
    %c0_40 = arith.constant 0 : index
    %c0_41 = arith.constant 0 : index
    %250 = vector.load %arg5[%c8, %c0_40, %c0_41] : memref<12x128x128xbf16, #tpu.memory_space<vmem>>, vector<1x128x128xbf16>
    %251 = vector.shape_cast %250 : vector<1x128x128xbf16> to vector<128x128xbf16>
    %cst_42 = arith.constant dense<0.000000e+00> : vector<2x128xf32>
    %252 = tpu.matmul %249, %251, %cst_42 {dimension_numbers = #tpu.dot_dimension_numbers<[1], [0], [0], [1], [0, 0, 1, 1], [], []>} : vector<2x128xbf16>, vector<128x128xbf16>, vector<2x128xf32> -> vector<2x128xf32>
    %253 = arith.addf %248, %252 : vector<2x128xf32>
    %254 = arith.truncf %226 : vector<2x128xf32> to vector<2x128xbf16>
    %c9 = arith.constant 9 : index
    %c0_43 = arith.constant 0 : index
    %c0_44 = arith.constant 0 : index
    %255 = vector.load %arg5[%c9, %c0_43, %c0_44] : memref<12x128x128xbf16, #tpu.memory_space<vmem>>, vector<1x128x128xbf16>
    %256 = vector.shape_cast %255 : vector<1x128x128xbf16> to vector<128x128xbf16>
    %cst_45 = arith.constant dense<0.000000e+00> : vector<2x128xf32>
    %257 = tpu.matmul %254, %256, %cst_45 {dimension_numbers = #tpu.dot_dimension_numbers<[1], [0], [0], [1], [0, 0, 1, 1], [], []>} : vector<2x128xbf16>, vector<128x128xbf16>, vector<2x128xf32> -> vector<2x128xf32>
    %258 = arith.addf %253, %257 : vector<2x128xf32>
    %259 = vector.extract_strided_slice %0 {offsets = [24, 0], sizes = [1, 128], strides = [1, 1]} : vector<28x128xf32> to vector<1x128xf32>
    %260 = vector.broadcast %259 : vector<1x128xf32> to vector<2x128xf32>
    %261 = arith.addf %258, %260 : vector<2x128xf32>
    %c0_46 = arith.constant 0 : index
    %c0_47 = arith.constant 0 : index
    %262 = vector.load %arg1[%c0_46, %c0_47] : memref<16x16xbf16, #tpu.memory_space<vmem>>, vector<16x16xbf16>
    %c0_48 = arith.constant 0 : index
    %c0_49 = arith.constant 0 : index
    %263 = vector.load %arg0[%c0_48, %c0_49] : memref<16x128xf32, #tpu.memory_space<vmem>>, vector<16x128xf32>
    %264 = vector.extract_strided_slice %0 {offsets = [0, 0], sizes = [1, 128], strides = [1, 1]} : vector<28x128xf32> to vector<1x128xf32>
    %265 = vector.extract_strided_slice %0 {offsets = [1, 0], sizes = [1, 128], strides = [1, 1]} : vector<28x128xf32> to vector<1x128xf32>
    %cst_50 = arith.constant dense<0.000000e+00> : vector<128xf32>
    %266 = vector.multi_reduction <add>, %263, %cst_50 [0] : vector<16x128xf32> to vector<128xf32>
    %267 = vector.shape_cast %266 : vector<128xf32> to vector<1x128xf32>
    %268 = arith.mulf %263, %263 : vector<16x128xf32>
    %cst_51 = arith.constant dense<0.000000e+00> : vector<128xf32>
    %269 = vector.multi_reduction <add>, %268, %cst_51 [0] : vector<16x128xf32> to vector<128xf32>
    %270 = vector.shape_cast %269 : vector<128xf32> to vector<1x128xf32>
    %cst_52 = arith.constant 6.250000e-02 : f32
    %271 = vector.broadcast %cst_52 : f32 to vector<1x128xf32>
    %272 = arith.mulf %267, %271 : vector<1x128xf32>
    %cst_53 = arith.constant 6.250000e-02 : f32
    %273 = vector.broadcast %cst_53 : f32 to vector<1x128xf32>
    %274 = arith.mulf %270, %273 : vector<1x128xf32>
    %275 = arith.mulf %272, %272 : vector<1x128xf32>
    %276 = arith.subf %274, %275 : vector<1x128xf32>
    %cst_54 = arith.constant 0.000000e+00 : f32
    %277 = vector.broadcast %cst_54 : f32 to vector<1x128xf32>
    %278 = arith.maximumf %276, %277 : vector<1x128xf32>
    %279 = vector.broadcast %272 : vector<1x128xf32> to vector<16x128xf32>
    %280 = arith.subf %263, %279 : vector<16x128xf32>
    %cst_55 = arith.constant 9.99999974E-6 : f32
    %281 = vector.broadcast %cst_55 : f32 to vector<1x128xf32>
    %282 = arith.addf %278, %281 : vector<1x128xf32>
    %283 = math.rsqrt %282 : vector<1x128xf32>
    %284 = vector.broadcast %283 : vector<1x128xf32> to vector<16x128xf32>
    %285 = arith.mulf %280, %284 : vector<16x128xf32>
    %286 = vector.broadcast %264 : vector<1x128xf32> to vector<16x128xf32>
    %287 = arith.mulf %285, %286 : vector<16x128xf32>
    %288 = vector.broadcast %265 : vector<1x128xf32> to vector<16x128xf32>
    %289 = arith.addf %287, %288 : vector<16x128xf32>
    %290 = arith.truncf %289 : vector<16x128xf32> to vector<16x128xbf16>
    %c0_56 = arith.constant 0 : index
    %c0_57 = arith.constant 0 : index
    %c0_58 = arith.constant 0 : index
    %291 = vector.load %arg5[%c0_56, %c0_57, %c0_58] : memref<12x128x128xbf16, #tpu.memory_space<vmem>>, vector<1x128x128xbf16>
    %292 = vector.shape_cast %291 : vector<1x128x128xbf16> to vector<128x128xbf16>
    %cst_59 = arith.constant dense<0.000000e+00> : vector<16x128xf32>
    %293 = tpu.matmul %290, %292, %cst_59 {dimension_numbers = #tpu.dot_dimension_numbers<[1], [0], [0], [1], [0, 0, 1, 1], [], []>} : vector<16x128xbf16>, vector<128x128xbf16>, vector<16x128xf32> -> vector<16x128xf32>
    %cst_60 = arith.constant 0.000000e+00 : f32
    %294 = vector.broadcast %cst_60 : f32 to vector<16x128xf32>
    %295 = arith.maximumf %293, %294 : vector<16x128xf32>
    %296 = vector.extract_strided_slice %0 {offsets = [2, 0], sizes = [1, 128], strides = [1, 1]} : vector<28x128xf32> to vector<1x128xf32>
    %297 = vector.extract_strided_slice %0 {offsets = [3, 0], sizes = [1, 128], strides = [1, 1]} : vector<28x128xf32> to vector<1x128xf32>
    %cst_61 = arith.constant dense<0.000000e+00> : vector<128xf32>
    %298 = vector.multi_reduction <add>, %295, %cst_61 [0] : vector<16x128xf32> to vector<128xf32>
    %299 = vector.shape_cast %298 : vector<128xf32> to vector<1x128xf32>
    %300 = arith.mulf %295, %295 : vector<16x128xf32>
    %cst_62 = arith.constant dense<0.000000e+00> : vector<128xf32>
    %301 = vector.multi_reduction <add>, %300, %cst_62 [0] : vector<16x128xf32> to vector<128xf32>
    %302 = vector.shape_cast %301 : vector<128xf32> to vector<1x128xf32>
    %cst_63 = arith.constant 6.250000e-02 : f32
    %303 = vector.broadcast %cst_63 : f32 to vector<1x128xf32>
    %304 = arith.mulf %299, %303 : vector<1x128xf32>
    %cst_64 = arith.constant 6.250000e-02 : f32
    %305 = vector.broadcast %cst_64 : f32 to vector<1x128xf32>
    %306 = arith.mulf %302, %305 : vector<1x128xf32>
    %307 = arith.mulf %304, %304 : vector<1x128xf32>
    %308 = arith.subf %306, %307 : vector<1x128xf32>
    %cst_65 = arith.constant 0.000000e+00 : f32
    %309 = vector.broadcast %cst_65 : f32 to vector<1x128xf32>
    %310 = arith.maximumf %308, %309 : vector<1x128xf32>
    %311 = vector.broadcast %304 : vector<1x128xf32> to vector<16x128xf32>
    %312 = arith.subf %295, %311 : vector<16x128xf32>
    %cst_66 = arith.constant 9.99999974E-6 : f32
    %313 = vector.broadcast %cst_66 : f32 to vector<1x128xf32>
    %314 = arith.addf %310, %313 : vector<1x128xf32>
    %315 = math.rsqrt %314 : vector<1x128xf32>
    %316 = vector.broadcast %315 : vector<1x128xf32> to vector<16x128xf32>
    %317 = arith.mulf %312, %316 : vector<16x128xf32>
    %318 = vector.broadcast %296 : vector<1x128xf32> to vector<16x128xf32>
    %319 = arith.mulf %317, %318 : vector<16x128xf32>
    %320 = vector.broadcast %297 : vector<1x128xf32> to vector<16x128xf32>
    %321 = arith.addf %319, %320 : vector<16x128xf32>
    %322 = arith.truncf %321 : vector<16x128xf32> to vector<16x128xbf16>
    %c1_67 = arith.constant 1 : index
    %c0_68 = arith.constant 0 : index
    %c0_69 = arith.constant 0 : index
    %323 = vector.load %arg5[%c1_67, %c0_68, %c0_69] : memref<12x128x128xbf16, #tpu.memory_space<vmem>>, vector<1x128x128xbf16>
    %324 = vector.shape_cast %323 : vector<1x128x128xbf16> to vector<128x128xbf16>
    %cst_70 = arith.constant dense<0.000000e+00> : vector<16x128xf32>
    %325 = tpu.matmul %322, %324, %cst_70 {dimension_numbers = #tpu.dot_dimension_numbers<[1], [0], [0], [1], [0, 0, 1, 1], [], []>} : vector<16x128xbf16>, vector<128x128xbf16>, vector<16x128xf32> -> vector<16x128xf32>
    %326 = arith.truncf %325 : vector<16x128xf32> to vector<16x128xbf16>
    %cst_71 = arith.constant dense<0.000000e+00> : vector<16x128xf32>
    %327 = tpu.matmul %262, %326, %cst_71 {dimension_numbers = #tpu.dot_dimension_numbers<[1], [0], [0], [1], [0, 0, 1, 1], [], []>} : vector<16x16xbf16>, vector<16x128xbf16>, vector<16x128xf32> -> vector<16x128xf32>
    %328 = vector.extract_strided_slice %0 {offsets = [4, 0], sizes = [1, 128], strides = [1, 1]} : vector<28x128xf32> to vector<1x128xf32>
    %329 = vector.broadcast %328 : vector<1x128xf32> to vector<16x128xf32>
    %330 = arith.addf %327, %329 : vector<16x128xf32>
    %cst_72 = arith.constant 0.000000e+00 : f32
    %331 = vector.broadcast %cst_72 : f32 to vector<16x128xf32>
    %332 = arith.maximumf %330, %331 : vector<16x128xf32>
    %333 = vector.extract_strided_slice %0 {offsets = [5, 0], sizes = [1, 128], strides = [1, 1]} : vector<28x128xf32> to vector<1x128xf32>
    %334 = vector.extract_strided_slice %0 {offsets = [6, 0], sizes = [1, 128], strides = [1, 1]} : vector<28x128xf32> to vector<1x128xf32>
    %cst_73 = arith.constant dense<0.000000e+00> : vector<128xf32>
    %335 = vector.multi_reduction <add>, %332, %cst_73 [0] : vector<16x128xf32> to vector<128xf32>
    %336 = vector.shape_cast %335 : vector<128xf32> to vector<1x128xf32>
    %337 = arith.mulf %332, %332 : vector<16x128xf32>
    %cst_74 = arith.constant dense<0.000000e+00> : vector<128xf32>
    %338 = vector.multi_reduction <add>, %337, %cst_74 [0] : vector<16x128xf32> to vector<128xf32>
    %339 = vector.shape_cast %338 : vector<128xf32> to vector<1x128xf32>
    %cst_75 = arith.constant 6.250000e-02 : f32
    %340 = vector.broadcast %cst_75 : f32 to vector<1x128xf32>
    %341 = arith.mulf %336, %340 : vector<1x128xf32>
    %cst_76 = arith.constant 6.250000e-02 : f32
    %342 = vector.broadcast %cst_76 : f32 to vector<1x128xf32>
    %343 = arith.mulf %339, %342 : vector<1x128xf32>
    %344 = arith.mulf %341, %341 : vector<1x128xf32>
    %345 = arith.subf %343, %344 : vector<1x128xf32>
    %cst_77 = arith.constant 0.000000e+00 : f32
    %346 = vector.broadcast %cst_77 : f32 to vector<1x128xf32>
    %347 = arith.maximumf %345, %346 : vector<1x128xf32>
    %348 = vector.broadcast %341 : vector<1x128xf32> to vector<16x128xf32>
    %349 = arith.subf %332, %348 : vector<16x128xf32>
    %cst_78 = arith.constant 9.99999974E-6 : f32
    %350 = vector.broadcast %cst_78 : f32 to vector<1x128xf32>
    %351 = arith.addf %347, %350 : vector<1x128xf32>
    %352 = math.rsqrt %351 : vector<1x128xf32>
    %353 = vector.broadcast %352 : vector<1x128xf32> to vector<16x128xf32>
    %354 = arith.mulf %349, %353 : vector<16x128xf32>
    %355 = vector.broadcast %333 : vector<1x128xf32> to vector<16x128xf32>
    %356 = arith.mulf %354, %355 : vector<16x128xf32>
    %357 = vector.broadcast %334 : vector<1x128xf32> to vector<16x128xf32>
    %358 = arith.addf %356, %357 : vector<16x128xf32>
    %359 = arith.truncf %358 : vector<16x128xf32> to vector<16x128xbf16>
    %c2_79 = arith.constant 2 : index
    %c0_80 = arith.constant 0 : index
    %c0_81 = arith.constant 0 : index
    %360 = vector.load %arg5[%c2_79, %c0_80, %c0_81] : memref<12x128x128xbf16, #tpu.memory_space<vmem>>, vector<1x128x128xbf16>
    %361 = vector.shape_cast %360 : vector<1x128x128xbf16> to vector<128x128xbf16>
    %cst_82 = arith.constant dense<0.000000e+00> : vector<16x128xf32>
    %362 = tpu.matmul %359, %361, %cst_82 {dimension_numbers = #tpu.dot_dimension_numbers<[1], [0], [0], [1], [0, 0, 1, 1], [], []>} : vector<16x128xbf16>, vector<128x128xbf16>, vector<16x128xf32> -> vector<16x128xf32>
    %363 = arith.truncf %362 : vector<16x128xf32> to vector<16x128xbf16>
    %cst_83 = arith.constant dense<0.000000e+00> : vector<16x128xf32>
    %364 = tpu.matmul %262, %363, %cst_83 {dimension_numbers = #tpu.dot_dimension_numbers<[1], [0], [0], [1], [0, 0, 1, 1], [], []>} : vector<16x16xbf16>, vector<16x128xbf16>, vector<16x128xf32> -> vector<16x128xf32>
    %365 = vector.extract_strided_slice %0 {offsets = [7, 0], sizes = [1, 128], strides = [1, 1]} : vector<28x128xf32> to vector<1x128xf32>
    %366 = vector.broadcast %365 : vector<1x128xf32> to vector<16x128xf32>
    %367 = arith.addf %364, %366 : vector<16x128xf32>
    %cst_84 = arith.constant 0.000000e+00 : f32
    %368 = vector.broadcast %cst_84 : f32 to vector<16x128xf32>
    %369 = arith.maximumf %367, %368 : vector<16x128xf32>
    %370 = vector.extract_strided_slice %0 {offsets = [8, 0], sizes = [1, 128], strides = [1, 1]} : vector<28x128xf32> to vector<1x128xf32>
    %371 = vector.extract_strided_slice %0 {offsets = [9, 0], sizes = [1, 128], strides = [1, 1]} : vector<28x128xf32> to vector<1x128xf32>
    %cst_85 = arith.constant dense<0.000000e+00> : vector<128xf32>
    %372 = vector.multi_reduction <add>, %369, %cst_85 [0] : vector<16x128xf32> to vector<128xf32>
    %373 = vector.shape_cast %372 : vector<128xf32> to vector<1x128xf32>
    %374 = arith.mulf %369, %369 : vector<16x128xf32>
    %cst_86 = arith.constant dense<0.000000e+00> : vector<128xf32>
    %375 = vector.multi_reduction <add>, %374, %cst_86 [0] : vector<16x128xf32> to vector<128xf32>
    %376 = vector.shape_cast %375 : vector<128xf32> to vector<1x128xf32>
    %cst_87 = arith.constant 6.250000e-02 : f32
    %377 = vector.broadcast %cst_87 : f32 to vector<1x128xf32>
    %378 = arith.mulf %373, %377 : vector<1x128xf32>
    %cst_88 = arith.constant 6.250000e-02 : f32
    %379 = vector.broadcast %cst_88 : f32 to vector<1x128xf32>
    %380 = arith.mulf %376, %379 : vector<1x128xf32>
    %381 = arith.mulf %378, %378 : vector<1x128xf32>
    %382 = arith.subf %380, %381 : vector<1x128xf32>
    %cst_89 = arith.constant 0.000000e+00 : f32
    %383 = vector.broadcast %cst_89 : f32 to vector<1x128xf32>
    %384 = arith.maximumf %382, %383 : vector<1x128xf32>
    %385 = vector.broadcast %378 : vector<1x128xf32> to vector<16x128xf32>
    %386 = arith.subf %369, %385 : vector<16x128xf32>
    %cst_90 = arith.constant 9.99999974E-6 : f32
    %387 = vector.broadcast %cst_90 : f32 to vector<1x128xf32>
    %388 = arith.addf %384, %387 : vector<1x128xf32>
    %389 = math.rsqrt %388 : vector<1x128xf32>
    %390 = vector.broadcast %389 : vector<1x128xf32> to vector<16x128xf32>
    %391 = arith.mulf %386, %390 : vector<16x128xf32>
    %392 = vector.broadcast %370 : vector<1x128xf32> to vector<16x128xf32>
    %393 = arith.mulf %391, %392 : vector<16x128xf32>
    %394 = vector.broadcast %371 : vector<1x128xf32> to vector<16x128xf32>
    %395 = arith.addf %393, %394 : vector<16x128xf32>
    %396 = arith.truncf %395 : vector<16x128xf32> to vector<16x128xbf16>
    %c3_91 = arith.constant 3 : index
    %c0_92 = arith.constant 0 : index
    %c0_93 = arith.constant 0 : index
    %397 = vector.load %arg5[%c3_91, %c0_92, %c0_93] : memref<12x128x128xbf16, #tpu.memory_space<vmem>>, vector<1x128x128xbf16>
    %398 = vector.shape_cast %397 : vector<1x128x128xbf16> to vector<128x128xbf16>
    %cst_94 = arith.constant dense<0.000000e+00> : vector<16x128xf32>
    %399 = tpu.matmul %396, %398, %cst_94 {dimension_numbers = #tpu.dot_dimension_numbers<[1], [0], [0], [1], [0, 0, 1, 1], [], []>} : vector<16x128xbf16>, vector<128x128xbf16>, vector<16x128xf32> -> vector<16x128xf32>
    %400 = arith.truncf %399 : vector<16x128xf32> to vector<16x128xbf16>
    %cst_95 = arith.constant dense<0.000000e+00> : vector<16x128xf32>
    %401 = tpu.matmul %262, %400, %cst_95 {dimension_numbers = #tpu.dot_dimension_numbers<[1], [0], [0], [1], [0, 0, 1, 1], [], []>} : vector<16x16xbf16>, vector<16x128xbf16>, vector<16x128xf32> -> vector<16x128xf32>
    %402 = vector.extract_strided_slice %0 {offsets = [10, 0], sizes = [1, 128], strides = [1, 1]} : vector<28x128xf32> to vector<1x128xf32>
    %403 = vector.broadcast %402 : vector<1x128xf32> to vector<16x128xf32>
    %404 = arith.addf %401, %403 : vector<16x128xf32>
    %cst_96 = arith.constant 0.000000e+00 : f32
    %405 = vector.broadcast %cst_96 : f32 to vector<16x128xf32>
    %406 = arith.maximumf %404, %405 : vector<16x128xf32>
    %c0_97 = arith.constant 0 : index
    %c0_98 = arith.constant 0 : index
    %407 = vector.load %arg2[%c0_97, %c0_98] : memref<2x16xf32, #tpu.memory_space<vmem>>, vector<2x16xf32>
    %cst_99 = arith.constant dense<0.000000e+00> : vector<2x128xf32>
    %408 = tpu.matmul %407, %406, %cst_99 {dimension_numbers = #tpu.dot_dimension_numbers<[1], [0], [0], [1], [0, 0, 1, 1], [], []>} : vector<2x16xf32>, vector<16x128xf32>, vector<2x128xf32> -> vector<2x128xf32>
    %409 = arith.addf %408, %261 : vector<2x128xf32>
    %410 = vector.extract_strided_slice %0 {offsets = [11, 0], sizes = [1, 128], strides = [1, 1]} : vector<28x128xf32> to vector<1x128xf32>
    %411 = vector.extract_strided_slice %0 {offsets = [12, 0], sizes = [1, 128], strides = [1, 1]} : vector<28x128xf32> to vector<1x128xf32>
    %cst_100 = arith.constant dense<0.000000e+00> : vector<128xf32>
    %412 = vector.multi_reduction <add>, %409, %cst_100 [0] : vector<2x128xf32> to vector<128xf32>
    %413 = vector.shape_cast %412 : vector<128xf32> to vector<1x128xf32>
    %414 = arith.mulf %409, %409 : vector<2x128xf32>
    %cst_101 = arith.constant dense<0.000000e+00> : vector<128xf32>
    %415 = vector.multi_reduction <add>, %414, %cst_101 [0] : vector<2x128xf32> to vector<128xf32>
    %416 = vector.shape_cast %415 : vector<128xf32> to vector<1x128xf32>
    %cst_102 = arith.constant 5.000000e-01 : f32
    %417 = vector.broadcast %cst_102 : f32 to vector<1x128xf32>
    %418 = arith.mulf %413, %417 : vector<1x128xf32>
    %cst_103 = arith.constant 5.000000e-01 : f32
    %419 = vector.broadcast %cst_103 : f32 to vector<1x128xf32>
    %420 = arith.mulf %416, %419 : vector<1x128xf32>
    %421 = arith.mulf %418, %418 : vector<1x128xf32>
    %422 = arith.subf %420, %421 : vector<1x128xf32>
    %cst_104 = arith.constant 0.000000e+00 : f32
    %423 = vector.broadcast %cst_104 : f32 to vector<1x128xf32>
    %424 = arith.maximumf %422, %423 : vector<1x128xf32>
    %425 = vector.broadcast %418 : vector<1x128xf32> to vector<2x128xf32>
    %426 = arith.subf %409, %425 : vector<2x128xf32>
    %cst_105 = arith.constant 9.99999974E-6 : f32
    %427 = vector.broadcast %cst_105 : f32 to vector<1x128xf32>
    %428 = arith.addf %424, %427 : vector<1x128xf32>
    %429 = math.rsqrt %428 : vector<1x128xf32>
    %430 = vector.broadcast %429 : vector<1x128xf32> to vector<2x128xf32>
    %431 = arith.mulf %426, %430 : vector<2x128xf32>
    %432 = vector.broadcast %410 : vector<1x128xf32> to vector<2x128xf32>
    %433 = arith.mulf %431, %432 : vector<2x128xf32>
    %434 = vector.broadcast %411 : vector<1x128xf32> to vector<2x128xf32>
    %435 = arith.addf %433, %434 : vector<2x128xf32>
    %436 = arith.truncf %435 : vector<2x128xf32> to vector<2x128xbf16>
    %c10 = arith.constant 10 : index
    %c0_106 = arith.constant 0 : index
    %c0_107 = arith.constant 0 : index
    %437 = vector.load %arg5[%c10, %c0_106, %c0_107] : memref<12x128x128xbf16, #tpu.memory_space<vmem>>, vector<1x128x128xbf16>
    %438 = vector.shape_cast %437 : vector<1x128x128xbf16> to vector<128x128xbf16>
    %cst_108 = arith.constant dense<0.000000e+00> : vector<2x128xf32>
    %439 = tpu.matmul %436, %438, %cst_108 {dimension_numbers = #tpu.dot_dimension_numbers<[1], [0], [0], [1], [0, 0, 1, 1], [], []>} : vector<2x128xbf16>, vector<128x128xbf16>, vector<2x128xf32> -> vector<2x128xf32>
    %440 = vector.extract_strided_slice %0 {offsets = [13, 0], sizes = [1, 128], strides = [1, 1]} : vector<28x128xf32> to vector<1x128xf32>
    %441 = vector.broadcast %440 : vector<1x128xf32> to vector<2x128xf32>
    %442 = arith.addf %439, %441 : vector<2x128xf32>
    %cst_109 = arith.constant 0.000000e+00 : f32
    %443 = vector.broadcast %cst_109 : f32 to vector<2x128xf32>
    %444 = arith.maximumf %442, %443 : vector<2x128xf32>
    %445 = vector.extract_strided_slice %0 {offsets = [14, 0], sizes = [1, 128], strides = [1, 1]} : vector<28x128xf32> to vector<1x128xf32>
    %446 = vector.extract_strided_slice %0 {offsets = [15, 0], sizes = [1, 128], strides = [1, 1]} : vector<28x128xf32> to vector<1x128xf32>
    %cst_110 = arith.constant dense<0.000000e+00> : vector<128xf32>
    %447 = vector.multi_reduction <add>, %444, %cst_110 [0] : vector<2x128xf32> to vector<128xf32>
    %448 = vector.shape_cast %447 : vector<128xf32> to vector<1x128xf32>
    %449 = arith.mulf %444, %444 : vector<2x128xf32>
    %cst_111 = arith.constant dense<0.000000e+00> : vector<128xf32>
    %450 = vector.multi_reduction <add>, %449, %cst_111 [0] : vector<2x128xf32> to vector<128xf32>
    %451 = vector.shape_cast %450 : vector<128xf32> to vector<1x128xf32>
    %cst_112 = arith.constant 5.000000e-01 : f32
    %452 = vector.broadcast %cst_112 : f32 to vector<1x128xf32>
    %453 = arith.mulf %448, %452 : vector<1x128xf32>
    %cst_113 = arith.constant 5.000000e-01 : f32
    %454 = vector.broadcast %cst_113 : f32 to vector<1x128xf32>
    %455 = arith.mulf %451, %454 : vector<1x128xf32>
    %456 = arith.mulf %453, %453 : vector<1x128xf32>
    %457 = arith.subf %455, %456 : vector<1x128xf32>
    %cst_114 = arith.constant 0.000000e+00 : f32
    %458 = vector.broadcast %cst_114 : f32 to vector<1x128xf32>
    %459 = arith.maximumf %457, %458 : vector<1x128xf32>
    %460 = vector.broadcast %453 : vector<1x128xf32> to vector<2x128xf32>
    %461 = arith.subf %444, %460 : vector<2x128xf32>
    %cst_115 = arith.constant 9.99999974E-6 : f32
    %462 = vector.broadcast %cst_115 : f32 to vector<1x128xf32>
    %463 = arith.addf %459, %462 : vector<1x128xf32>
    %464 = math.rsqrt %463 : vector<1x128xf32>
    %465 = vector.broadcast %464 : vector<1x128xf32> to vector<2x128xf32>
    %466 = arith.mulf %461, %465 : vector<2x128xf32>
    %467 = vector.broadcast %445 : vector<1x128xf32> to vector<2x128xf32>
    %468 = arith.mulf %466, %467 : vector<2x128xf32>
    %469 = vector.broadcast %446 : vector<1x128xf32> to vector<2x128xf32>
    %470 = arith.addf %468, %469 : vector<2x128xf32>
    %471 = arith.truncf %470 : vector<2x128xf32> to vector<2x128xbf16>
    %c11 = arith.constant 11 : index
    %c0_116 = arith.constant 0 : index
    %c0_117 = arith.constant 0 : index
    %472 = vector.load %arg5[%c11, %c0_116, %c0_117] : memref<12x128x128xbf16, #tpu.memory_space<vmem>>, vector<1x128x128xbf16>
    %473 = vector.shape_cast %472 : vector<1x128x128xbf16> to vector<128x128xbf16>
    %cst_118 = arith.constant dense<0.000000e+00> : vector<2x128xf32>
    %474 = tpu.matmul %471, %473, %cst_118 {dimension_numbers = #tpu.dot_dimension_numbers<[1], [0], [0], [1], [0, 0, 1, 1], [], []>} : vector<2x128xbf16>, vector<128x128xbf16>, vector<2x128xf32> -> vector<2x128xf32>
    %475 = vector.extract_strided_slice %0 {offsets = [16, 0], sizes = [1, 128], strides = [1, 1]} : vector<28x128xf32> to vector<1x128xf32>
    %476 = vector.broadcast %475 : vector<1x128xf32> to vector<2x128xf32>
    %477 = arith.addf %474, %476 : vector<2x128xf32>
    %478 = tpu.iota {dimensions = array<i32: 1>} : vector<2x128xi32>
    %c2_i32 = arith.constant 2 : i32
    %479 = vector.broadcast %c2_i32 : i32 to vector<2x128xi32>
    %480 = arith.cmpi slt, %478, %479 : vector<2x128xi32>
    %cst_119 = arith.constant -1.000000e+30 : f32
    %481 = vector.broadcast %cst_119 : f32 to vector<2x128xf32>
    %482 = arith.select %480, %477, %481 : vector<2x128xi1>, vector<2x128xf32>
    %cst_120 = arith.constant dense<0xFF800000> : vector<2xf32>
    %483 = vector.multi_reduction <maximumf>, %482, %cst_120 [1] : vector<2x128xf32> to vector<2xf32>
    %484 = vector.shape_cast %483 : vector<2xf32> to vector<2x1xf32>
    %485 = vector.broadcast %484 : vector<2x1xf32> to vector<2x128xf32>
    %486 = arith.subf %482, %485 : vector<2x128xf32>
    %487 = math.exp %486 : vector<2x128xf32>
    %cst_121 = arith.constant dense<0.000000e+00> : vector<2xf32>
    %488 = vector.multi_reduction <add>, %487, %cst_121 [1] : vector<2x128xf32> to vector<2xf32>
    %489 = vector.shape_cast %488 : vector<2xf32> to vector<2x1xf32>
    %490 = math.log %489 : vector<2x1xf32>
    %491 = arith.addf %484, %490 : vector<2x1xf32>
    %492 = vector.broadcast %491 : vector<2x1xf32> to vector<2x128xf32>
    %493 = arith.subf %477, %492 : vector<2x128xf32>
    %494 = vector.extract_strided_slice %493 {offsets = [0, 0], sizes = [2, 2], strides = [1, 1]} : vector<2x128xf32> to vector<2x2xf32>
    %495 = tpu.concatenate %76, %128, %180, %232 in 1 : vector<2x1xf32>, vector<2x1xf32>, vector<2x1xf32>, vector<2x1xf32> -> vector<2x4xf32>
    %496 = tpu.concatenate %82, %134, %186, %238 in 1 : vector<2x1xf32>, vector<2x1xf32>, vector<2x1xf32>, vector<2x1xf32> -> vector<2x4xf32>
    %497 = tpu.concatenate %88, %140, %192, %244 in 1 : vector<2x1xf32>, vector<2x1xf32>, vector<2x1xf32>, vector<2x1xf32> -> vector<2x4xf32>
    %cst_122 = arith.constant 0.000000e+00 : f32
    %498 = vector.broadcast %cst_122 : f32 to vector<2x114xf32>
    %499 = tpu.concatenate %494, %495, %496, %497, %498 in 1 : vector<2x2xf32>, vector<2x4xf32>, vector<2x4xf32>, vector<2x4xf32>, vector<2x114xf32> -> vector<2x128xf32>
    %c0_123 = arith.constant 0 : index
    %c0_124 = arith.constant 0 : index
    %500 = vector.load %arg7[%c0_123, %c0_124] : memref<2x128xf32, #tpu.memory_space<vmem>>, vector<2x128xf32>
    tpu.vector_store %arg7[%c0_123, %c0_124], %499 {strides = array<i32>} : memref<2x128xf32, #tpu.memory_space<vmem>>, vector<2x128xf32>,
    return
  }
}

</mosaic_0001>

<llo_original>
// kernel: tpu_custom_call.1
$region0: #{tpu_custom_call.1}
  #allocation0 [shape = 'u32[]', space=smem, size = 0x4, offset = 0x4, fixed_abs, tag = 'smem constant byte address 0x4 - core index']
  #allocation1 [shape = 'u32[144,128]{1,0:T(1,128)}', space=vmem, size = 0x12000, scoped, tag = 'internal scratch']
  %s0 = inlined_call_operand.hbm [shape: f32[16,128], index: 0, kind: input, shape index: {}]
  %s1 = inlined_call_operand.hbm [shape: bf16[16,16], index: 1, kind: input, shape index: {}]
  %s2 = inlined_call_operand.vmem [shape: f32[2,16], index: 2, kind: input, shape index: {}]
  %s3 = inlined_call_operand.vmem [shape: f32[2,128], index: 3, kind: input, shape index: {}]
  %s4 = inlined_call_operand.hbm [shape: f32[28,128], index: 4, kind: input, shape index: {}]
  %s5 = inlined_call_operand.hbm [shape: bf16[12,128,128], index: 5, kind: input, shape index: {}]
  %s6 = inlined_call_operand.vmem [shape: f32[8], index: 6, kind: input, shape index: {}]
  %s7 = inlined_call_operand.hbm [shape: f32[2,128], index: 7, kind: output, shape index: {}]
  %s8 = sld [smem:[#allocation0]]
  $region58: #{tpu_custom_call.1} parent=0
    _
  %s10 = ssub.s32 1, %s8
  %s11 = scalar_select 0, %s10, %s8
  $region1: #{tpu_custom_call.1} parent=0
    #allocation2 [shape = 'u8[8192]{0}', space=vmem, size = 0x2000, scoped, tag = 'input window, operand 0, single buffered']
    #allocation3 [shape = 's32[1]{0}', space=sflag, size = 0x4, scoped, tag = 'scoped memory for tpu_custom_call.1']
    #allocation4 [shape = 's32[1]{0}', space=sflag, size = 0x4, scoped, tag = 'scoped memory for tpu_custom_call.1']
    #allocation5 [shape = 's32[1]{0}', space=sflag, size = 0x4, scoped, tag = 'scoped memory for tpu_custom_call.1']
    #allocation6 [shape = 'u8[4096]{0}', space=vmem, size = 0x1000, scoped, tag = 'input window, operand 1, single buffered']
    #allocation7 [shape = 's32[1]{0}', space=sflag, size = 0x4, scoped, tag = 'scoped memory for tpu_custom_call.1']
    #allocation8 [shape = 'u8[16384]{0}', space=vmem, size = 0x4000, scoped, tag = 'input window, operand 4, single buffered']
    #allocation9 [shape = 'u8[393216]{0}', space=vmem, size = 0x60000, scoped, tag = 'input window, operand 5, single buffered']
    #allocation10 [shape = 's32[1]{0}', space=sflag, size = 0x4, scoped, tag = 'scoped memory for tpu_custom_call.1']
    #allocation11 [shape = 'u8[512]{0}', space=smem, size = 0x200, scoped, tag = 'input window, operand 6, single buffered']
    #allocation12 [shape = 'u8[1024]{0}', space=vmem, size = 0x400, scoped, tag = 'output window, operand 0, single buffered']
    %12 = vsyncpa [#allocation3], 0
    %13 = vsyncpa [#allocation7], 0
    %14 = vsyncpa [#allocation10], 0
    %15 = vsyncpa [#allocation5], 0
    %16 = vsyncpa [#allocation4], 0
    // Predicated region
    $region2: #{tpu_custom_call.1} parent=1 // pred_check
      _
    $region3: #{tpu_custom_call.1} parent=1 // pred_check_branch
      %18 = sbr.rel (0) target = $region5
    $region4: #{tpu_custom_call.1} parent=1 // pred_region
      %s20 = ssub.s32 256, 256
      %21 = vsyncadd [#allocation3], %s20
      %s22 = sshll.u32 [#allocation2], 4
      %s23 = int_to_ptr.vmem [resolvable:$true] %s22
      %28 = dma.hbm_to_vmem [thread:$0]  %s0, 256, %s23, [#allocation3], 128, 128, 8
    $region5: #{tpu_custom_call.1} parent=1 // pred_fallthru
      _
    // Predicated region
    $region6: #{tpu_custom_call.1} parent=1 // pred_check
      _
    $region7: #{tpu_custom_call.1} parent=1 // pred_check_branch
      %30 = sbr.rel (0) target = $region9
    $region8: #{tpu_custom_call.1} parent=1 // pred_region
      %s32 = ssub.s32 128, 128
      %33 = vsyncadd [#allocation7], %s32
      %s34 = sshll.u32 [#allocation6], 4
      %s35 = int_to_ptr.vmem [resolvable:$true] %s34
      %40 = dma.hbm_to_vmem [thread:$0]  %s1, 128, %s35, [#allocation7], 64, 64, 4
    $region9: #{tpu_custom_call.1} parent=1 // pred_fallthru
      _
    // Predicated region
    $region10: #{tpu_custom_call.1} parent=1 // pred_check
      _
    $region11: #{tpu_custom_call.1} parent=1 // pred_check_branch
      %42 = sbr.rel (0) target = $region13
    $region12: #{tpu_custom_call.1} parent=1 // pred_region
      _
    $region13: #{tpu_custom_call.1} parent=1 // pred_fallthru
      _
    // Predicated region
    $region14: #{tpu_custom_call.1} parent=1 // pred_check
      _
    $region15: #{tpu_custom_call.1} parent=1 // pred_check_branch
      %44 = sbr.rel (0) target = $region17
    $region16: #{tpu_custom_call.1} parent=1 // pred_region
      _
    $region17: #{tpu_custom_call.1} parent=1 // pred_fallthru
      _
    // Predicated region
    $region18: #{tpu_custom_call.1} parent=1 // pred_check
      _
    $region19: #{tpu_custom_call.1} parent=1 // pred_check_branch
      %46 = sbr.rel (0) target = $region21
    $region20: #{tpu_custom_call.1} parent=1 // pred_region
      %s48 = ssub.s32 512, 512
      %49 = vsyncadd [#allocation7], %s48
      %s50 = sshll.u32 [#allocation8], 4
      %s51 = int_to_ptr.vmem [resolvable:$true] %s50
      %56 = dma.hbm_to_vmem [thread:$0]  %s4, 512, %s51, [#allocation7], 128, 128, 8
    $region21: #{tpu_custom_call.1} parent=1 // pred_fallthru
      _
    // Predicated region
    $region22: #{tpu_custom_call.1} parent=1 // pred_check
      _
    $region23: #{tpu_custom_call.1} parent=1 // pred_check_branch
      %58 = sbr.rel (0) target = $region25
    $region24: #{tpu_custom_call.1} parent=1 // pred_region
      %s60 = ssub.s32 12288, 12288
      %61 = vsyncadd [#allocation10], %s60
      %s62 = sshll.u32 [#allocation9], 4
      %s63 = int_to_ptr.vmem [resolvable:$true] %s62
      %68 = dma.hbm_to_vmem [thread:$0]  %s5, 12288, %s63, [#allocation10], 64, 64, 4
    $region25: #{tpu_custom_call.1} parent=1 // pred_fallthru
      _
    // Predicated region
    $region26: #{tpu_custom_call.1} parent=1 // pred_check
      _
    $region27: #{tpu_custom_call.1} parent=1 // pred_check_branch
      %70 = sbr.rel (0) target = $region29
    $region28: #{tpu_custom_call.1} parent=1 // pred_region
      %s72 = ssub.s32 16, 16
      %73 = vsyncadd [#allocation5], %s72
      %s75 = sshll.u32 %s6, 4
      %s76 = int_to_ptr.vmem [resolvable:$true] %s75
      %78 = dma.vmem_to_smem %s76, 16, [#allocation11], [#allocation5]
    $region29: #{tpu_custom_call.1} parent=1 // pred_fallthru
      _
    // Predicated region
    $region30: #{tpu_custom_call.1} parent=1 // pred_check
      _
    $region31: #{tpu_custom_call.1} parent=1 // pred_check_branch
      %80 = sbr.rel (0) target = $region33
    $region32: #{tpu_custom_call.1} parent=1 // pred_region
      %81 = dma.done [#allocation3], 256
    $region33: #{tpu_custom_call.1} parent=1 // pred_fallthru
      _
    // Predicated region
    $region34: #{tpu_custom_call.1} parent=1 // pred_check
      _
    $region35: #{tpu_custom_call.1} parent=1 // pred_check_branch
      %83 = sbr.rel (0) target = $region37
    $region36: #{tpu_custom_call.1} parent=1 // pred_region
      %84 = dma.done [#allocation7], 128
    $region37: #{tpu_custom_call.1} parent=1 // pred_fallthru
      _
    // Predicated region
    $region38: #{tpu_custom_call.1} parent=1 // pred_check
      _
    $region39: #{tpu_custom_call.1} parent=1 // pred_check_branch
      %86 = sbr.rel (0) target = $region41
    $region40: #{tpu_custom_call.1} parent=1 // pred_region
      %87 = dma.done [#allocation7], 512
    $region41: #{tpu_custom_call.1} parent=1 // pred_fallthru
      _
    // Predicated region
    $region42: #{tpu_custom_call.1} parent=1 // pred_check
      _
    $region43: #{tpu_custom_call.1} parent=1 // pred_check_branch
      %89 = sbr.rel (0) target = $region45
    $region44: #{tpu_custom_call.1} parent=1 // pred_region
      %90 = dma.done [#allocation10], 12288
    $region45: #{tpu_custom_call.1} parent=1 // pred_fallthru
      _
    // Predicated region
    $region46: #{tpu_custom_call.1} parent=1 // pred_check
      _
    $region47: #{tpu_custom_call.1} parent=1 // pred_check_branch
      %92 = sbr.rel (0) target = $region49
    $region48: #{tpu_custom_call.1} parent=1 // pred_region
      %93 = dma.done [#allocation5], 16
    $region49: #{tpu_custom_call.1} parent=1 // pred_fallthru
      _
    %94 = sfence
    %v96 = vld [vmem:[#allocation8] sm:$0xff]
    %v97 = vld [vmem:[#allocation8 + $0x8] sm:$0xff]
    %v98 = vld [vmem:[#allocation8 + $0x10] sm:$0xff]
    %v99 = vld [vmem:[#allocation8 + $0x18] sm:$0xf]
    %v100 = vld [vmem:[%s3] sm:$0x3]
    %s101 = sld [smem:[#allocation11]]
    %s102 = sld [smem:[#allocation11 + $0x1]]
    %s103 = sld [smem:[#allocation11 + $0x2]]
    %s104 = sld [smem:[#allocation11 + $0x3]]
    %s105 = sld [smem:[#allocation11 + $0x4]]
    %s106 = scalar_lea.vmem [#allocation9], 256
    %v107 = vld [vmem:[%s106] sm:$0xf]
    %v108 = vld [vmem:[%s106 + $0x4] sm:$0xf]
    %v109 = vld [vmem:[%s106 + $0x8] sm:$0xf]
    %v110 = vld [vmem:[%s106 + $0xc] sm:$0xf]
    %v111 = vld [vmem:[%s106 + $0x10] sm:$0xf]
    %v112 = vld [vmem:[%s106 + $0x14] sm:$0xf]
    %v113 = vld [vmem:[%s106 + $0x18] sm:$0xf]
    %v114 = vld [vmem:[%s106 + $0x1c] sm:$0xf]
    %v115 = vld [vmem:[%s106 + $0x20] sm:$0xf]
    %v116 = vld [vmem:[%s106 + $0x24] sm:$0xf]
    %v117 = vld [vmem:[%s106 + $0x28] sm:$0xf]
    %v118 = vld [vmem:[%s106 + $0x2c] sm:$0xf]
    %v119 = vld [vmem:[%s106 + $0x30] sm:$0xf]
    %v120 = vld [vmem:[%s106 + $0x34] sm:$0xf]
    %v121 = vld [vmem:[%s106 + $0x38] sm:$0xf]
    %v122 = vld [vmem:[%s106 + $0x3c] sm:$0xf]
    %s123 = scalar_lea.vmem [#allocation9], 320
    %v124 = vld [vmem:[%s123] sm:$0xf]
    %v125 = vld [vmem:[%s123 + $0x4] sm:$0xf]
    %v126 = vld [vmem:[%s123 + $0x8] sm:$0xf]
    %v127 = vld [vmem:[%s123 + $0xc] sm:$0xf]
    %v128 = vld [vmem:[%s123 + $0x10] sm:$0xf]
    %v129 = vld [vmem:[%s123 + $0x14] sm:$0xf]
    %v130 = vld [vmem:[%s123 + $0x18] sm:$0xf]
    %v131 = vld [vmem:[%s123 + $0x1c] sm:$0xf]
    %v132 = vld [vmem:[%s123 + $0x20] sm:$0xf]
    %v133 = vld [vmem:[%s123 + $0x24] sm:$0xf]
    %v134 = vld [vmem:[%s123 + $0x28] sm:$0xf]
    %v135 = vld [vmem:[%s123 + $0x2c] sm:$0xf]
    %v136 = vld [vmem:[%s123 + $0x30] sm:$0xf]
    %v137 = vld [vmem:[%s123 + $0x34] sm:$0xf]
    %v138 = vld [vmem:[%s123 + $0x38] sm:$0xf]
    %v139 = vld [vmem:[%s123 + $0x3c] sm:$0xf]
    %s140 = scalar_lea.vmem [#allocation9], 384
    %v141 = vld [vmem:[%s140] sm:$0xf]
    %v142 = vld [vmem:[%s140 + $0x4] sm:$0xf]
    %v143 = vld [vmem:[%s140 + $0x8] sm:$0xf]
    %v144 = vld [vmem:[%s140 + $0xc] sm:$0xf]
    %v145 = vld [vmem:[%s140 + $0x10] sm:$0xf]
    %v146 = vld [vmem:[%s140 + $0x14] sm:$0xf]
    %v147 = vld [vmem:[%s140 + $0x18] sm:$0xf]
    %v148 = vld [vmem:[%s140 + $0x1c] sm:$0xf]
    %v149 = vld [vmem:[%s140 + $0x20] sm:$0xf]
    %v150 = vld [vmem:[%s140 + $0x24] sm:$0xf]
    %v151 = vld [vmem:[%s140 + $0x28] sm:$0xf]
    %v152 = vld [vmem:[%s140 + $0x2c] sm:$0xf]
    %v153 = vld [vmem:[%s140 + $0x30] sm:$0xf]
    %v154 = vld [vmem:[%s140 + $0x34] sm:$0xf]
    %v155 = vld [vmem:[%s140 + $0x38] sm:$0xf]
    %v156 = vld [vmem:[%s140 + $0x3c] sm:$0xf]
    %158 = vset.pattern.permute.xlu0 4
    %159 = vperm.xlu0 %158, %v100
    %v160 = vpop.permute.xlu0 %159
    %v162 = vlaneseq
    %v163 = vshrl.u32 %v162, 7
    %v164 = vsub.s32 1, %v163
    %v165 = vrot.slane %v98, %v164
    %v166 = vmul.f32 %v160, %v165
    %v167 = vlaneseq
    %v168 = vshrl.u32 %v167, 7
    %v169 = vsub.s32 2, %v168
    %v170 = vrot.slane %v98, %v169
    %v171 = vadd.f32 %v166, %v170
    %v172 = vlaneseq
    %v173 = vshrl.u32 %v172, 7
    %v174 = vsub.s32 3, %v173
    %v175 = vrot.slane %v98, %v174
    %v176 = vlaneseq
    %v177 = vshrl.u32 %v176, 7
    %v178 = vsub.s32 4, %v177
    %v179 = vrot.slane %v98, %v178
    %v180 = vstv %s101
    %v181 = vmul.f32 %v180, %v171
    %v182 = vsub.f32 %v171, %v181
    %v183 = vstv %s102
    %v184 = vmul.f32 %v183, %v171
    %v185 = vsub.f32 %v182, %v184
    %v186 = vpack.c.bf16 %v185, %v185
    %v187 = vlaneseq
    %v188 = vshrl.u32 %v187, 7
    %v189 = vsub.s32 5, %v188
    %v190 = vrot.slane %v98, %v189
    %v207 = vunpack.c.l.b16 %v107
    %v208 = vunpack.c.l.b16 %v108
    %v209 = vunpack.c.l.b16 %v109
    %v210 = vunpack.c.l.b16 %v110
    %v211 = vunpack.c.l.b16 %v111
    %v212 = vunpack.c.l.b16 %v112
    %v213 = vunpack.c.l.b16 %v113
    %v214 = vunpack.c.l.b16 %v114
    %v215 = vunpack.c.l.b16 %v115
    %v216 = vunpack.c.l.b16 %v116
    %v217 = vunpack.c.l.b16 %v117
    %v218 = vunpack.c.l.b16 %v118
    %v219 = vunpack.c.l.b16 %v119
    %v220 = vunpack.c.l.b16 %v120
    %v221 = vunpack.c.l.b16 %v121
    %v222 = vunpack.c.l.b16 %v122
    %v223 = vpack.c.b16 %v208, %v207
    %v224 = vpack.c.b16 %v210, %v209
    %v225 = vpack.c.b16 %v212, %v211
    %v226 = vpack.c.b16 %v214, %v213
    %v227 = vpack.c.b16 %v216, %v215
    %v228 = vpack.c.b16 %v218, %v217
    %v229 = vpack.c.b16 %v220, %v219
    %v230 = vpack.c.b16 %v222, %v221
    %239 = vmatprep.subr.bf16.mxu0 0
    %240 = vmatpush1.bf16.msra.mxu0 %v223
    %241 = vmatprep.subr.bf16.mxu0 0
    %242 = vmatpush1.bf16.msra.mxu0 %v224
    %243 = vmatprep.subr.bf16.mxu0 0
    %244 = vmatpush1.bf16.msra.mxu0 %v225
    %245 = vmatprep.subr.bf16.mxu0 0
    %246 = vmatpush1.bf16.msra.mxu0 %v226
    %247 = vmatprep.subr.bf16.mxu0 0
    %248 = vmatpush1.bf16.msra.mxu0 %v227
    %249 = vmatprep.subr.bf16.mxu0 0
    %250 = vmatpush1.bf16.msra.mxu0 %v228
    %251 = vmatprep.subr.bf16.mxu0 0
    %252 = vmatpush1.bf16.msra.mxu0 %v229
    %253 = vmatprep.subr.bf16.mxu0 0
    %254 = vmatpush1.bf16.msra.mxu0 %v230
    %255 = vmatprep.subr.bf16.mxu0 0
    %256 = vmatpush1.bf16.msra.mxu0 0
    %257 = vmatprep.subr.bf16.mxu0 0
    %258 = vmatpush1.bf16.msra.mxu0 0
    %259 = vmatprep.subr.bf16.mxu0 0
    %260 = vmatpush1.bf16.msra.mxu0 0
    %261 = vmatprep.subr.bf16.mxu0 0
    %262 = vmatpush1.bf16.msra.mxu0 0
    %263 = vmatprep.subr.bf16.mxu0 0
    %264 = vmatpush1.bf16.msra.mxu0 0
    %265 = vmatprep.subr.bf16.mxu0 0
    %266 = vmatpush1.bf16.msra.mxu0 0
    %267 = vmatprep.subr.bf16.mxu0 0
    %268 = vmatpush1.bf16.msra.mxu0 0
    %269 = vmatprep.subr.bf16.mxu0 0
    %270 = vmatpush1.bf16.msra.mxu0 0
    %271 = vmatprep.mubr.bf16.mxu0 0
    %272 = vmatmul.mubr.bf16.gmra.mrb[0].mxu0 %v186
    %v273 = vpop.f32.mrb[0].mxu0
    %v274 = vadd.f32 %v190, %v273
    %v275 = vpop.f32.mrb[0].mxu0
    %v276 = vpop.f32.mrb[0].mxu0
    %v277 = vpop.f32.mrb[0].mxu0
    %278 = vdwg.mxu0
    %v279 = vmul.f32 %v180, %v274
    %v280 = vadd.f32 %v175, %v279
    %v281 = vpack.c.bf16 %v280, %v280
    %v282 = vlaneseq
    %v283 = vshrl.u32 %v282, 7
    %v284 = vsub.s32 6, %v283
    %v285 = vrot.slane %v98, %v284
    %v302 = vunpack.c.l.b16 %v124
    %v303 = vunpack.c.l.b16 %v125
    %v304 = vunpack.c.l.b16 %v126
    %v305 = vunpack.c.l.b16 %v127
    %v306 = vunpack.c.l.b16 %v128
    %v307 = vunpack.c.l.b16 %v129
    %v308 = vunpack.c.l.b16 %v130
    %v309 = vunpack.c.l.b16 %v131
    %v310 = vunpack.c.l.b16 %v132
    %v311 = vunpack.c.l.b16 %v133
    %v312 = vunpack.c.l.b16 %v134
    %v313 = vunpack.c.l.b16 %v135
    %v314 = vunpack.c.l.b16 %v136
    %v315 = vunpack.c.l.b16 %v137
    %v316 = vunpack.c.l.b16 %v138
    %v317 = vunpack.c.l.b16 %v139
    %v318 = vpack.c.b16 %v303, %v302
    %v319 = vpack.c.b16 %v305, %v304
    %v320 = vpack.c.b16 %v307, %v306
    %v321 = vpack.c.b16 %v309, %v308
    %v322 = vpack.c.b16 %v311, %v310
    %v323 = vpack.c.b16 %v313, %v312
    %v324 = vpack.c.b16 %v315, %v314
    %v325 = vpack.c.b16 %v317, %v316
    %334 = vmatprep.subr.bf16.mxu0 0
    %335 = vmatpush1.bf16.msra.mxu0 %v318
    %336 = vmatprep.subr.bf16.mxu0 0
    %337 = vmatpush1.bf16.msra.mxu0 %v319
    %338 = vmatprep.subr.bf16.mxu0 0
    %339 = vmatpush1.bf16.msra.mxu0 %v320
    %340 = vmatprep.subr.bf16.mxu0 0
    %341 = vmatpush1.bf16.msra.mxu0 %v321
    %342 = vmatprep.subr.bf16.mxu0 0
    %343 = vmatpush1.bf16.msra.mxu0 %v322
    %344 = vmatprep.subr.bf16.mxu0 0
    %345 = vmatpush1.bf16.msra.mxu0 %v323
    %346 = vmatprep.subr.bf16.mxu0 0
    %347 = vmatpush1.bf16.msra.mxu0 %v324
    %348 = vmatprep.subr.bf16.mxu0 0
    %349 = vmatpush1.bf16.msra.mxu0 %v325
    %350 = vmatprep.subr.bf16.mxu0 0
    %351 = vmatpush1.bf16.msra.mxu0 0
    %352 = vmatprep.subr.bf16.mxu0 0
    %353 = vmatpush1.bf16.msra.mxu0 0
    %354 = vmatprep.subr.bf16.mxu0 0
    %355 = vmatpush1.bf16.msra.mxu0 0
    %356 = vmatprep.subr.bf16.mxu0 0
    %357 = vmatpush1.bf16.msra.mxu0 0
    %358 = vmatprep.subr.bf16.mxu0 0
    %359 = vmatpush1.bf16.msra.mxu0 0
    %360 = vmatprep.subr.bf16.mxu0 0
    %361 = vmatpush1.bf16.msra.mxu0 0
    %362 = vmatprep.subr.bf16.mxu0 0
    %363 = vmatpush1.bf16.msra.mxu0 0
    %364 = vmatprep.subr.bf16.mxu0 0
    %365 = vmatpush1.bf16.msra.mxu0 0
    %366 = vmatprep.mubr.bf16.mxu0 0
    %367 = vmatmul.mubr.bf16.gmra.mrb[0].mxu0 %v281
    %v368 = vpop.f32.mrb[0].mxu0
    %v369 = vadd.f32 %v285, %v368
    %v370 = vpop.f32.mrb[0].mxu0
    %v371 = vpop.f32.mrb[0].mxu0
    %v372 = vpop.f32.mrb[0].mxu0
    %373 = vdwg.mxu0
    %v374 = vmul.f32 %v183, %v274
    %v375 = vadd.f32 %v179, %v374
    %v376 = vpack.c.bf16 %v375, %v375
    %v377 = vlaneseq
    %v378 = vshrl.u32 %v377, 7
    %v379 = vsub.s32 7, %v378
    %v380 = vrot.slane %v98, %v379
    %v397 = vunpack.c.l.b16 %v141
    %v398 = vunpack.c.l.b16 %v142
    %v399 = vunpack.c.l.b16 %v143
    %v400 = vunpack.c.l.b16 %v144
    %v401 = vunpack.c.l.b16 %v145
    %v402 = vunpack.c.l.b16 %v146
    %v403 = vunpack.c.l.b16 %v147
    %v404 = vunpack.c.l.b16 %v148
    %v405 = vunpack.c.l.b16 %v149
    %v406 = vunpack.c.l.b16 %v150
    %v407 = vunpack.c.l.b16 %v151
    %v408 = vunpack.c.l.b16 %v152
    %v409 = vunpack.c.l.b16 %v153
    %v410 = vunpack.c.l.b16 %v154
    %v411 = vunpack.c.l.b16 %v155
    %v412 = vunpack.c.l.b16 %v156
    %v413 = vpack.c.b16 %v398, %v397
    %v414 = vpack.c.b16 %v400, %v399
    %v415 = vpack.c.b16 %v402, %v401
    %v416 = vpack.c.b16 %v404, %v403
    %v417 = vpack.c.b16 %v406, %v405
    %v418 = vpack.c.b16 %v408, %v407
    %v419 = vpack.c.b16 %v410, %v409
    %v420 = vpack.c.b16 %v412, %v411
    %429 = vmatprep.subr.bf16.mxu0 0
    %430 = vmatpush1.bf16.msra.mxu0 %v413
    %431 = vmatprep.subr.bf16.mxu0 0
    %432 = vmatpush1.bf16.msra.mxu0 %v414
    %433 = vmatprep.subr.bf16.mxu0 0
    %434 = vmatpush1.bf16.msra.mxu0 %v415
    %435 = vmatprep.subr.bf16.mxu0 0
    %436 = vmatpush1.bf16.msra.mxu0 %v416
    %437 = vmatprep.subr.bf16.mxu0 0
    %438 = vmatpush1.bf16.msra.mxu0 %v417
    %439 = vmatprep.subr.bf16.mxu0 0
    %440 = vmatpush1.bf16.msra.mxu0 %v418
    %441 = vmatprep.subr.bf16.mxu0 0
    %442 = vmatpush1.bf16.msra.mxu0 %v419
    %443 = vmatprep.subr.bf16.mxu0 0
    %444 = vmatpush1.bf16.msra.mxu0 %v420
    %445 = vmatprep.subr.bf16.mxu0 0
    %446 = vmatpush1.bf16.msra.mxu0 0
    %447 = vmatprep.subr.bf16.mxu0 0
    %448 = vmatpush1.bf16.msra.mxu0 0
    %449 = vmatprep.subr.bf16.mxu0 0
    %450 = vmatpush1.bf16.msra.mxu0 0
    %451 = vmatprep.subr.bf16.mxu0 0
    %452 = vmatpush1.bf16.msra.mxu0 0
    %453 = vmatprep.subr.bf16.mxu0 0
    %454 = vmatpush1.bf16.msra.mxu0 0
    %455 = vmatprep.subr.bf16.mxu0 0
    %456 = vmatpush1.bf16.msra.mxu0 0
    %457 = vmatprep.subr.bf16.mxu0 0
    %458 = vmatpush1.bf16.msra.mxu0 0
    %459 = vmatprep.subr.bf16.mxu0 0
    %460 = vmatpush1.bf16.msra.mxu0 0
    %461 = vmatprep.mubr.bf16.mxu0 0
    %462 = vmatmul.mubr.bf16.gmra.mrb[0].mxu0 %v376
    %v463 = vpop.f32.mrb[0].mxu0
    %v464 = vadd.f32 %v380, %v463
    %v465 = vpop.f32.mrb[0].mxu0
    %v466 = vpop.f32.mrb[0].mxu0
    %v467 = vpop.f32.mrb[0].mxu0
    %468 = vdwg.mxu0
    %469 = vset.pattern.permute.xlu0 0
    %470 = vperm.xlu0 %469, %v100
    %v471 = vpop.permute.xlu0 %470
    %v473 = vmul.f32 %v471, %v274
    %v474 = vadd.f32 %v473, 0.0
    %v475 = vmul.f32 %v471, %v369
    %v476 = vadd.f32 %v475, 0.0
    %v477 = vmul.f32 %v471, %v464
    %v478 = vadd.f32 %v477, 0.0
    %v479 = vlaneseq
    %v480 = vshrl.u32 %v479, 7
    %v481 = vsub.s32 1, %v480
    %v482 = vrot.slane %v99, %v481
    %v483 = vmul.f32 %v274, %v482
    %vm484 = vcmask 1041408
    %v485 = vsel %vm484, %v483, 0.0
    %486 = vadd.xlane.f32.xlu0 %v485
    %v487 = vpop.xlane.xlu0 %486
    %v488 = vstv %s103
    %v489 = vadd.f32 %v487, %v488
    %v490 = vlaneseq
    %v491 = vshrl.u32 %v490, 7
    %v492 = vsub.s32 2, %v491
    %v493 = vrot.slane %v99, %v492
    %v494 = vmul.f32 %v369, %v493
    %v495 = vsel %vm484, %v494, 0.0
    %496 = vadd.xlane.f32.xlu0 %v495
    %v497 = vpop.xlane.xlu0 %496
    %v498 = vstv %s104
    %v499 = vadd.f32 %v497, %v498
    %v500 = vlaneseq
    %v501 = vshrl.u32 %v500, 7
    %v502 = vsub.s32 3, %v501
    %v503 = vrot.slane %v99, %v502
    %v504 = vmul.f32 %v464, %v503
    %v505 = vsel %vm484, %v504, 0.0
    %506 = vadd.xlane.f32.xlu0 %v505
    %v507 = vpop.xlane.xlu0 %506
    %v508 = vstv %s105
    %v509 = vadd.f32 %v507, %v508
    %v510 = vsub.f32 %v274, %v279
    %v511 = vsub.f32 %v510, %v374
    %v512 = vpack.c.bf16 %v511, %v511
    %513 = vmatprep.subr.bf16.mxu0 0
    %514 = vmatpush1.bf16.msra.mxu0 %v223
    %515 = vmatprep.subr.bf16.mxu0 0
    %516 = vmatpush1.bf16.msra.mxu0 %v224
    %517 = vmatprep.subr.bf16.mxu0 0
    %518 = vmatpush1.bf16.msra.mxu0 %v225
    %519 = vmatprep.subr.bf16.mxu0 0
    %520 = vmatpush1.bf16.msra.mxu0 %v226
    %521 = vmatprep.subr.bf16.mxu0 0
    %522 = vmatpush1.bf16.msra.mxu0 %v227
    %523 = vmatprep.subr.bf16.mxu0 0
    %524 = vmatpush1.bf16.msra.mxu0 %v228
    %525 = vmatprep.subr.bf16.mxu0 0
    %526 = vmatpush1.bf16.msra.mxu0 %v229
    %527 = vmatprep.subr.bf16.mxu0 0
    %528 = vmatpush1.bf16.msra.mxu0 %v230
    %529 = vmatprep.subr.bf16.mxu0 0
    %530 = vmatpush1.bf16.msra.mxu0 0
    %531 = vmatprep.subr.bf16.mxu0 0
    %532 = vmatpush1.bf16.msra.mxu0 0
    %533 = vmatprep.subr.bf16.mxu0 0
    %534 = vmatpush1.bf16.msra.mxu0 0
    %535 = vmatprep.subr.bf16.mxu0 0
    %536 = vmatpush1.bf16.msra.mxu0 0
    %537 = vmatprep.subr.bf16.mxu0 0
    %538 = vmatpush1.bf16.msra.mxu0 0
    %539 = vmatprep.subr.bf16.mxu0 0
    %540 = vmatpush1.bf16.msra.mxu0 0
    %541 = vmatprep.subr.bf16.mxu0 0
    %542 = vmatpush1.bf16.msra.mxu0 0
    %543 = vmatprep.subr.bf16.mxu0 0
    %544 = vmatpush1.bf16.msra.mxu0 0
    %545 = vmatprep.mubr.bf16.mxu0 0
    %546 = vmatmul.mubr.bf16.gmra.mrb[0].mxu0 %v512
    %v547 = vpop.f32.mrb[0].mxu0
    %v548 = vadd.f32 %v190, %v547
    %v549 = vpop.f32.mrb[0].mxu0
    %v550 = vpop.f32.mrb[0].mxu0
    %v551 = vpop.f32.mrb[0].mxu0
    %552 = vdwg.mxu0
    %v553 = vmul.f32 %v180, %v548
    %v554 = vadd.f32 %v369, %v553
    %v555 = vpack.c.bf16 %v554, %v554
    %556 = vmatprep.subr.bf16.mxu0 0
    %557 = vmatpush1.bf16.msra.mxu0 %v318
    %558 = vmatprep.subr.bf16.mxu0 0
    %559 = vmatpush1.bf16.msra.mxu0 %v319
    %560 = vmatprep.subr.bf16.mxu0 0
    %561 = vmatpush1.bf16.msra.mxu0 %v320
    %562 = vmatprep.subr.bf16.mxu0 0
    %563 = vmatpush1.bf16.msra.mxu0 %v321
    %564 = vmatprep.subr.bf16.mxu0 0
    %565 = vmatpush1.bf16.msra.mxu0 %v322
    %566 = vmatprep.subr.bf16.mxu0 0
    %567 = vmatpush1.bf16.msra.mxu0 %v323
    %568 = vmatprep.subr.bf16.mxu0 0
    %569 = vmatpush1.bf16.msra.mxu0 %v324
    %570 = vmatprep.subr.bf16.mxu0 0
    %571 = vmatpush1.bf16.msra.mxu0 %v325
    %572 = vmatprep.subr.bf16.mxu0 0
    %573 = vmatpush1.bf16.msra.mxu0 0
    %574 = vmatprep.subr.bf16.mxu0 0
    %575 = vmatpush1.bf16.msra.mxu0 0
    %576 = vmatprep.subr.bf16.mxu0 0
    %577 = vmatpush1.bf16.msra.mxu0 0
    %578 = vmatprep.subr.bf16.mxu0 0
    %579 = vmatpush1.bf16.msra.mxu0 0
    %580 = vmatprep.subr.bf16.mxu0 0
    %581 = vmatpush1.bf16.msra.mxu0 0
    %582 = vmatprep.subr.bf16.mxu0 0
    %583 = vmatpush1.bf16.msra.mxu0 0
    %584 = vmatprep.subr.bf16.mxu0 0
    %585 = vmatpush1.bf16.msra.mxu0 0
    %586 = vmatprep.subr.bf16.mxu0 0
    %587 = vmatpush1.bf16.msra.mxu0 0
    %588 = vmatprep.mubr.bf16.mxu0 0
    %589 = vmatmul.mubr.bf16.gmra.mrb[0].mxu0 %v555
    %v590 = vpop.f32.mrb[0].mxu0
    %v591 = vadd.f32 %v285, %v590
    %v592 = vpop.f32.mrb[0].mxu0
    %v593 = vpop.f32.mrb[0].mxu0
    %v594 = vpop.f32.mrb[0].mxu0
    %595 = vdwg.mxu0
    %v596 = vmul.f32 %v183, %v548
    %v597 = vadd.f32 %v464, %v596
    %v598 = vpack.c.bf16 %v597, %v597
    %599 = vmatprep.subr.bf16.mxu0 0
    %600 = vmatpush1.bf16.msra.mxu0 %v413
    %601 = vmatprep.subr.bf16.mxu0 0
    %602 = vmatpush1.bf16.msra.mxu0 %v414
    %603 = vmatprep.subr.bf16.mxu0 0
    %604 = vmatpush1.bf16.msra.mxu0 %v415
    %605 = vmatprep.subr.bf16.mxu0 0
    %606 = vmatpush1.bf16.msra.mxu0 %v416
    %607 = vmatprep.subr.bf16.mxu0 0
    %608 = vmatpush1.bf16.msra.mxu0 %v417
    %609 = vmatprep.subr.bf16.mxu0 0
    %610 = vmatpush1.bf16.msra.mxu0 %v418
    %611 = vmatprep.subr.bf16.mxu0 0
    %612 = vmatpush1.bf16.msra.mxu0 %v419
    %613 = vmatprep.subr.bf16.mxu0 0
    %614 = vmatpush1.bf16.msra.mxu0 %v420
    %615 = vmatprep.subr.bf16.mxu0 0
    %616 = vmatpush1.bf16.msra.mxu0 0
    %617 = vmatprep.subr.bf16.mxu0 0
    %618 = vmatpush1.bf16.msra.mxu0 0
    %619 = vmatprep.subr.bf16.mxu0 0
    %620 = vmatpush1.bf16.msra.mxu0 0
    %621 = vmatprep.subr.bf16.mxu0 0
    %622 = vmatpush1.bf16.msra.mxu0 0
    %623 = vmatprep.subr.bf16.mxu0 0
    %624 = vmatpush1.bf16.msra.mxu0 0
    %625 = vmatprep.subr.bf16.mxu0 0
    %626 = vmatpush1.bf16.msra.mxu0 0
    %627 = vmatprep.subr.bf16.mxu0 0
    %628 = vmatpush1.bf16.msra.mxu0 0
    %629 = vmatprep.subr.bf16.mxu0 0
    %630 = vmatpush1.bf16.msra.mxu0 0
    %631 = vmatprep.mubr.bf16.mxu0 0
    %632 = vmatmul.mubr.bf16.gmra.mrb[0].mxu0 %v598
    %v633 = vpop.f32.mrb[0].mxu0
    %v634 = vadd.f32 %v380, %v633
    %v635 = vpop.f32.mrb[0].mxu0
    %v636 = vpop.f32.mrb[0].mxu0
    %v637 = vpop.f32.mrb[0].mxu0
    %638 = vdwg.mxu0
    %639 = vset.pattern.permute.xlu0 1
    %640 = vperm.xlu0 %639, %v100
    %v641 = vpop.permute.xlu0 %640
    %v643 = vmul.f32 %v641, %v548
    %v644 = vadd.f32 %v474, %v643
    %v645 = vmul.f32 %v641, %v591
    %v646 = vadd.f32 %v476, %v645
    %v647 = vmul.f32 %v641, %v634
    %v648 = vadd.f32 %v478, %v647
    %v649 = vmul.f32 %v548, %v482
    %v650 = vsel %vm484, %v649, 0.0
    %651 = vadd.xlane.f32.xlu0 %v650
    %v652 = vpop.xlane.xlu0 %651
    %v653 = vadd.f32 %v652, %v488
    %v654 = vmul.f32 %v591, %v493
    %v655 = vsel %vm484, %v654, 0.0
    %656 = vadd.xlane.f32.xlu0 %v655
    %v657 = vpop.xlane.xlu0 %656
    %v658 = vadd.f32 %v657, %v498
    %v659 = vmul.f32 %v634, %v503
    %v660 = vsel %vm484, %v659, 0.0
    %661 = vadd.xlane.f32.xlu0 %v660
    %v662 = vpop.xlane.xlu0 %661
    %v663 = vadd.f32 %v662, %v508
    %v664 = vsub.f32 %v548, %v553
    %v665 = vsub.f32 %v664, %v596
    %v666 = vpack.c.bf16 %v665, %v665
    %667 = vmatprep.subr.bf16.mxu0 0
    %668 = vmatpush1.bf16.msra.mxu0 %v223
    %669 = vmatprep.subr.bf16.mxu0 0
    %670 = vmatpush1.bf16.msra.mxu0 %v224
    %671 = vmatprep.subr.bf16.mxu0 0
    %672 = vmatpush1.bf16.msra.mxu0 %v225
    %673 = vmatprep.subr.bf16.mxu0 0
    %674 = vmatpush1.bf16.msra.mxu0 %v226
    %675 = vmatprep.subr.bf16.mxu0 0
    %676 = vmatpush1.bf16.msra.mxu0 %v227
    %677 = vmatprep.subr.bf16.mxu0 0
    %678 = vmatpush1.bf16.msra.mxu0 %v228
    %679 = vmatprep.subr.bf16.mxu0 0
    %680 = vmatpush1.bf16.msra.mxu0 %v229
    %681 = vmatprep.subr.bf16.mxu0 0
    %682 = vmatpush1.bf16.msra.mxu0 %v230
    %683 = vmatprep.subr.bf16.mxu0 0
    %684 = vmatpush1.bf16.msra.mxu0 0
    %685 = vmatprep.subr.bf16.mxu0 0
    %686 = vmatpush1.bf16.msra.mxu0 0
    %687 = vmatprep.subr.bf16.mxu0 0
    %688 = vmatpush1.bf16.msra.mxu0 0
    %689 = vmatprep.subr.bf16.mxu0 0
    %690 = vmatpush1.bf16.msra.mxu0 0
    %691 = vmatprep.subr.bf16.mxu0 0
    %692 = vmatpush1.bf16.msra.mxu0 0
    %693 = vmatprep.subr.bf16.mxu0 0
    %694 = vmatpush1.bf16.msra.mxu0 0
    %695 = vmatprep.subr.bf16.mxu0 0
    %696 = vmatpush1.bf16.msra.mxu0 0
    %697 = vmatprep.subr.bf16.mxu0 0
    %698 = vmatpush1.bf16.msra.mxu0 0
    %699 = vmatprep.mubr.bf16.mxu0 0
    %700 = vmatmul.mubr.bf16.gmra.mrb[0].mxu0 %v666
    %v701 = vpop.f32.mrb[0].mxu0
    %v702 = vadd.f32 %v190, %v701
    %v703 = vpop.f32.mrb[0].mxu0
    %v704 = vpop.f32.mrb[0].mxu0
    %v705 = vpop.f32.mrb[0].mxu0
    %706 = vdwg.mxu0
    %v707 = vmul.f32 %v180, %v702
    %v708 = vadd.f32 %v591, %v707
    %v709 = vpack.c.bf16 %v708, %v708
    %710 = vmatprep.subr.bf16.mxu0 0
    %711 = vmatpush1.bf16.msra.mxu0 %v318
    %712 = vmatprep.subr.bf16.mxu0 0
    %713 = vmatpush1.bf16.msra.mxu0 %v319
    %714 = vmatprep.subr.bf16.mxu0 0
    %715 = vmatpush1.bf16.msra.mxu0 %v320
    %716 = vmatprep.subr.bf16.mxu0 0
    %717 = vmatpush1.bf16.msra.mxu0 %v321
    %718 = vmatprep.subr.bf16.mxu0 0
    %719 = vmatpush1.bf16.msra.mxu0 %v322
    %720 = vmatprep.subr.bf16.mxu0 0
    %721 = vmatpush1.bf16.msra.mxu0 %v323
    %722 = vmatprep.subr.bf16.mxu0 0
    %723 = vmatpush1.bf16.msra.mxu0 %v324
    %724 = vmatprep.subr.bf16.mxu0 0
    %725 = vmatpush1.bf16.msra.mxu0 %v325
    %726 = vmatprep.subr.bf16.mxu0 0
    %727 = vmatpush1.bf16.msra.mxu0 0
    %728 = vmatprep.subr.bf16.mxu0 0
    %729 = vmatpush1.bf16.msra.mxu0 0
    %730 = vmatprep.subr.bf16.mxu0 0
    %731 = vmatpush1.bf16.msra.mxu0 0
    %732 = vmatprep.subr.bf16.mxu0 0
    %733 = vmatpush1.bf16.msra.mxu0 0
    %734 = vmatprep.subr.bf16.mxu0 0
    %735 = vmatpush1.bf16.msra.mxu0 0
    %736 = vmatprep.subr.bf16.mxu0 0
    %737 = vmatpush1.bf16.msra.mxu0 0
    %738 = vmatprep.subr.bf16.mxu0 0
    %739 = vmatpush1.bf16.msra.mxu0 0
    %740 = vmatprep.subr.bf16.mxu0 0
    %741 = vmatpush1.bf16.msra.mxu0 0
    %742 = vmatprep.mubr.bf16.mxu0 0
    %743 = vmatmul.mubr.bf16.gmra.mrb[0].mxu0 %v709
    %v744 = vpop.f32.mrb[0].mxu0
    %v745 = vadd.f32 %v285, %v744
    %v746 = vpop.f32.mrb[0].mxu0
    %v747 = vpop.f32.mrb[0].mxu0
    %v748 = vpop.f32.mrb[0].mxu0
    %749 = vdwg.mxu0
    %v750 = vmul.f32 %v183, %v702
    %v751 = vadd.f32 %v634, %v750
    %v752 = vpack.c.bf16 %v751, %v751
    %753 = vmatprep.subr.bf16.mxu0 0
    %754 = vmatpush1.bf16.msra.mxu0 %v413
    %755 = vmatprep.subr.bf16.mxu0 0
    %756 = vmatpush1.bf16.msra.mxu0 %v414
    %757 = vmatprep.subr.bf16.mxu0 0
    %758 = vmatpush1.bf16.msra.mxu0 %v415
    %759 = vmatprep.subr.bf16.mxu0 0
    %760 = vmatpush1.bf16.msra.mxu0 %v416
    %761 = vmatprep.subr.bf16.mxu0 0
    %762 = vmatpush1.bf16.msra.mxu0 %v417
    %763 = vmatprep.subr.bf16.mxu0 0
    %764 = vmatpush1.bf16.msra.mxu0 %v418
    %765 = vmatprep.subr.bf16.mxu0 0
    %766 = vmatpush1.bf16.msra.mxu0 %v419
    %767 = vmatprep.subr.bf16.mxu0 0
    %768 = vmatpush1.bf16.msra.mxu0 %v420
    %769 = vmatprep.subr.bf16.mxu0 0
    %770 = vmatpush1.bf16.msra.mxu0 0
    %771 = vmatprep.subr.bf16.mxu0 0
    %772 = vmatpush1.bf16.msra.mxu0 0
    %773 = vmatprep.subr.bf16.mxu0 0
    %774 = vmatpush1.bf16.msra.mxu0 0
    %775 = vmatprep.subr.bf16.mxu0 0
    %776 = vmatpush1.bf16.msra.mxu0 0
    %777 = vmatprep.subr.bf16.mxu0 0
    %778 = vmatpush1.bf16.msra.mxu0 0
    %779 = vmatprep.subr.bf16.mxu0 0
    %780 = vmatpush1.bf16.msra.mxu0 0
    %781 = vmatprep.subr.bf16.mxu0 0
    %782 = vmatpush1.bf16.msra.mxu0 0
    %783 = vmatprep.subr.bf16.mxu0 0
    %784 = vmatpush1.bf16.msra.mxu0 0
    %785 = vmatprep.mubr.bf16.mxu0 0
    %786 = vmatmul.mubr.bf16.gmra.mrb[0].mxu0 %v752
    %v787 = vpop.f32.mrb[0].mxu0
    %v788 = vadd.f32 %v380, %v787
    %v789 = vpop.f32.mrb[0].mxu0
    %v790 = vpop.f32.mrb[0].mxu0
    %v791 = vpop.f32.mrb[0].mxu0
    %792 = vdwg.mxu0
    %793 = vset.pattern.permute.xlu0 2
    %794 = vperm.xlu0 %793, %v100
    %v795 = vpop.permute.xlu0 %794
    %v797 = vmul.f32 %v795, %v702
    %v798 = vadd.f32 %v644, %v797
    %v799 = vmul.f32 %v795, %v745
    %v800 = vadd.f32 %v646, %v799
    %v801 = vmul.f32 %v795, %v788
    %v802 = vadd.f32 %v648, %v801
    %v803 = vmul.f32 %v702, %v482
    %v804 = vsel %vm484, %v803, 0.0
    %805 = vadd.xlane.f32.xlu0 %v804
    %v806 = vpop.xlane.xlu0 %805
    %v807 = vadd.f32 %v806, %v488
    %v808 = vmul.f32 %v745, %v493
    %v809 = vsel %vm484, %v808, 0.0
    %810 = vadd.xlane.f32.xlu0 %v809
    %v811 = vpop.xlane.xlu0 %810
    %v812 = vadd.f32 %v811, %v498
    %v813 = vmul.f32 %v788, %v503
    %v814 = vsel %vm484, %v813, 0.0
    %815 = vadd.xlane.f32.xlu0 %v814
    %v816 = vpop.xlane.xlu0 %815
    %v817 = vadd.f32 %v816, %v508
    %v818 = vsub.f32 %v702, %v707
    %v819 = vsub.f32 %v818, %v750
    %v820 = vpack.c.bf16 %v819, %v819
    %821 = vmatprep.subr.bf16.mxu0 0
    %822 = vmatpush1.bf16.msra.mxu0 %v223
    %823 = vmatprep.subr.bf16.mxu0 0
    %824 = vmatpush1.bf16.msra.mxu0 %v224
    %825 = vmatprep.subr.bf16.mxu0 0
    %826 = vmatpush1.bf16.msra.mxu0 %v225
    %827 = vmatprep.subr.bf16.mxu0 0
    %828 = vmatpush1.bf16.msra.mxu0 %v226
    %829 = vmatprep.subr.bf16.mxu0 0
    %830 = vmatpush1.bf16.msra.mxu0 %v227
    %831 = vmatprep.subr.bf16.mxu0 0
    %832 = vmatpush1.bf16.msra.mxu0 %v228
    %833 = vmatprep.subr.bf16.mxu0 0
    %834 = vmatpush1.bf16.msra.mxu0 %v229
    %835 = vmatprep.subr.bf16.mxu0 0
    %836 = vmatpush1.bf16.msra.mxu0 %v230
    %837 = vmatprep.subr.bf16.mxu0 0
    %838 = vmatpush1.bf16.msra.mxu0 0
    %839 = vmatprep.subr.bf16.mxu0 0
    %840 = vmatpush1.bf16.msra.mxu0 0
    %841 = vmatprep.subr.bf16.mxu0 0
    %842 = vmatpush1.bf16.msra.mxu0 0
    %843 = vmatprep.subr.bf16.mxu0 0
    %844 = vmatpush1.bf16.msra.mxu0 0
    %845 = vmatprep.subr.bf16.mxu0 0
    %846 = vmatpush1.bf16.msra.mxu0 0
    %847 = vmatprep.subr.bf16.mxu0 0
    %848 = vmatpush1.bf16.msra.mxu0 0
    %849 = vmatprep.subr.bf16.mxu0 0
    %850 = vmatpush1.bf16.msra.mxu0 0
    %851 = vmatprep.subr.bf16.mxu0 0
    %852 = vmatpush1.bf16.msra.mxu0 0
    %853 = vmatprep.mubr.bf16.mxu0 0
    %854 = vmatmul.mubr.bf16.gmra.mrb[0].mxu0 %v820
    %v855 = vpop.f32.mrb[0].mxu0
    %v856 = vadd.f32 %v190, %v855
    %v857 = vpop.f32.mrb[0].mxu0
    %v858 = vpop.f32.mrb[0].mxu0
    %v859 = vpop.f32.mrb[0].mxu0
    %860 = vdwg.mxu0
    %v861 = vmul.f32 %v180, %v856
    %v862 = vadd.f32 %v745, %v861
    %v863 = vpack.c.bf16 %v862, %v862
    %864 = vmatprep.subr.bf16.mxu0 0
    %865 = vmatpush1.bf16.msra.mxu0 %v318
    %866 = vmatprep.subr.bf16.mxu0 0
    %867 = vmatpush1.bf16.msra.mxu0 %v319
    %868 = vmatprep.subr.bf16.mxu0 0
    %869 = vmatpush1.bf16.msra.mxu0 %v320
    %870 = vmatprep.subr.bf16.mxu0 0
    %871 = vmatpush1.bf16.msra.mxu0 %v321
    %872 = vmatprep.subr.bf16.mxu0 0
    %873 = vmatpush1.bf16.msra.mxu0 %v322
    %874 = vmatprep.subr.bf16.mxu0 0
    %875 = vmatpush1.bf16.msra.mxu0 %v323
    %876 = vmatprep.subr.bf16.mxu0 0
    %877 = vmatpush1.bf16.msra.mxu0 %v324
    %878 = vmatprep.subr.bf16.mxu0 0
    %879 = vmatpush1.bf16.msra.mxu0 %v325
    %880 = vmatprep.subr.bf16.mxu0 0
    %881 = vmatpush1.bf16.msra.mxu0 0
    %882 = vmatprep.subr.bf16.mxu0 0
    %883 = vmatpush1.bf16.msra.mxu0 0
    %884 = vmatprep.subr.bf16.mxu0 0
    %885 = vmatpush1.bf16.msra.mxu0 0
    %886 = vmatprep.subr.bf16.mxu0 0
    %887 = vmatpush1.bf16.msra.mxu0 0
    %888 = vmatprep.subr.bf16.mxu0 0
    %889 = vmatpush1.bf16.msra.mxu0 0
    %890 = vmatprep.subr.bf16.mxu0 0
    %891 = vmatpush1.bf16.msra.mxu0 0
    %892 = vmatprep.subr.bf16.mxu0 0
    %893 = vmatpush1.bf16.msra.mxu0 0
    %894 = vmatprep.subr.bf16.mxu0 0
    %895 = vmatpush1.bf16.msra.mxu0 0
    %896 = vmatprep.mubr.bf16.mxu0 0
    %897 = vmatmul.mubr.bf16.gmra.mrb[0].mxu0 %v863
    %v898 = vpop.f32.mrb[0].mxu0
    %v899 = vadd.f32 %v285, %v898
    %v900 = vpop.f32.mrb[0].mxu0
    %v901 = vpop.f32.mrb[0].mxu0
    %v902 = vpop.f32.mrb[0].mxu0
    %903 = vdwg.mxu0
    %v904 = vmul.f32 %v183, %v856
    %v905 = vadd.f32 %v788, %v904
    %v906 = vpack.c.bf16 %v905, %v905
    %907 = vmatprep.subr.bf16.mxu0 0
    %908 = vmatpush1.bf16.msra.mxu0 %v413
    %909 = vmatprep.subr.bf16.mxu0 0
    %910 = vmatpush1.bf16.msra.mxu0 %v414
    %911 = vmatprep.subr.bf16.mxu0 0
    %912 = vmatpush1.bf16.msra.mxu0 %v415
    %913 = vmatprep.subr.bf16.mxu0 0
    %914 = vmatpush1.bf16.msra.mxu0 %v416
    %915 = vmatprep.subr.bf16.mxu0 0
    %916 = vmatpush1.bf16.msra.mxu0 %v417
    %917 = vmatprep.subr.bf16.mxu0 0
    %918 = vmatpush1.bf16.msra.mxu0 %v418
    %919 = vmatprep.subr.bf16.mxu0 0
    %920 = vmatpush1.bf16.msra.mxu0 %v419
    %921 = vmatprep.subr.bf16.mxu0 0
    %922 = vmatpush1.bf16.msra.mxu0 %v420
    %923 = vmatprep.subr.bf16.mxu0 0
    %924 = vmatpush1.bf16.msra.mxu0 0
    %925 = vmatprep.subr.bf16.mxu0 0
    %926 = vmatpush1.bf16.msra.mxu0 0
    %927 = vmatprep.subr.bf16.mxu0 0
    %928 = vmatpush1.bf16.msra.mxu0 0
    %929 = vmatprep.subr.bf16.mxu0 0
    %930 = vmatpush1.bf16.msra.mxu0 0
    %931 = vmatprep.subr.bf16.mxu0 0
    %932 = vmatpush1.bf16.msra.mxu0 0
    %933 = vmatprep.subr.bf16.mxu0 0
    %934 = vmatpush1.bf16.msra.mxu0 0
    %935 = vmatprep.subr.bf16.mxu0 0
    %936 = vmatpush1.bf16.msra.mxu0 0
    %937 = vmatprep.subr.bf16.mxu0 0
    %938 = vmatpush1.bf16.msra.mxu0 0
    %939 = vmatprep.mubr.bf16.mxu0 0
    %940 = vmatmul.mubr.bf16.gmra.mrb[0].mxu0 %v906
    %v941 = vpop.f32.mrb[0].mxu0
    %v942 = vadd.f32 %v380, %v941
    %v943 = vpop.f32.mrb[0].mxu0
    %v944 = vpop.f32.mrb[0].mxu0
    %v945 = vpop.f32.mrb[0].mxu0
    %946 = vdwg.mxu0
    %947 = vset.pattern.permute.xlu0 3
    %948 = vperm.xlu0 %947, %v100
    %v949 = vpop.permute.xlu0 %948
    %v951 = vmul.f32 %v949, %v856
    %v952 = vadd.f32 %v798, %v951
    %v953 = vmul.f32 %v949, %v899
    %v954 = vadd.f32 %v800, %v953
    %v955 = vmul.f32 %v949, %v942
    %v956 = vadd.f32 %v802, %v955
    %v957 = vmul.f32 %v856, %v482
    %v958 = vsel %vm484, %v957, 0.0
    %959 = vadd.xlane.f32.xlu0 %v958
    %v960 = vpop.xlane.xlu0 %959
    %v961 = vadd.f32 %v960, %v488
    %v962 = vmul.f32 %v899, %v493
    %v963 = vsel %vm484, %v962, 0.0
    %964 = vadd.xlane.f32.xlu0 %v963
    %v965 = vpop.xlane.xlu0 %964
    %v966 = vadd.f32 %v965, %v498
    %v967 = vmul.f32 %v942, %v503
    %v968 = vsel %vm484, %v967, 0.0
    %969 = vadd.xlane.f32.xlu0 %v968
    %v970 = vpop.xlane.xlu0 %969
    %v971 = vadd.f32 %v970, %v508
    %v972 = vpack.c.bf16 %v952, %v952
    %s973 = scalar_lea.vmem [#allocation9], 448
    %v974 = vld [vmem:[%s973] sm:$0xf]
    %v975 = vld [vmem:[%s973 + $0x4] sm:$0xf]
    %v976 = vld [vmem:[%s973 + $0x8] sm:$0xf]
    %v977 = vld [vmem:[%s973 + $0xc] sm:$0xf]
    %v978 = vld [vmem:[%s973 + $0x10] sm:$0xf]
    %v979 = vld [vmem:[%s973 + $0x14] sm:$0xf]
    %v980 = vld [vmem:[%s973 + $0x18] sm:$0xf]
    %v981 = vld [vmem:[%s973 + $0x1c] sm:$0xf]
    %v982 = vld [vmem:[%s973 + $0x20] sm:$0xf]
    %v983 = vld [vmem:[%s973 + $0x24] sm:$0xf]
    %v984 = vld [vmem:[%s973 + $0x28] sm:$0xf]
    %v985 = vld [vmem:[%s973 + $0x2c] sm:$0xf]
    %v986 = vld [vmem:[%s973 + $0x30] sm:$0xf]
    %v987 = vld [vmem:[%s973 + $0x34] sm:$0xf]
    %v988 = vld [vmem:[%s973 + $0x38] sm:$0xf]
    %v989 = vld [vmem:[%s973 + $0x3c] sm:$0xf]
    %v990 = vpack.c.bf16 %v954, %v954
    %s991 = scalar_lea.vmem [#allocation9], 512
    %v992 = vld [vmem:[%s991] sm:$0xf]
    %v993 = vld [vmem:[%s991 + $0x4] sm:$0xf]
    %v994 = vld [vmem:[%s991 + $0x8] sm:$0xf]
    %v995 = vld [vmem:[%s991 + $0xc] sm:$0xf]
    %v996 = vld [vmem:[%s991 + $0x10] sm:$0xf]
    %v997 = vld [vmem:[%s991 + $0x14] sm:$0xf]
    %v998 = vld [vmem:[%s991 + $0x18] sm:$0xf]
    %v999 = vld [vmem:[%s991 + $0x1c] sm:$0xf]
    %v1000 = vld [vmem:[%s991 + $0x20] sm:$0xf]
    %v1001 = vld [vmem:[%s991 + $0x24] sm:$0xf]
    %v1002 = vld [vmem:[%s991 + $0x28] sm:$0xf]
    %v1003 = vld [vmem:[%s991 + $0x2c] sm:$0xf]
    %v1004 = vld [vmem:[%s991 + $0x30] sm:$0xf]
    %v1005 = vld [vmem:[%s991 + $0x34] sm:$0xf]
    %v1006 = vld [vmem:[%s991 + $0x38] sm:$0xf]
    %v1007 = vld [vmem:[%s991 + $0x3c] sm:$0xf]
    %v1024 = vunpack.c.l.b16 %v992
    %v1025 = vunpack.c.l.b16 %v993
    %v1026 = vunpack.c.l.b16 %v994
    %v1027 = vunpack.c.l.b16 %v995
    %v1028 = vunpack.c.l.b16 %v996
    %v1029 = vunpack.c.l.b16 %v997
    %v1030 = vunpack.c.l.b16 %v998
    %v1031 = vunpack.c.l.b16 %v999
    %v1032 = vunpack.c.l.b16 %v1000
    %v1033 = vunpack.c.l.b16 %v1001
    %v1034 = vunpack.c.l.b16 %v1002
    %v1035 = vunpack.c.l.b16 %v1003
    %v1036 = vunpack.c.l.b16 %v1004
    %v1037 = vunpack.c.l.b16 %v1005
    %v1038 = vunpack.c.l.b16 %v1006
    %v1039 = vunpack.c.l.b16 %v1007
    %v1040 = vpack.c.b16 %v1025, %v1024
    %v1041 = vpack.c.b16 %v1027, %v1026
    %v1042 = vpack.c.b16 %v1029, %v1028
    %v1043 = vpack.c.b16 %v1031, %v1030
    %v1044 = vpack.c.b16 %v1033, %v1032
    %v1045 = vpack.c.b16 %v1035, %v1034
    %v1046 = vpack.c.b16 %v1037, %v1036
    %v1047 = vpack.c.b16 %v1039, %v1038
    %1056 = vmatprep.subr.bf16.mxu0 0
    %1057 = vmatpush1.bf16.msra.mxu0 %v1040
    %1058 = vmatprep.subr.bf16.mxu0 0
    %1059 = vmatpush1.bf16.msra.mxu0 %v1041
    %1060 = vmatprep.subr.bf16.mxu0 0
    %1061 = vmatpush1.bf16.msra.mxu0 %v1042
    %1062 = vmatprep.subr.bf16.mxu0 0
    %1063 = vmatpush1.bf16.msra.mxu0 %v1043
    %1064 = vmatprep.subr.bf16.mxu0 0
    %1065 = vmatpush1.bf16.msra.mxu0 %v1044
    %1066 = vmatprep.subr.bf16.mxu0 0
    %1067 = vmatpush1.bf16.msra.mxu0 %v1045
    %1068 = vmatprep.subr.bf16.mxu0 0
    %1069 = vmatpush1.bf16.msra.mxu0 %v1046
    %1070 = vmatprep.subr.bf16.mxu0 0
    %1071 = vmatpush1.bf16.msra.mxu0 %v1047
    %1072 = vmatprep.subr.bf16.mxu0 0
    %1073 = vmatpush1.bf16.msra.mxu0 0
    %1074 = vmatprep.subr.bf16.mxu0 0
    %1075 = vmatpush1.bf16.msra.mxu0 0
    %1076 = vmatprep.subr.bf16.mxu0 0
    %1077 = vmatpush1.bf16.msra.mxu0 0
    %1078 = vmatprep.subr.bf16.mxu0 0
    %1079 = vmatpush1.bf16.msra.mxu0 0
    %1080 = vmatprep.subr.bf16.mxu0 0
    %1081 = vmatpush1.bf16.msra.mxu0 0
    %1082 = vmatprep.subr.bf16.mxu0 0
    %1083 = vmatpush1.bf16.msra.mxu0 0
    %1084 = vmatprep.subr.bf16.mxu0 0
    %1085 = vmatpush1.bf16.msra.mxu0 0
    %1086 = vmatprep.subr.bf16.mxu0 0
    %1087 = vmatpush1.bf16.msra.mxu0 0
    %1088 = vmatprep.mubr.bf16.mxu0 0
    %1089 = vmatmul.mubr.bf16.gmra.mrb[0].mxu0 %v990
    %v1090 = vpop.f32.mrb[0].mxu0
    %v1091 = vadd.f32 0.0, %v1090
    %v1092 = vpop.f32.mrb[0].mxu0
    %v1093 = vpop.f32.mrb[0].mxu0
    %v1094 = vpop.f32.mrb[0].mxu0
    %1095 = vdwg.mxu0
    %v1112 = vunpack.c.l.b16 %v974
    %v1113 = vunpack.c.l.b16 %v975
    %v1114 = vunpack.c.l.b16 %v976
    %v1115 = vunpack.c.l.b16 %v977
    %v1116 = vunpack.c.l.b16 %v978
    %v1117 = vunpack.c.l.b16 %v979
    %v1118 = vunpack.c.l.b16 %v980
    %v1119 = vunpack.c.l.b16 %v981
    %v1120 = vunpack.c.l.b16 %v982
    %v1121 = vunpack.c.l.b16 %v983
    %v1122 = vunpack.c.l.b16 %v984
    %v1123 = vunpack.c.l.b16 %v985
    %v1124 = vunpack.c.l.b16 %v986
    %v1125 = vunpack.c.l.b16 %v987
    %v1126 = vunpack.c.l.b16 %v988
    %v1127 = vunpack.c.l.b16 %v989
    %v1128 = vpack.c.b16 %v1113, %v1112
    %v1129 = vpack.c.b16 %v1115, %v1114
    %v1130 = vpack.c.b16 %v1117, %v1116
    %v1131 = vpack.c.b16 %v1119, %v1118
    %v1132 = vpack.c.b16 %v1121, %v1120
    %v1133 = vpack.c.b16 %v1123, %v1122
    %v1134 = vpack.c.b16 %v1125, %v1124
    %v1135 = vpack.c.b16 %v1127, %v1126
    %1144 = vmatprep.subr.bf16.mxu0 0
    %1145 = vmatpush1.bf16.msra.mxu0 %v1128
    %1146 = vmatprep.subr.bf16.mxu0 0
    %1147 = vmatpush1.bf16.msra.mxu0 %v1129
    %1148 = vmatprep.subr.bf16.mxu0 0
    %1149 = vmatpush1.bf16.msra.mxu0 %v1130
    %1150 = vmatprep.subr.bf16.mxu0 0
    %1151 = vmatpush1.bf16.msra.mxu0 %v1131
    %1152 = vmatprep.subr.bf16.mxu0 0
    %1153 = vmatpush1.bf16.msra.mxu0 %v1132
    %1154 = vmatprep.subr.bf16.mxu0 0
    %1155 = vmatpush1.bf16.msra.mxu0 %v1133
    %1156 = vmatprep.subr.bf16.mxu0 0
    %1157 = vmatpush1.bf16.msra.mxu0 %v1134
    %1158 = vmatprep.subr.bf16.mxu0 0
    %1159 = vmatpush1.bf16.msra.mxu0 %v1135
    %1160 = vmatprep.subr.bf16.mxu0 0
    %1161 = vmatpush1.bf16.msra.mxu0 0
    %1162 = vmatprep.subr.bf16.mxu0 0
    %1163 = vmatpush1.bf16.msra.mxu0 0
    %1164 = vmatprep.subr.bf16.mxu0 0
    %1165 = vmatpush1.bf16.msra.mxu0 0
    %1166 = vmatprep.subr.bf16.mxu0 0
    %1167 = vmatpush1.bf16.msra.mxu0 0
    %1168 = vmatprep.subr.bf16.mxu0 0
    %1169 = vmatpush1.bf16.msra.mxu0 0
    %1170 = vmatprep.subr.bf16.mxu0 0
    %1171 = vmatpush1.bf16.msra.mxu0 0
    %1172 = vmatprep.subr.bf16.mxu0 0
    %1173 = vmatpush1.bf16.msra.mxu0 0
    %1174 = vmatprep.subr.bf16.mxu0 0
    %1175 = vmatpush1.bf16.msra.mxu0 0
    %1176 = vmatprep.mubr.bf16.mxu0 0
    %1177 = vmatmul.mubr.bf16.gmra.mrb[0].mxu0 %v972
    %v1178 = vpop.f32.mrb[0].mxu0
    %v1179 = vadd.f32 %v1091, %v1178
    %v1180 = vpop.f32.mrb[0].mxu0
    %v1181 = vpop.f32.mrb[0].mxu0
    %v1182 = vpop.f32.mrb[0].mxu0
    %1183 = vdwg.mxu0
    %v1184 = vpack.c.bf16 %v956, %v956
    %s1185 = scalar_lea.vmem [#allocation9], 576
    %v1186 = vld [vmem:[%s1185] sm:$0xf]
    %v1187 = vld [vmem:[%s1185 + $0x4] sm:$0xf]
    %v1188 = vld [vmem:[%s1185 + $0x8] sm:$0xf]
    %v1189 = vld [vmem:[%s1185 + $0xc] sm:$0xf]
    %v1190 = vld [vmem:[%s1185 + $0x10] sm:$0xf]
    %v1191 = vld [vmem:[%s1185 + $0x14] sm:$0xf]
    %v1192 = vld [vmem:[%s1185 + $0x18] sm:$0xf]
    %v1193 = vld [vmem:[%s1185 + $0x1c] sm:$0xf]
    %v1194 = vld [vmem:[%s1185 + $0x20] sm:$0xf]
    %v1195 = vld [vmem:[%s1185 + $0x24] sm:$0xf]
    %v1196 = vld [vmem:[%s1185 + $0x28] sm:$0xf]
    %v1197 = vld [vmem:[%s1185 + $0x2c] sm:$0xf]
    %v1198 = vld [vmem:[%s1185 + $0x30] sm:$0xf]
    %v1199 = vld [vmem:[%s1185 + $0x34] sm:$0xf]
    %v1200 = vld [vmem:[%s1185 + $0x38] sm:$0xf]
    %v1201 = vld [vmem:[%s1185 + $0x3c] sm:$0xf]
    %v1218 = vunpack.c.l.b16 %v1186
    %v1219 = vunpack.c.l.b16 %v1187
    %v1220 = vunpack.c.l.b16 %v1188
    %v1221 = vunpack.c.l.b16 %v1189
    %v1222 = vunpack.c.l.b16 %v1190
    %v1223 = vunpack.c.l.b16 %v1191
    %v1224 = vunpack.c.l.b16 %v1192
    %v1225 = vunpack.c.l.b16 %v1193
    %v1226 = vunpack.c.l.b16 %v1194
    %v1227 = vunpack.c.l.b16 %v1195
    %v1228 = vunpack.c.l.b16 %v1196
    %v1229 = vunpack.c.l.b16 %v1197
    %v1230 = vunpack.c.l.b16 %v1198
    %v1231 = vunpack.c.l.b16 %v1199
    %v1232 = vunpack.c.l.b16 %v1200
    %v1233 = vunpack.c.l.b16 %v1201
    %v1234 = vpack.c.b16 %v1219, %v1218
    %v1235 = vpack.c.b16 %v1221, %v1220
    %v1236 = vpack.c.b16 %v1223, %v1222
    %v1237 = vpack.c.b16 %v1225, %v1224
    %v1238 = vpack.c.b16 %v1227, %v1226
    %v1239 = vpack.c.b16 %v1229, %v1228
    %v1240 = vpack.c.b16 %v1231, %v1230
    %v1241 = vpack.c.b16 %v1233, %v1232
    %1250 = vmatprep.subr.bf16.mxu0 0
    %1251 = vmatpush1.bf16.msra.mxu0 %v1234
    %1252 = vmatprep.subr.bf16.mxu0 0
    %1253 = vmatpush1.bf16.msra.mxu0 %v1235
    %1254 = vmatprep.subr.bf16.mxu0 0
    %1255 = vmatpush1.bf16.msra.mxu0 %v1236
    %1256 = vmatprep.subr.bf16.mxu0 0
    %1257 = vmatpush1.bf16.msra.mxu0 %v1237
    %1258 = vmatprep.subr.bf16.mxu0 0
    %1259 = vmatpush1.bf16.msra.mxu0 %v1238
    %1260 = vmatprep.subr.bf16.mxu0 0
    %1261 = vmatpush1.bf16.msra.mxu0 %v1239
    %1262 = vmatprep.subr.bf16.mxu0 0
    %1263 = vmatpush1.bf16.msra.mxu0 %v1240
    %1264 = vmatprep.subr.bf16.mxu0 0
    %1265 = vmatpush1.bf16.msra.mxu0 %v1241
    %1266 = vmatprep.subr.bf16.mxu0 0
    %1267 = vmatpush1.bf16.msra.mxu0 0
    %1268 = vmatprep.subr.bf16.mxu0 0
    %1269 = vmatpush1.bf16.msra.mxu0 0
    %1270 = vmatprep.subr.bf16.mxu0 0
    %1271 = vmatpush1.bf16.msra.mxu0 0
    %1272 = vmatprep.subr.bf16.mxu0 0
    %1273 = vmatpush1.bf16.msra.mxu0 0
    %1274 = vmatprep.subr.bf16.mxu0 0
    %1275 = vmatpush1.bf16.msra.mxu0 0
    %1276 = vmatprep.subr.bf16.mxu0 0
    %1277 = vmatpush1.bf16.msra.mxu0 0
    %1278 = vmatprep.subr.bf16.mxu0 0
    %1279 = vmatpush1.bf16.msra.mxu0 0
    %1280 = vmatprep.subr.bf16.mxu0 0
    %1281 = vmatpush1.bf16.msra.mxu0 0
    %1282 = vmatprep.mubr.bf16.mxu0 0
    %1283 = vmatmul.mubr.bf16.gmra.mrb[0].mxu0 %v1184
    %v1284 = vpop.f32.mrb[0].mxu0
    %v1285 = vadd.f32 0.0, %v1284
    %v1286 = vpop.f32.mrb[0].mxu0
    %v1287 = vpop.f32.mrb[0].mxu0
    %v1288 = vpop.f32.mrb[0].mxu0
    %1289 = vdwg.mxu0
    %v1290 = vadd.f32 %v1179, %v1285
    %v1291 = vlaneseq
    %v1292 = vshrl.u32 %v1291, 7
    %v1293 = vsub.s32 0, %v1292
    %v1294 = vrot.slane %v99, %v1293
    %v1295 = vadd.f32 %v1290, %v1294
    %v1296 = vld [vmem:[#allocation6] sm:$0xf]
    %v1297 = vld [vmem:[#allocation6 + $0x4] sm:$0xf]
    %v1298 = vld [vmem:[#allocation2] sm:$0xff]
    %v1299 = vld [vmem:[#allocation2 + $0x8] sm:$0xff]
    %v1300 = vadd.f32 %v1298, %v1299
    %v1301 = vrot.slane %v1300, 4
    %v1302 = vadd.f32 %v1300, %v1301
    %v1303 = vrot.slane %v1302, 2
    %v1304 = vadd.f32 %v1302, %v1303
    %v1305 = vrot.slane %v1304, 1
    %v1306 = vadd.f32 %v1304, %v1305
    %v1307 = vmul.f32 %v1298, %v1298
    %v1308 = vmul.f32 %v1299, %v1299
    %v1309 = vadd.f32 %v1307, %v1308
    %v1310 = vrot.slane %v1309, 4
    %v1311 = vadd.f32 %v1309, %v1310
    %v1312 = vrot.slane %v1311, 2
    %v1313 = vadd.f32 %v1311, %v1312
    %v1314 = vrot.slane %v1313, 1
    %v1315 = vadd.f32 %v1313, %v1314
    %v1316 = vmul.f32 %v1306, 0.0625
    %v1317 = vmul.f32 %v1315, 0.0625
    %v1318 = vmul.f32 %v1316, %v1316
    %v1319 = vsub.f32 %v1317, %v1318
    %v1320 = vmax.f32 %v1319, 0.0
    %v1321 = vsub.f32 %v1298, %v1316
    %v1322 = vsub.f32 %v1299, %v1316
    %v1323 = vadd.f32 %v1320, 1e-05
    %v1324 = vrsqrt.pop %v1323
    %v1325 = vmul.f32 %v1321, %v1324
    %v1326 = vmul.f32 %v1322, %v1324
    %v1327 = vlaneseq
    %v1328 = vshrl.u32 %v1327, 7
    %v1329 = vsub.s32 0, %v1328
    %v1330 = vrot.slane %v96, %v1329
    %v1331 = vmul.f32 %v1325, %v1330
    %v1332 = vmul.f32 %v1326, %v1330
    %v1333 = vlaneseq
    %v1334 = vshrl.u32 %v1333, 7
    %v1335 = vsub.s32 1, %v1334
    %v1336 = vrot.slane %v96, %v1335
    %v1337 = vadd.f32 %v1331, %v1336
    %v1338 = vadd.f32 %v1332, %v1336
    %v1339 = vpack.c.bf16 %v1338, %v1337
    %v1340 = vld [vmem:[#allocation9] sm:$0xf]
    %v1341 = vld [vmem:[#allocation9 + $0x4] sm:$0xf]
    %v1342 = vld [vmem:[#allocation9 + $0x8] sm:$0xf]
    %v1343 = vld [vmem:[#allocation9 + $0xc] sm:$0xf]
    %v1344 = vld [vmem:[#allocation9 + $0x10] sm:$0xf]
    %v1345 = vld [vmem:[#allocation9 + $0x14] sm:$0xf]
    %v1346 = vld [vmem:[#allocation9 + $0x18] sm:$0xf]
    %v1347 = vld [vmem:[#allocation9 + $0x1c] sm:$0xf]
    %v1348 = vld [vmem:[#allocation9 + $0x20] sm:$0xf]
    %v1349 = vld [vmem:[#allocation9 + $0x24] sm:$0xf]
    %v1350 = vld [vmem:[#allocation9 + $0x28] sm:$0xf]
    %v1351 = vld [vmem:[#allocation9 + $0x2c] sm:$0xf]
    %v1352 = vld [vmem:[#allocation9 + $0x30] sm:$0xf]
    %v1353 = vld [vmem:[#allocation9 + $0x34] sm:$0xf]
    %v1354 = vld [vmem:[#allocation9 + $0x38] sm:$0xf]
    %v1355 = vld [vmem:[#allocation9 + $0x3c] sm:$0xf]
    %v1372 = vunpack.c.l.b16 %v1340
    %v1373 = vunpack.c.l.b16 %v1341
    %v1374 = vunpack.c.l.b16 %v1342
    %v1375 = vunpack.c.l.b16 %v1343
    %v1376 = vunpack.c.l.b16 %v1344
    %v1377 = vunpack.c.l.b16 %v1345
    %v1378 = vunpack.c.l.b16 %v1346
    %v1379 = vunpack.c.l.b16 %v1347
    %v1380 = vunpack.c.l.b16 %v1348
    %v1381 = vunpack.c.l.b16 %v1349
    %v1382 = vunpack.c.l.b16 %v1350
    %v1383 = vunpack.c.l.b16 %v1351
    %v1384 = vunpack.c.l.b16 %v1352
    %v1385 = vunpack.c.l.b16 %v1353
    %v1386 = vunpack.c.l.b16 %v1354
    %v1387 = vunpack.c.l.b16 %v1355
    %v1388 = vpack.c.b16 %v1373, %v1372
    %v1389 = vpack.c.b16 %v1375, %v1374
    %v1390 = vpack.c.b16 %v1377, %v1376
    %v1391 = vpack.c.b16 %v1379, %v1378
    %v1392 = vpack.c.b16 %v1381, %v1380
    %v1393 = vpack.c.b16 %v1383, %v1382
    %v1394 = vpack.c.b16 %v1385, %v1384
    %v1395 = vpack.c.b16 %v1387, %v1386
    %1404 = vmatprep.subr.bf16.mxu0 0
    %1405 = vmatpush1.bf16.msra.mxu0 %v1388
    %1406 = vmatprep.subr.bf16.mxu0 0
    %1407 = vmatpush1.bf16.msra.mxu0 %v1389
    %1408 = vmatprep.subr.bf16.mxu0 0
    %1409 = vmatpush1.bf16.msra.mxu0 %v1390
    %1410 = vmatprep.subr.bf16.mxu0 0
    %1411 = vmatpush1.bf16.msra.mxu0 %v1391
    %1412 = vmatprep.subr.bf16.mxu0 0
    %1413 = vmatpush1.bf16.msra.mxu0 %v1392
    %1414 = vmatprep.subr.bf16.mxu0 0
    %1415 = vmatpush1.bf16.msra.mxu0 %v1393
    %1416 = vmatprep.subr.bf16.mxu0 0
    %1417 = vmatpush1.bf16.msra.mxu0 %v1394
    %1418 = vmatprep.subr.bf16.mxu0 0
    %1419 = vmatpush1.bf16.msra.mxu0 %v1395
    %1420 = vmatprep.subr.bf16.mxu0 0
    %1421 = vmatpush1.bf16.msra.mxu0 0
    %1422 = vmatprep.subr.bf16.mxu0 0
    %1423 = vmatpush1.bf16.msra.mxu0 0
    %1424 = vmatprep.subr.bf16.mxu0 0
    %1425 = vmatpush1.bf16.msra.mxu0 0
    %1426 = vmatprep.subr.bf16.mxu0 0
    %1427 = vmatpush1.bf16.msra.mxu0 0
    %1428 = vmatprep.subr.bf16.mxu0 0
    %1429 = vmatpush1.bf16.msra.mxu0 0
    %1430 = vmatprep.subr.bf16.mxu0 0
    %1431 = vmatpush1.bf16.msra.mxu0 0
    %1432 = vmatprep.subr.bf16.mxu0 0
    %1433 = vmatpush1.bf16.msra.mxu0 0
    %1434 = vmatprep.subr.bf16.mxu0 0
    %1435 = vmatpush1.bf16.msra.mxu0 0
    %1436 = vmatprep.mubr.bf16.mxu0 0
    %1437 = vmatmul.mubr.bf16.gmra.mrb[0].mxu0 %v1339
    %v1438 = vpop.f32.mrb[0].mxu0
    %v1439 = vadd.f32 0.0, %v1438
    %v1440 = vpop.f32.mrb[0].mxu0
    %v1441 = vpop.f32.mrb[0].mxu0
    %v1442 = vadd.f32 0.0, %v1441
    %v1443 = vpop.f32.mrb[0].mxu0
    %1444 = vdwg.mxu0
    %v1445 = vmax.f32 %v1439, 0.0
    %v1446 = vmax.f32 %v1442, 0.0
    %v1447 = vadd.f32 %v1445, %v1446
    %v1448 = vrot.slane %v1447, 4
    %v1449 = vadd.f32 %v1447, %v1448
    %v1450 = vrot.slane %v1449, 2
    %v1451 = vadd.f32 %v1449, %v1450
    %v1452 = vrot.slane %v1451, 1
    %v1453 = vadd.f32 %v1451, %v1452
    %v1454 = vmul.f32 %v1445, %v1445
    %v1455 = vmul.f32 %v1446, %v1446
    %v1456 = vadd.f32 %v1454, %v1455
    %v1457 = vrot.slane %v1456, 4
    %v1458 = vadd.f32 %v1456, %v1457
    %v1459 = vrot.slane %v1458, 2
    %v1460 = vadd.f32 %v1458, %v1459
    %v1461 = vrot.slane %v1460, 1
    %v1462 = vadd.f32 %v1460, %v1461
    %v1463 = vmul.f32 %v1453, 0.0625
    %v1464 = vmul.f32 %v1462, 0.0625
    %v1465 = vmul.f32 %v1463, %v1463
    %v1466 = vsub.f32 %v1464, %v1465
    %v1467 = vmax.f32 %v1466, 0.0
    %v1468 = vsub.f32 %v1445, %v1463
    %v1469 = vsub.f32 %v1446, %v1463
    %v1470 = vadd.f32 %v1467, 1e-05
    %v1471 = vrsqrt.pop %v1470
    %v1472 = vmul.f32 %v1468, %v1471
    %v1473 = vmul.f32 %v1469, %v1471
    %v1474 = vlaneseq
    %v1475 = vshrl.u32 %v1474, 7
    %v1476 = vsub.s32 2, %v1475
    %v1477 = vrot.slane %v96, %v1476
    %v1478 = vmul.f32 %v1472, %v1477
    %v1479 = vmul.f32 %v1473, %v1477
    %v1480 = vlaneseq
    %v1481 = vshrl.u32 %v1480, 7
    %v1482 = vsub.s32 3, %v1481
    %v1483 = vrot.slane %v96, %v1482
    %v1484 = vadd.f32 %v1478, %v1483
    %v1485 = vadd.f32 %v1479, %v1483
    %v1486 = vpack.c.bf16 %v1485, %v1484
    %s1487 = scalar_lea.vmem [#allocation9], 64
    %v1488 = vld [vmem:[%s1487] sm:$0xf]
    %v1489 = vld [vmem:[%s1487 + $0x4] sm:$0xf]
    %v1490 = vld [vmem:[%s1487 + $0x8] sm:$0xf]
    %v1491 = vld [vmem:[%s1487 + $0xc] sm:$0xf]
    %v1492 = vld [vmem:[%s1487 + $0x10] sm:$0xf]
    %v1493 = vld [vmem:[%s1487 + $0x14] sm:$0xf]
    %v1494 = vld [vmem:[%s1487 + $0x18] sm:$0xf]
    %v1495 = vld [vmem:[%s1487 + $0x1c] sm:$0xf]
    %v1496 = vld [vmem:[%s1487 + $0x20] sm:$0xf]
    %v1497 = vld [vmem:[%s1487 + $0x24] sm:$0xf]
    %v1498 = vld [vmem:[%s1487 + $0x28] sm:$0xf]
    %v1499 = vld [vmem:[%s1487 + $0x2c] sm:$0xf]
    %v1500 = vld [vmem:[%s1487 + $0x30] sm:$0xf]
    %v1501 = vld [vmem:[%s1487 + $0x34] sm:$0xf]
    %v1502 = vld [vmem:[%s1487 + $0x38] sm:$0xf]
    %v1503 = vld [vmem:[%s1487 + $0x3c] sm:$0xf]
    %v1520 = vunpack.c.l.b16 %v1488
    %v1521 = vunpack.c.l.b16 %v1489
    %v1522 = vunpack.c.l.b16 %v1490
    %v1523 = vunpack.c.l.b16 %v1491
    %v1524 = vunpack.c.l.b16 %v1492
    %v1525 = vunpack.c.l.b16 %v1493
    %v1526 = vunpack.c.l.b16 %v1494
    %v1527 = vunpack.c.l.b16 %v1495
    %v1528 = vunpack.c.l.b16 %v1496
    %v1529 = vunpack.c.l.b16 %v1497
    %v1530 = vunpack.c.l.b16 %v1498
    %v1531 = vunpack.c.l.b16 %v1499
    %v1532 = vunpack.c.l.b16 %v1500
    %v1533 = vunpack.c.l.b16 %v1501
    %v1534 = vunpack.c.l.b16 %v1502
    %v1535 = vunpack.c.l.b16 %v1503
    %v1536 = vpack.c.b16 %v1521, %v1520
    %v1537 = vpack.c.b16 %v1523, %v1522
    %v1538 = vpack.c.b16 %v1525, %v1524
    %v1539 = vpack.c.b16 %v1527, %v1526
    %v1540 = vpack.c.b16 %v1529, %v1528
    %v1541 = vpack.c.b16 %v1531, %v1530
    %v1542 = vpack.c.b16 %v1533, %v1532
    %v1543 = vpack.c.b16 %v1535, %v1534
    %1552 = vmatprep.subr.bf16.mxu0 0
    %1553 = vmatpush1.bf16.msra.mxu0 %v1536
    %1554 = vmatprep.subr.bf16.mxu0 0
    %1555 = vmatpush1.bf16.msra.mxu0 %v1537
    %1556 = vmatprep.subr.bf16.mxu0 0
    %1557 = vmatpush1.bf16.msra.mxu0 %v1538
    %1558 = vmatprep.subr.bf16.mxu0 0
    %1559 = vmatpush1.bf16.msra.mxu0 %v1539
    %1560 = vmatprep.subr.bf16.mxu0 0
    %1561 = vmatpush1.bf16.msra.mxu0 %v1540
    %1562 = vmatprep.subr.bf16.mxu0 0
    %1563 = vmatpush1.bf16.msra.mxu0 %v1541
    %1564 = vmatprep.subr.bf16.mxu0 0
    %1565 = vmatpush1.bf16.msra.mxu0 %v1542
    %1566 = vmatprep.subr.bf16.mxu0 0
    %1567 = vmatpush1.bf16.msra.mxu0 %v1543
    %1568 = vmatprep.subr.bf16.mxu0 0
    %1569 = vmatpush1.bf16.msra.mxu0 0
    %1570 = vmatprep.subr.bf16.mxu0 0
    %1571 = vmatpush1.bf16.msra.mxu0 0
    %1572 = vmatprep.subr.bf16.mxu0 0
    %1573 = vmatpush1.bf16.msra.mxu0 0
    %1574 = vmatprep.subr.bf16.mxu0 0
    %1575 = vmatpush1.bf16.msra.mxu0 0
    %1576 = vmatprep.subr.bf16.mxu0 0
    %1577 = vmatpush1.bf16.msra.mxu0 0
    %1578 = vmatprep.subr.bf16.mxu0 0
    %1579 = vmatpush1.bf16.msra.mxu0 0
    %1580 = vmatprep.subr.bf16.mxu0 0
    %1581 = vmatpush1.bf16.msra.mxu0 0
    %1582 = vmatprep.subr.bf16.mxu0 0
    %1583 = vmatpush1.bf16.msra.mxu0 0
    %1584 = vmatprep.mubr.bf16.mxu0 0
    %1585 = vmatmul.mubr.bf16.gmra.mrb[0].mxu0 %v1486
    %v1586 = vpop.f32.mrb[0].mxu0
    %v1587 = vadd.f32 0.0, %v1586
    %v1588 = vpop.f32.mrb[0].mxu0
    %v1589 = vpop.f32.mrb[0].mxu0
    %v1590 = vadd.f32 0.0, %v1589
    %v1591 = vpop.f32.mrb[0].mxu0
    %1592 = vdwg.mxu0
    %v1593 = vpack.c.bf16 %v1590, %v1587
    %v1594 = vlaneseq
    %v1595 = vshrl.u32 %v1594, 7
    %v1596 = vsub.s32 4, %v1595
    %v1597 = vrot.slane %v96, %v1596
    %v1600 = vunpack.c.l.b16 %v1296
    %v1601 = vunpack.c.l.b16 %v1297
    %v1602 = vpack.c.b16 %v1601, %v1600
    %vm1603 = vcmask 130048
    %v1605 = vsel %vm1603, %v1602, 0
    %1607 = vmatprep.subr.bf16.mxu0 0
    %1608 = vmatpush1.bf16.msra.mxu0 %v1593
    %1609 = vmatprep.subr.bf16.mxu0 0
    %1610 = vmatpush1.bf16.msra.mxu0 0
    %1611 = vmatprep.subr.bf16.mxu0 0
    %1612 = vmatpush1.bf16.msra.mxu0 0
    %1613 = vmatprep.subr.bf16.mxu0 0
    %1614 = vmatpush1.bf16.msra.mxu0 0
    %1615 = vmatprep.subr.bf16.mxu0 0
    %1616 = vmatpush1.bf16.msra.mxu0 0
    %1617 = vmatprep.subr.bf16.mxu0 0
    %1618 = vmatpush1.bf16.msra.mxu0 0
    %1619 = vmatprep.subr.bf16.mxu0 0
    %1620 = vmatpush1.bf16.msra.mxu0 0
    %1621 = vmatprep.subr.bf16.mxu0 0
    %1622 = vmatpush1.bf16.msra.mxu0 0
    %1623 = vmatprep.subr.bf16.mxu0 0
    %1624 = vmatpush1.bf16.msra.mxu0 0
    %1625 = vmatprep.subr.bf16.mxu0 0
    %1626 = vmatpush1.bf16.msra.mxu0 0
    %1627 = vmatprep.subr.bf16.mxu0 0
    %1628 = vmatpush1.bf16.msra.mxu0 0
    %1629 = vmatprep.subr.bf16.mxu0 0
    %1630 = vmatpush1.bf16.msra.mxu0 0
    %1631 = vmatprep.subr.bf16.mxu0 0
    %1632 = vmatpush1.bf16.msra.mxu0 0
    %1633 = vmatprep.subr.bf16.mxu0 0
    %1634 = vmatpush1.bf16.msra.mxu0 0
    %1635 = vmatprep.subr.bf16.mxu0 0
    %1636 = vmatpush1.bf16.msra.mxu0 0
    %1637 = vmatprep.subr.bf16.mxu0 0
    %1638 = vmatpush1.bf16.msra.mxu0 0
    %1639 = vmatprep.mubr.bf16.mxu0 0
    %1640 = vmatmul.mubr.bf16.gmra.mrb[0].mxu0 %v1605
    %v1641 = vpop.f32.mrb[0].mxu0
    %v1642 = vadd.f32 %v1597, %v1641
    %v1643 = vpop.f32.mrb[0].mxu0
    %v1644 = vpop.f32.mrb[0].mxu0
    %v1645 = vadd.f32 %v1597, %v1644
    %v1646 = vpop.f32.mrb[0].mxu0
    %1647 = vdwg.mxu0
    %v1648 = vmax.f32 %v1642, 0.0
    %v1649 = vmax.f32 %v1645, 0.0
    %v1650 = vadd.f32 %v1648, %v1649
    %v1651 = vrot.slane %v1650, 4
    %v1652 = vadd.f32 %v1650, %v1651
    %v1653 = vrot.slane %v1652, 2
    %v1654 = vadd.f32 %v1652, %v1653
    %v1655 = vrot.slane %v1654, 1
    %v1656 = vadd.f32 %v1654, %v1655
    %v1657 = vmul.f32 %v1648, %v1648
    %v1658 = vmul.f32 %v1649, %v1649
    %v1659 = vadd.f32 %v1657, %v1658
    %v1660 = vrot.slane %v1659, 4
    %v1661 = vadd.f32 %v1659, %v1660
    %v1662 = vrot.slane %v1661, 2
    %v1663 = vadd.f32 %v1661, %v1662
    %v1664 = vrot.slane %v1663, 1
    %v1665 = vadd.f32 %v1663, %v1664
    %v1666 = vmul.f32 %v1656, 0.0625
    %v1667 = vmul.f32 %v1665, 0.0625
    %v1668 = vmul.f32 %v1666, %v1666
    %v1669 = vsub.f32 %v1667, %v1668
    %v1670 = vmax.f32 %v1669, 0.0
    %v1671 = vsub.f32 %v1648, %v1666
    %v1672 = vsub.f32 %v1649, %v1666
    %v1673 = vadd.f32 %v1670, 1e-05
    %v1674 = vrsqrt.pop %v1673
    %v1675 = vmul.f32 %v1671, %v1674
    %v1676 = vmul.f32 %v1672, %v1674
    %v1677 = vlaneseq
    %v1678 = vshrl.u32 %v1677, 7
    %v1679 = vsub.s32 5, %v1678
    %v1680 = vrot.slane %v96, %v1679
    %v1681 = vmul.f32 %v1675, %v1680
    %v1682 = vmul.f32 %v1676, %v1680
    %v1683 = vlaneseq
    %v1684 = vshrl.u32 %v1683, 7
    %v1685 = vsub.s32 6, %v1684
    %v1686 = vrot.slane %v96, %v1685
    %v1687 = vadd.f32 %v1681, %v1686
    %v1688 = vadd.f32 %v1682, %v1686
    %v1689 = vpack.c.bf16 %v1688, %v1687
    %s1690 = scalar_lea.vmem [#allocation9], 128
    %v1691 = vld [vmem:[%s1690] sm:$0xf]
    %v1692 = vld [vmem:[%s1690 + $0x4] sm:$0xf]
    %v1693 = vld [vmem:[%s1690 + $0x8] sm:$0xf]
    %v1694 = vld [vmem:[%s1690 + $0xc] sm:$0xf]
    %v1695 = vld [vmem:[%s1690 + $0x10] sm:$0xf]
    %v1696 = vld [vmem:[%s1690 + $0x14] sm:$0xf]
    %v1697 = vld [vmem:[%s1690 + $0x18] sm:$0xf]
    %v1698 = vld [vmem:[%s1690 + $0x1c] sm:$0xf]
    %v1699 = vld [vmem:[%s1690 + $0x20] sm:$0xf]
    %v1700 = vld [vmem:[%s1690 + $0x24] sm:$0xf]
    %v1701 = vld [vmem:[%s1690 + $0x28] sm:$0xf]
    %v1702 = vld [vmem:[%s1690 + $0x2c] sm:$0xf]
    %v1703 = vld [vmem:[%s1690 + $0x30] sm:$0xf]
    %v1704 = vld [vmem:[%s1690 + $0x34] sm:$0xf]
    %v1705 = vld [vmem:[%s1690 + $0x38] sm:$0xf]
    %v1706 = vld [vmem:[%s1690 + $0x3c] sm:$0xf]
    %v1723 = vunpack.c.l.b16 %v1691
    %v1724 = vunpack.c.l.b16 %v1692
    %v1725 = vunpack.c.l.b16 %v1693
    %v1726 = vunpack.c.l.b16 %v1694
    %v1727 = vunpack.c.l.b16 %v1695
    %v1728 = vunpack.c.l.b16 %v1696
    %v1729 = vunpack.c.l.b16 %v1697
    %v1730 = vunpack.c.l.b16 %v1698
    %v1731 = vunpack.c.l.b16 %v1699
    %v1732 = vunpack.c.l.b16 %v1700
    %v1733 = vunpack.c.l.b16 %v1701
    %v1734 = vunpack.c.l.b16 %v1702
    %v1735 = vunpack.c.l.b16 %v1703
    %v1736 = vunpack.c.l.b16 %v1704
    %v1737 = vunpack.c.l.b16 %v1705
    %v1738 = vunpack.c.l.b16 %v1706
    %v1739 = vpack.c.b16 %v1724, %v1723
    %v1740 = vpack.c.b16 %v1726, %v1725
    %v1741 = vpack.c.b16 %v1728, %v1727
    %v1742 = vpack.c.b16 %v1730, %v1729
    %v1743 = vpack.c.b16 %v1732, %v1731
    %v1744 = vpack.c.b16 %v1734, %v1733
    %v1745 = vpack.c.b16 %v1736, %v1735
    %v1746 = vpack.c.b16 %v1738, %v1737
    %1755 = vmatprep.subr.bf16.mxu0 0
    %1756 = vmatpush1.bf16.msra.mxu0 %v1739
    %1757 = vmatprep.subr.bf16.mxu0 0
    %1758 = vmatpush1.bf16.msra.mxu0 %v1740
    %1759 = vmatprep.subr.bf16.mxu0 0
    %1760 = vmatpush1.bf16.msra.mxu0 %v1741
    %1761 = vmatprep.subr.bf16.mxu0 0
    %1762 = vmatpush1.bf16.msra.mxu0 %v1742
    %1763 = vmatprep.subr.bf16.mxu0 0
    %1764 = vmatpush1.bf16.msra.mxu0 %v1743
    %1765 = vmatprep.subr.bf16.mxu0 0
    %1766 = vmatpush1.bf16.msra.mxu0 %v1744
    %1767 = vmatprep.subr.bf16.mxu0 0
    %1768 = vmatpush1.bf16.msra.mxu0 %v1745
    %1769 = vmatprep.subr.bf16.mxu0 0
    %1770 = vmatpush1.bf16.msra.mxu0 %v1746
    %1771 = vmatprep.subr.bf16.mxu0 0
    %1772 = vmatpush1.bf16.msra.mxu0 0
    %1773 = vmatprep.subr.bf16.mxu0 0
    %1774 = vmatpush1.bf16.msra.mxu0 0
    %1775 = vmatprep.subr.bf16.mxu0 0
    %1776 = vmatpush1.bf16.msra.mxu0 0
    %1777 = vmatprep.subr.bf16.mxu0 0
    %1778 = vmatpush1.bf16.msra.mxu0 0
    %1779 = vmatprep.subr.bf16.mxu0 0
    %1780 = vmatpush1.bf16.msra.mxu0 0
    %1781 = vmatprep.subr.bf16.mxu0 0
    %1782 = vmatpush1.bf16.msra.mxu0 0
    %1783 = vmatprep.subr.bf16.mxu0 0
    %1784 = vmatpush1.bf16.msra.mxu0 0
    %1785 = vmatprep.subr.bf16.mxu0 0
    %1786 = vmatpush1.bf16.msra.mxu0 0
    %1787 = vmatprep.mubr.bf16.mxu0 0
    %1788 = vmatmul.mubr.bf16.gmra.mrb[0].mxu0 %v1689
    %v1789 = vpop.f32.mrb[0].mxu0
    %v1790 = vadd.f32 0.0, %v1789
    %v1791 = vpop.f32.mrb[0].mxu0
    %v1792 = vpop.f32.mrb[0].mxu0
    %v1793 = vadd.f32 0.0, %v1792
    %v1794 = vpop.f32.mrb[0].mxu0
    %1795 = vdwg.mxu0
    %v1796 = vpack.c.bf16 %v1793, %v1790
    %v1797 = vlaneseq
    %v1798 = vshrl.u32 %v1797, 7
    %v1799 = vsub.s32 7, %v1798
    %v1800 = vrot.slane %v96, %v1799
    %1801 = vmatprep.subr.bf16.mxu0 0
    %1802 = vmatpush1.bf16.msra.mxu0 %v1796
    %1803 = vmatprep.subr.bf16.mxu0 0
    %1804 = vmatpush1.bf16.msra.mxu0 0
    %1805 = vmatprep.subr.bf16.mxu0 0
    %1806 = vmatpush1.bf16.msra.mxu0 0
    %1807 = vmatprep.subr.bf16.mxu0 0
    %1808 = vmatpush1.bf16.msra.mxu0 0
    %1809 = vmatprep.subr.bf16.mxu0 0
    %1810 = vmatpush1.bf16.msra.mxu0 0
    %1811 = vmatprep.subr.bf16.mxu0 0
    %1812 = vmatpush1.bf16.msra.mxu0 0
    %1813 = vmatprep.subr.bf16.mxu0 0
    %1814 = vmatpush1.bf16.msra.mxu0 0
    %1815 = vmatprep.subr.bf16.mxu0 0
    %1816 = vmatpush1.bf16.msra.mxu0 0
    %1817 = vmatprep.subr.bf16.mxu0 0
    %1818 = vmatpush1.bf16.msra.mxu0 0
    %1819 = vmatprep.subr.bf16.mxu0 0
    %1820 = vmatpush1.bf16.msra.mxu0 0
    %1821 = vmatprep.subr.bf16.mxu0 0
    %1822 = vmatpush1.bf16.msra.mxu0 0
    %1823 = vmatprep.subr.bf16.mxu0 0
    %1824 = vmatpush1.bf16.msra.mxu0 0
    %1825 = vmatprep.subr.bf16.mxu0 0
    %1826 = vmatpush1.bf16.msra.mxu0 0
    %1827 = vmatprep.subr.bf16.mxu0 0
    %1828 = vmatpush1.bf16.msra.mxu0 0
    %1829 = vmatprep.subr.bf16.mxu0 0
    %1830 = vmatpush1.bf16.msra.mxu0 0
    %1831 = vmatprep.subr.bf16.mxu0 0
    %1832 = vmatpush1.bf16.msra.mxu0 0
    %1833 = vmatprep.mubr.bf16.mxu0 0
    %1834 = vmatmul.mubr.bf16.gmra.mrb[0].mxu0 %v1605
    %v1835 = vpop.f32.mrb[0].mxu0
    %v1836 = vadd.f32 %v1800, %v1835
    %v1837 = vpop.f32.mrb[0].mxu0
    %v1838 = vpop.f32.mrb[0].mxu0
    %v1839 = vadd.f32 %v1800, %v1838
    %v1840 = vpop.f32.mrb[0].mxu0
    %1841 = vdwg.mxu0
    %v1842 = vmax.f32 %v1836, 0.0
    %v1843 = vmax.f32 %v1839, 0.0
    %v1844 = vadd.f32 %v1842, %v1843
    %v1845 = vrot.slane %v1844, 4
    %v1846 = vadd.f32 %v1844, %v1845
    %v1847 = vrot.slane %v1846, 2
    %v1848 = vadd.f32 %v1846, %v1847
    %v1849 = vrot.slane %v1848, 1
    %v1850 = vadd.f32 %v1848, %v1849
    %v1851 = vmul.f32 %v1842, %v1842
    %v1852 = vmul.f32 %v1843, %v1843
    %v1853 = vadd.f32 %v1851, %v1852
    %v1854 = vrot.slane %v1853, 4
    %v1855 = vadd.f32 %v1853, %v1854
    %v1856 = vrot.slane %v1855, 2
    %v1857 = vadd.f32 %v1855, %v1856
    %v1858 = vrot.slane %v1857, 1
    %v1859 = vadd.f32 %v1857, %v1858
    %v1860 = vmul.f32 %v1850, 0.0625
    %v1861 = vmul.f32 %v1859, 0.0625
    %v1862 = vmul.f32 %v1860, %v1860
    %v1863 = vsub.f32 %v1861, %v1862
    %v1864 = vmax.f32 %v1863, 0.0
    %v1865 = vsub.f32 %v1842, %v1860
    %v1866 = vsub.f32 %v1843, %v1860
    %v1867 = vadd.f32 %v1864, 1e-05
    %v1868 = vrsqrt.pop %v1867
    %v1869 = vmul.f32 %v1865, %v1868
    %v1870 = vmul.f32 %v1866, %v1868
    %v1871 = vlaneseq
    %v1872 = vshrl.u32 %v1871, 7
    %v1873 = vsub.s32 0, %v1872
    %v1874 = vrot.slane %v97, %v1873
    %v1875 = vmul.f32 %v1869, %v1874
    %v1876 = vmul.f32 %v1870, %v1874
    %v1877 = vlaneseq
    %v1878 = vshrl.u32 %v1877, 7
    %v1879 = vsub.s32 1, %v1878
    %v1880 = vrot.slane %v97, %v1879
    %v1881 = vadd.f32 %v1875, %v1880
    %v1882 = vadd.f32 %v1876, %v1880
    %v1883 = vpack.c.bf16 %v1882, %v1881
    %s1884 = scalar_lea.vmem [#allocation9], 192
    %v1885 = vld [vmem:[%s1884] sm:$0xf]
    %v1886 = vld [vmem:[%s1884 + $0x4] sm:$0xf]
    %v1887 = vld [vmem:[%s1884 + $0x8] sm:$0xf]
    %v1888 = vld [vmem:[%s1884 + $0xc] sm:$0xf]
    %v1889 = vld [vmem:[%s1884 + $0x10] sm:$0xf]
    %v1890 = vld [vmem:[%s1884 + $0x14] sm:$0xf]
    %v1891 = vld [vmem:[%s1884 + $0x18] sm:$0xf]
    %v1892 = vld [vmem:[%s1884 + $0x1c] sm:$0xf]
    %v1893 = vld [vmem:[%s1884 + $0x20] sm:$0xf]
    %v1894 = vld [vmem:[%s1884 + $0x24] sm:$0xf]
    %v1895 = vld [vmem:[%s1884 + $0x28] sm:$0xf]
    %v1896 = vld [vmem:[%s1884 + $0x2c] sm:$0xf]
    %v1897 = vld [vmem:[%s1884 + $0x30] sm:$0xf]
    %v1898 = vld [vmem:[%s1884 + $0x34] sm:$0xf]
    %v1899 = vld [vmem:[%s1884 + $0x38] sm:$0xf]
    %v1900 = vld [vmem:[%s1884 + $0x3c] sm:$0xf]
    %v1917 = vunpack.c.l.b16 %v1885
    %v1918 = vunpack.c.l.b16 %v1886
    %v1919 = vunpack.c.l.b16 %v1887
    %v1920 = vunpack.c.l.b16 %v1888
    %v1921 = vunpack.c.l.b16 %v1889
    %v1922 = vunpack.c.l.b16 %v1890
    %v1923 = vunpack.c.l.b16 %v1891
    %v1924 = vunpack.c.l.b16 %v1892
    %v1925 = vunpack.c.l.b16 %v1893
    %v1926 = vunpack.c.l.b16 %v1894
    %v1927 = vunpack.c.l.b16 %v1895
    %v1928 = vunpack.c.l.b16 %v1896
    %v1929 = vunpack.c.l.b16 %v1897
    %v1930 = vunpack.c.l.b16 %v1898
    %v1931 = vunpack.c.l.b16 %v1899
    %v1932 = vunpack.c.l.b16 %v1900
    %v1933 = vpack.c.b16 %v1918, %v1917
    %v1934 = vpack.c.b16 %v1920, %v1919
    %v1935 = vpack.c.b16 %v1922, %v1921
    %v1936 = vpack.c.b16 %v1924, %v1923
    %v1937 = vpack.c.b16 %v1926, %v1925
    %v1938 = vpack.c.b16 %v1928, %v1927
    %v1939 = vpack.c.b16 %v1930, %v1929
    %v1940 = vpack.c.b16 %v1932, %v1931
    %1949 = vmatprep.subr.bf16.mxu0 0
    %1950 = vmatpush1.bf16.msra.mxu0 %v1933
    %1951 = vmatprep.subr.bf16.mxu0 0
    %1952 = vmatpush1.bf16.msra.mxu0 %v1934
    %1953 = vmatprep.subr.bf16.mxu0 0
    %1954 = vmatpush1.bf16.msra.mxu0 %v1935
    %1955 = vmatprep.subr.bf16.mxu0 0
    %1956 = vmatpush1.bf16.msra.mxu0 %v1936
    %1957 = vmatprep.subr.bf16.mxu0 0
    %1958 = vmatpush1.bf16.msra.mxu0 %v1937
    %1959 = vmatprep.subr.bf16.mxu0 0
    %1960 = vmatpush1.bf16.msra.mxu0 %v1938
    %1961 = vmatprep.subr.bf16.mxu0 0
    %1962 = vmatpush1.bf16.msra.mxu0 %v1939
    %1963 = vmatprep.subr.bf16.mxu0 0
    %1964 = vmatpush1.bf16.msra.mxu0 %v1940
    %1965 = vmatprep.subr.bf16.mxu0 0
    %1966 = vmatpush1.bf16.msra.mxu0 0
    %1967 = vmatprep.subr.bf16.mxu0 0
    %1968 = vmatpush1.bf16.msra.mxu0 0
    %1969 = vmatprep.subr.bf16.mxu0 0
    %1970 = vmatpush1.bf16.msra.mxu0 0
    %1971 = vmatprep.subr.bf16.mxu0 0
    %1972 = vmatpush1.bf16.msra.mxu0 0
    %1973 = vmatprep.subr.bf16.mxu0 0
    %1974 = vmatpush1.bf16.msra.mxu0 0
    %1975 = vmatprep.subr.bf16.mxu0 0
    %1976 = vmatpush1.bf16.msra.mxu0 0
    %1977 = vmatprep.subr.bf16.mxu0 0
    %1978 = vmatpush1.bf16.msra.mxu0 0
    %1979 = vmatprep.subr.bf16.mxu0 0
    %1980 = vmatpush1.bf16.msra.mxu0 0
    %1981 = vmatprep.mubr.bf16.mxu0 0
    %1982 = vmatmul.mubr.bf16.gmra.mrb[0].mxu0 %v1883
    %v1983 = vpop.f32.mrb[0].mxu0
    %v1984 = vadd.f32 0.0, %v1983
    %v1985 = vpop.f32.mrb[0].mxu0
    %v1986 = vpop.f32.mrb[0].mxu0
    %v1987 = vadd.f32 0.0, %v1986
    %v1988 = vpop.f32.mrb[0].mxu0
    %1989 = vdwg.mxu0
    %v1990 = vpack.c.bf16 %v1987, %v1984
    %v1991 = vlaneseq
    %v1992 = vshrl.u32 %v1991, 7
    %v1993 = vsub.s32 2, %v1992
    %v1994 = vrot.slane %v97, %v1993
    %1995 = vmatprep.subr.bf16.mxu0 0
    %1996 = vmatpush1.bf16.msra.mxu0 %v1990
    %1997 = vmatprep.subr.bf16.mxu0 0
    %1998 = vmatpush1.bf16.msra.mxu0 0
    %1999 = vmatprep.subr.bf16.mxu0 0
    %2000 = vmatpush1.bf16.msra.mxu0 0
    %2001 = vmatprep.subr.bf16.mxu0 0
    %2002 = vmatpush1.bf16.msra.mxu0 0
    %2003 = vmatprep.subr.bf16.mxu0 0
    %2004 = vmatpush1.bf16.msra.mxu0 0
    %2005 = vmatprep.subr.bf16.mxu0 0
    %2006 = vmatpush1.bf16.msra.mxu0 0
    %2007 = vmatprep.subr.bf16.mxu0 0
    %2008 = vmatpush1.bf16.msra.mxu0 0
    %2009 = vmatprep.subr.bf16.mxu0 0
    %2010 = vmatpush1.bf16.msra.mxu0 0
    %2011 = vmatprep.subr.bf16.mxu0 0
    %2012 = vmatpush1.bf16.msra.mxu0 0
    %2013 = vmatprep.subr.bf16.mxu0 0
    %2014 = vmatpush1.bf16.msra.mxu0 0
    %2015 = vmatprep.subr.bf16.mxu0 0
    %2016 = vmatpush1.bf16.msra.mxu0 0
    %2017 = vmatprep.subr.bf16.mxu0 0
    %2018 = vmatpush1.bf16.msra.mxu0 0
    %2019 = vmatprep.subr.bf16.mxu0 0
    %2020 = vmatpush1.bf16.msra.mxu0 0
    %2021 = vmatprep.subr.bf16.mxu0 0
    %2022 = vmatpush1.bf16.msra.mxu0 0
    %2023 = vmatprep.subr.bf16.mxu0 0
    %2024 = vmatpush1.bf16.msra.mxu0 0
    %2025 = vmatprep.subr.bf16.mxu0 0
    %2026 = vmatpush1.bf16.msra.mxu0 0
    %2027 = vmatprep.mubr.bf16.mxu0 0
    %2028 = vmatmul.mubr.bf16.gmra.mrb[0].mxu0 %v1605
    %v2029 = vpop.f32.mrb[0].mxu0
    %v2030 = vadd.f32 %v1994, %v2029
    %v2031 = vpop.f32.mrb[0].mxu0
    %v2032 = vpop.f32.mrb[0].mxu0
    %v2033 = vadd.f32 %v1994, %v2032
    %v2034 = vpop.f32.mrb[0].mxu0
    %2035 = vdwg.mxu0
    %v2036 = vmax.f32 %v2030, 0.0
    %v2037 = vmax.f32 %v2033, 0.0
    %v2038 = vld [vmem:[%s2] sm:$0x3]
    %v2040 = vsel %vm1603, %v2038, 0
    %2042 = vmatprep.subr.mxu0 0.0
    %2043 = vmatpush1.msra.mxu0 %v2036
    %2044 = vmatprep.subr.mxu0 0.0
    %2045 = vmatpush1.msra.mxu0 %v2037
    %2046 = vmatprep.subr.mxu0 0.0
    %2047 = vmatpush1.msra.mxu0 0.0
    %2048 = vmatprep.subr.mxu0 0.0
    %2049 = vmatpush1.msra.mxu0 0.0
    %2050 = vmatprep.subr.mxu0 0.0
    %2051 = vmatpush1.msra.mxu0 0.0
    %2052 = vmatprep.subr.mxu0 0.0
    %2053 = vmatpush1.msra.mxu0 0.0
    %2054 = vmatprep.subr.mxu0 0.0
    %2055 = vmatpush1.msra.mxu0 0.0
    %2056 = vmatprep.subr.mxu0 0.0
    %2057 = vmatpush1.msra.mxu0 0.0
    %2058 = vmatprep.subr.mxu0 0.0
    %2059 = vmatpush1.msra.mxu0 0.0
    %2060 = vmatprep.subr.mxu0 0.0
    %2061 = vmatpush1.msra.mxu0 0.0
    %2062 = vmatprep.subr.mxu0 0.0
    %2063 = vmatpush1.msra.mxu0 0.0
    %2064 = vmatprep.subr.mxu0 0.0
    %2065 = vmatpush1.msra.mxu0 0.0
    %2066 = vmatprep.subr.mxu0 0.0
    %2067 = vmatpush1.msra.mxu0 0.0
    %2068 = vmatprep.subr.mxu0 0.0
    %2069 = vmatpush1.msra.mxu0 0.0
    %2070 = vmatprep.subr.mxu0 0.0
    %2071 = vmatpush1.msra.mxu0 0.0
    %2072 = vmatprep.subr.mxu0 0.0
    %2073 = vmatpush1.msra.mxu0 0.0
    %2074 = vmatprep.subr.mxu0 0.0
    %2075 = vmatpush1.msra.mxu0 0.0
    %2076 = vmatprep.subr.mxu0 0.0
    %2077 = vmatpush1.msra.mxu0 0.0
    %2078 = vmatprep.subr.mxu0 0.0
    %2079 = vmatpush1.msra.mxu0 0.0
    %2080 = vmatprep.subr.mxu0 0.0
    %2081 = vmatpush1.msra.mxu0 0.0
    %2082 = vmatprep.subr.mxu0 0.0
    %2083 = vmatpush1.msra.mxu0 0.0
    %2084 = vmatprep.subr.mxu0 0.0
    %2085 = vmatpush1.msra.mxu0 0.0
    %2086 = vmatprep.subr.mxu0 0.0
    %2087 = vmatpush1.msra.mxu0 0.0
    %2088 = vmatprep.subr.mxu0 0.0
    %2089 = vmatpush1.msra.mxu0 0.0
    %2090 = vmatprep.subr.mxu0 0.0
    %2091 = vmatpush1.msra.mxu0 0.0
    %2092 = vmatprep.subr.mxu0 0.0
    %2093 = vmatpush1.msra.mxu0 0.0
    %2094 = vmatprep.subr.mxu0 0.0
    %2095 = vmatpush1.msra.mxu0 0.0
    %2096 = vmatprep.subr.mxu0 0.0
    %2097 = vmatpush1.msra.mxu0 0.0
    %2098 = vmatprep.subr.mxu0 0.0
    %2099 = vmatpush1.msra.mxu0 0.0
    %2100 = vmatprep.subr.mxu0 0.0
    %2101 = vmatpush1.msra.mxu0 0.0
    %2102 = vmatprep.subr.mxu0 0.0
    %2103 = vmatpush1.msra.mxu0 0.0
    %2104 = vmatprep.subr.mxu0 0.0
    %2105 = vmatpush1.msra.mxu0 0.0
    %2106 = vmatprep.mubr.f32.mxu0 0.0
    %2107 = vmatmul.mubr.f32.gmra.mrb[0].mxu0 %v2040
    %v2108 = vpop.f32.mrb[0].mxu0
    %v2109 = vadd.f32 %v1295, %v2108
    %v2110 = vpop.f32.mrb[0].mxu0
    %2111 = vdwg.mxu0
    %v2112 = vsel %vm484, %v2109, 0.0
    %v2113 = vrot.slane %v2112, 4
    %v2114 = vadd.f32 %v2112, %v2113
    %v2115 = vrot.slane %v2114, 2
    %v2116 = vadd.f32 %v2114, %v2115
    %v2117 = vrot.slane %v2116, 1
    %v2118 = vadd.f32 %v2116, %v2117
    %v2119 = vmul.f32 %v2109, %v2109
    %v2120 = vsel %vm484, %v2119, 0.0
    %v2121 = vrot.slane %v2120, 4
    %v2122 = vadd.f32 %v2120, %v2121
    %v2123 = vrot.slane %v2122, 2
    %v2124 = vadd.f32 %v2122, %v2123
    %v2125 = vrot.slane %v2124, 1
    %v2126 = vadd.f32 %v2124, %v2125
    %v2127 = vmul.f32 %v2118, 0.5
    %v2128 = vmul.f32 %v2126, 0.5
    %v2129 = vmul.f32 %v2127, %v2127
    %v2130 = vsub.f32 %v2128, %v2129
    %v2131 = vmax.f32 %v2130, 0.0
    %v2132 = vsub.f32 %v2109, %v2127
    %v2133 = vadd.f32 %v2131, 1e-05
    %v2134 = vrsqrt.pop %v2133
    %v2135 = vmul.f32 %v2132, %v2134
    %v2136 = vlaneseq
    %v2137 = vshrl.u32 %v2136, 7
    %v2138 = vsub.s32 3, %v2137
    %v2139 = vrot.slane %v97, %v2138
    %v2140 = vmul.f32 %v2135, %v2139
    %v2141 = vlaneseq
    %v2142 = vshrl.u32 %v2141, 7
    %v2143 = vsub.s32 4, %v2142
    %v2144 = vrot.slane %v97, %v2143
    %v2145 = vadd.f32 %v2140, %v2144
    %v2146 = vpack.c.bf16 %v2145, %v2145
    %s2147 = scalar_lea.vmem [#allocation9], 640
    %v2148 = vld [vmem:[%s2147] sm:$0xf]
    %v2149 = vld [vmem:[%s2147 + $0x4] sm:$0xf]
    %v2150 = vld [vmem:[%s2147 + $0x8] sm:$0xf]
    %v2151 = vld [vmem:[%s2147 + $0xc] sm:$0xf]
    %v2152 = vld [vmem:[%s2147 + $0x10] sm:$0xf]
    %v2153 = vld [vmem:[%s2147 + $0x14] sm:$0xf]
    %v2154 = vld [vmem:[%s2147 + $0x18] sm:$0xf]
    %v2155 = vld [vmem:[%s2147 + $0x1c] sm:$0xf]
    %v2156 = vld [vmem:[%s2147 + $0x20] sm:$0xf]
    %v2157 = vld [vmem:[%s2147 + $0x24] sm:$0xf]
    %v2158 = vld [vmem:[%s2147 + $0x28] sm:$0xf]
    %v2159 = vld [vmem:[%s2147 + $0x2c] sm:$0xf]
    %v2160 = vld [vmem:[%s2147 + $0x30] sm:$0xf]
    %v2161 = vld [vmem:[%s2147 + $0x34] sm:$0xf]
    %v2162 = vld [vmem:[%s2147 + $0x38] sm:$0xf]
    %v2163 = vld [vmem:[%s2147 + $0x3c] sm:$0xf]
    %v2164 = vlaneseq
    %v2165 = vshrl.u32 %v2164, 7
    %v2166 = vsub.s32 5, %v2165
    %v2167 = vrot.slane %v97, %v2166
    %v2184 = vunpack.c.l.b16 %v2148
    %v2185 = vunpack.c.l.b16 %v2149
    %v2186 = vunpack.c.l.b16 %v2150
    %v2187 = vunpack.c.l.b16 %v2151
    %v2188 = vunpack.c.l.b16 %v2152
    %v2189 = vunpack.c.l.b16 %v2153
    %v2190 = vunpack.c.l.b16 %v2154
    %v2191 = vunpack.c.l.b16 %v2155
    %v2192 = vunpack.c.l.b16 %v2156
    %v2193 = vunpack.c.l.b16 %v2157
    %v2194 = vunpack.c.l.b16 %v2158
    %v2195 = vunpack.c.l.b16 %v2159
    %v2196 = vunpack.c.l.b16 %v2160
    %v2197 = vunpack.c.l.b16 %v2161
    %v2198 = vunpack.c.l.b16 %v2162
    %v2199 = vunpack.c.l.b16 %v2163
    %v2200 = vpack.c.b16 %v2185, %v2184
    %v2201 = vpack.c.b16 %v2187, %v2186
    %v2202 = vpack.c.b16 %v2189, %v2188
    %v2203 = vpack.c.b16 %v2191, %v2190
    %v2204 = vpack.c.b16 %v2193, %v2192
    %v2205 = vpack.c.b16 %v2195, %v2194
    %v2206 = vpack.c.b16 %v2197, %v2196
    %v2207 = vpack.c.b16 %v2199, %v2198
    %2216 = vmatprep.subr.bf16.mxu0 0
    %2217 = vmatpush1.bf16.msra.mxu0 %v2200
    %2218 = vmatprep.subr.bf16.mxu0 0
    %2219 = vmatpush1.bf16.msra.mxu0 %v2201
    %2220 = vmatprep.subr.bf16.mxu0 0
    %2221 = vmatpush1.bf16.msra.mxu0 %v2202
    %2222 = vmatprep.subr.bf16.mxu0 0
    %2223 = vmatpush1.bf16.msra.mxu0 %v2203
    %2224 = vmatprep.subr.bf16.mxu0 0
    %2225 = vmatpush1.bf16.msra.mxu0 %v2204
    %2226 = vmatprep.subr.bf16.mxu0 0
    %2227 = vmatpush1.bf16.msra.mxu0 %v2205
    %2228 = vmatprep.subr.bf16.mxu0 0
    %2229 = vmatpush1.bf16.msra.mxu0 %v2206
    %2230 = vmatprep.subr.bf16.mxu0 0
    %2231 = vmatpush1.bf16.msra.mxu0 %v2207
    %2232 = vmatprep.subr.bf16.mxu0 0
    %2233 = vmatpush1.bf16.msra.mxu0 0
    %2234 = vmatprep.subr.bf16.mxu0 0
    %2235 = vmatpush1.bf16.msra.mxu0 0
    %2236 = vmatprep.subr.bf16.mxu0 0
    %2237 = vmatpush1.bf16.msra.mxu0 0
    %2238 = vmatprep.subr.bf16.mxu0 0
    %2239 = vmatpush1.bf16.msra.mxu0 0
    %2240 = vmatprep.subr.bf16.mxu0 0
    %2241 = vmatpush1.bf16.msra.mxu0 0
    %2242 = vmatprep.subr.bf16.mxu0 0
    %2243 = vmatpush1.bf16.msra.mxu0 0
    %2244 = vmatprep.subr.bf16.mxu0 0
    %2245 = vmatpush1.bf16.msra.mxu0 0
    %2246 = vmatprep.subr.bf16.mxu0 0
    %2247 = vmatpush1.bf16.msra.mxu0 0
    %2248 = vmatprep.mubr.bf16.mxu0 0
    %2249 = vmatmul.mubr.bf16.gmra.mrb[0].mxu0 %v2146
    %v2250 = vpop.f32.mrb[0].mxu0
    %v2251 = vadd.f32 %v2167, %v2250
    %v2252 = vpop.f32.mrb[0].mxu0
    %v2253 = vpop.f32.mrb[0].mxu0
    %v2254 = vpop.f32.mrb[0].mxu0
    %2255 = vdwg.mxu0
    %v2256 = vmax.f32 %v2251, 0.0
    %v2257 = vsel %vm484, %v2256, 0.0
    %v2258 = vrot.slane %v2257, 4
    %v2259 = vadd.f32 %v2257, %v2258
    %v2260 = vrot.slane %v2259, 2
    %v2261 = vadd.f32 %v2259, %v2260
    %v2262 = vrot.slane %v2261, 1
    %v2263 = vadd.f32 %v2261, %v2262
    %v2264 = vmul.f32 %v2256, %v2256
    %v2265 = vsel %vm484, %v2264, 0.0
    %v2266 = vrot.slane %v2265, 4
    %v2267 = vadd.f32 %v2265, %v2266
    %v2268 = vrot.slane %v2267, 2
    %v2269 = vadd.f32 %v2267, %v2268
    %v2270 = vrot.slane %v2269, 1
    %v2271 = vadd.f32 %v2269, %v2270
    %v2272 = vmul.f32 %v2263, 0.5
    %v2273 = vmul.f32 %v2271, 0.5
    %v2274 = vmul.f32 %v2272, %v2272
    %v2275 = vsub.f32 %v2273, %v2274
    %v2276 = vmax.f32 %v2275, 0.0
    %v2277 = vsub.f32 %v2256, %v2272
    %v2278 = vadd.f32 %v2276, 1e-05
    %v2279 = vrsqrt.pop %v2278
    %v2280 = vmul.f32 %v2277, %v2279
    %v2281 = vlaneseq
    %v2282 = vshrl.u32 %v2281, 7
    %v2283 = vsub.s32 6, %v2282
    %v2284 = vrot.slane %v97, %v2283
    %v2285 = vmul.f32 %v2280, %v2284
    %v2286 = vlaneseq
    %v2287 = vshrl.u32 %v2286, 7
    %v2288 = vsub.s32 7, %v2287
    %v2289 = vrot.slane %v97, %v2288
    %v2290 = vadd.f32 %v2285, %v2289
    %v2291 = vpack.c.bf16 %v2290, %v2290
    %s2292 = scalar_lea.vmem [#allocation9], 704
    %v2293 = vld [vmem:[%s2292] sm:$0xf]
    %v2294 = vld [vmem:[%s2292 + $0x4] sm:$0xf]
    %v2295 = vld [vmem:[%s2292 + $0x8] sm:$0xf]
    %v2296 = vld [vmem:[%s2292 + $0xc] sm:$0xf]
    %v2297 = vld [vmem:[%s2292 + $0x10] sm:$0xf]
    %v2298 = vld [vmem:[%s2292 + $0x14] sm:$0xf]
    %v2299 = vld [vmem:[%s2292 + $0x18] sm:$0xf]
    %v2300 = vld [vmem:[%s2292 + $0x1c] sm:$0xf]
    %v2301 = vld [vmem:[%s2292 + $0x20] sm:$0xf]
    %v2302 = vld [vmem:[%s2292 + $0x24] sm:$0xf]
    %v2303 = vld [vmem:[%s2292 + $0x28] sm:$0xf]
    %v2304 = vld [vmem:[%s2292 + $0x2c] sm:$0xf]
    %v2305 = vld [vmem:[%s2292 + $0x30] sm:$0xf]
    %v2306 = vld [vmem:[%s2292 + $0x34] sm:$0xf]
    %v2307 = vld [vmem:[%s2292 + $0x38] sm:$0xf]
    %v2308 = vld [vmem:[%s2292 + $0x3c] sm:$0xf]
    %v2309 = vlaneseq
    %v2310 = vshrl.u32 %v2309, 7
    %v2311 = vsub.s32 0, %v2310
    %v2312 = vrot.slane %v98, %v2311
    %v2329 = vunpack.c.l.b16 %v2293
    %v2330 = vunpack.c.l.b16 %v2294
    %v2331 = vunpack.c.l.b16 %v2295
    %v2332 = vunpack.c.l.b16 %v2296
    %v2333 = vunpack.c.l.b16 %v2297
    %v2334 = vunpack.c.l.b16 %v2298
    %v2335 = vunpack.c.l.b16 %v2299
    %v2336 = vunpack.c.l.b16 %v2300
    %v2337 = vunpack.c.l.b16 %v2301
    %v2338 = vunpack.c.l.b16 %v2302
    %v2339 = vunpack.c.l.b16 %v2303
    %v2340 = vunpack.c.l.b16 %v2304
    %v2341 = vunpack.c.l.b16 %v2305
    %v2342 = vunpack.c.l.b16 %v2306
    %v2343 = vunpack.c.l.b16 %v2307
    %v2344 = vunpack.c.l.b16 %v2308
    %v2345 = vpack.c.b16 %v2330, %v2329
    %v2346 = vpack.c.b16 %v2332, %v2331
    %v2347 = vpack.c.b16 %v2334, %v2333
    %v2348 = vpack.c.b16 %v2336, %v2335
    %v2349 = vpack.c.b16 %v2338, %v2337
    %v2350 = vpack.c.b16 %v2340, %v2339
    %v2351 = vpack.c.b16 %v2342, %v2341
    %v2352 = vpack.c.b16 %v2344, %v2343
    %2361 = vmatprep.subr.bf16.mxu0 0
    %2362 = vmatpush1.bf16.msra.mxu0 %v2345
    %2363 = vmatprep.subr.bf16.mxu0 0
    %2364 = vmatpush1.bf16.msra.mxu0 %v2346
    %2365 = vmatprep.subr.bf16.mxu0 0
    %2366 = vmatpush1.bf16.msra.mxu0 %v2347
    %2367 = vmatprep.subr.bf16.mxu0 0
    %2368 = vmatpush1.bf16.msra.mxu0 %v2348
    %2369 = vmatprep.subr.bf16.mxu0 0
    %2370 = vmatpush1.bf16.msra.mxu0 %v2349
    %2371 = vmatprep.subr.bf16.mxu0 0
    %2372 = vmatpush1.bf16.msra.mxu0 %v2350
    %2373 = vmatprep.subr.bf16.mxu0 0
    %2374 = vmatpush1.bf16.msra.mxu0 %v2351
    %2375 = vmatprep.subr.bf16.mxu0 0
    %2376 = vmatpush1.bf16.msra.mxu0 %v2352
    %2377 = vmatprep.subr.bf16.mxu0 0
    %2378 = vmatpush1.bf16.msra.mxu0 0
    %2379 = vmatprep.subr.bf16.mxu0 0
    %2380 = vmatpush1.bf16.msra.mxu0 0
    %2381 = vmatprep.subr.bf16.mxu0 0
    %2382 = vmatpush1.bf16.msra.mxu0 0
    %2383 = vmatprep.subr.bf16.mxu0 0
    %2384 = vmatpush1.bf16.msra.mxu0 0
    %2385 = vmatprep.subr.bf16.mxu0 0
    %2386 = vmatpush1.bf16.msra.mxu0 0
    %2387 = vmatprep.subr.bf16.mxu0 0
    %2388 = vmatpush1.bf16.msra.mxu0 0
    %2389 = vmatprep.subr.bf16.mxu0 0
    %2390 = vmatpush1.bf16.msra.mxu0 0
    %2391 = vmatprep.subr.bf16.mxu0 0
    %2392 = vmatpush1.bf16.msra.mxu0 0
    %2393 = vmatprep.mubr.bf16.mxu0 0
    %2394 = vmatmul.mubr.bf16.gmra.mrb[0].mxu0 %v2291
    %v2395 = vpop.f32.mrb[0].mxu0
    %v2396 = vadd.f32 %v2312, %v2395
    %v2397 = vpop.f32.mrb[0].mxu0
    %v2398 = vpop.f32.mrb[0].mxu0
    %v2399 = vpop.f32.mrb[0].mxu0
    %2400 = vdwg.mxu0
    %v2401 = vlaneseq
    %v2402 = vand.u32 %v2401, 127
    %vm2403 = vcmp.lt.s32.totalorder %v2402, 2
    %v2404 = vsel %vm2403, %v2396, -1e+30
    %v2405 = vsel %vm484, %v2404, -inf
    %2406 = vmax.xlane.f32.xlu0 %v2405
    %v2407 = vpop.xlane.xlu0 %2406
    %v2408 = vsub.f32 %v2404, %v2407
    %v2409 = vmul.f32 %v2408, 1.442695
    %v2410 = vpow.pop %v2409
    %v2411 = vsel %vm484, %v2410, 0.0
    %2412 = vadd.xlane.f32.xlu0 %v2411
    %v2413 = vpop.xlane.xlu0 %2412
    %v2414 = vlog2.pop %v2413
    %v2415 = vmul.f32 %v2414, 0.6931472
    %v2416 = vadd.f32 %v2407, %v2415
    %v2417 = vsub.f32 %v2396, %v2416
    %vm2418 = vcmask 7168
    %v2419 = vsel %vm2418, %v489, %v653
    %vm2420 = vcmask 15360
    %v2421 = vsel %vm2420, %v2419, %v807
    %vm2422 = vcmask 23552
    %v2423 = vsel %vm2422, %v2421, %v961
    %v2424 = vsel %vm2418, %v499, %v658
    %v2425 = vsel %vm2420, %v2424, %v812
    %v2426 = vsel %vm2422, %v2425, %v966
    %v2427 = vsel %vm2418, %v509, %v663
    %v2428 = vsel %vm2420, %v2427, %v817
    %v2429 = vsel %vm2422, %v2428, %v971
    %2431 = vrot.lane.b32.xlu0 %v2423, 2
    %v2432 = vpop.permute.xlu0 %2431
    %2435 = vrot.lane.b32.xlu0 %v2426, 6
    %v2436 = vpop.permute.xlu0 %2435
    %2439 = vrot.lane.b32.xlu0 %v2429, 10
    %v2440 = vpop.permute.xlu0 %2439
    %v2442 = vsel %vm2420, %v2417, %v2432
    %vm2443 = vcmask 48128
    %v2444 = vsel %vm2443, %v2442, %v2436
    %vm2445 = vcmask 80896
    %v2446 = vsel %vm2445, %v2444, %v2440
    %vm2447 = vcmask 113664
    %v2448 = vsel %vm2447, %v2446, 0.0
    %2449 = vst [vmem:[#allocation12] sm:$0x3] %v2448
    // Predicated region
    $region50: #{tpu_custom_call.1} parent=1 // pred_check
      _
    $region51: #{tpu_custom_call.1} parent=1 // pred_check_branch
      %2451 = sbr.rel (0) target = $region53
    $region52: #{tpu_custom_call.1} parent=1 // pred_region
      %s2453 = ssub.s32 32, 32
      %2454 = vsyncadd [#allocation4], %s2453
      %s2456 = sshll.u32 [#allocation12], 4
      %s2457 = int_to_ptr.vmem [resolvable:$true] %s2456
      %2459 = dma.vmem_to_hbm [thread:$0]  %s2457, 32, %s7, [#allocation4]
    $region53: #{tpu_custom_call.1} parent=1 // pred_fallthru
      _
    // Predicated region
    $region54: #{tpu_custom_call.1} parent=1 // pred_check
      _
    $region55: #{tpu_custom_call.1} parent=1 // pred_check_branch
      %2461 = sbr.rel (0) target = $region57
    $region56: #{tpu_custom_call.1} parent=1 // pred_region
      %2462 = dma.done [#allocation4], 32
    $region57: #{tpu_custom_call.1} parent=1 // pred_fallthru
      _
    %2463 = vsyncpa [#allocation3], 1
    %2464 = vsyncpa [#allocation7], 1
    %2465 = vsyncpa [#allocation10], 1
    %2466 = vsyncpa [#allocation4], 1
    %2467 = vsyncpa [#allocation5], 1

</llo_original>
